<compile_context>
chip_gen: v7x
topology: tpu7x:2x2x1
jax: 0.10.0
libtpu: 0.0.40
codegen_flags: <defaults>
</compile_context>

<pallas_src>
import functools
import math

import jax
import jax.numpy as jnp
from jax.experimental import pallas as pl
from jax.experimental.pallas import tpu as pltpu

_VMEM_LIMIT = 32 * 1024 * 1024   # explicit scoped-VMEM budget, safe on v5e/v6e/v7x


def _round_up(x, m):
    return ((x + m - 1) // m) * m


# ---------------------------------------------------------------------------
# Fused matmul (+ bias + activation) kernel — the compute hot path.
# bf16 operands feed the MXU; accumulate / bias / activation stay in f32.
# ---------------------------------------------------------------------------
def _matmul_bias_act_kernel(a_ref, b_ref, bias_ref, o_ref, *, act):
    acc = jnp.dot(a_ref[...], b_ref[...], preferred_element_type=jnp.float32)
    acc = acc + bias_ref[...]
    if act == "relu":
        acc = jnp.maximum(acc, 0.0)
    elif act == "sigmoid":
        acc = jax.nn.sigmoid(acc)
    o_ref[...] = acc.astype(o_ref.dtype)


def _matmul_bias_dual_kernel(a_ref, b_ref, bias_ref, o_ref, osig_ref):
    # Raw logits + fused sigmoid epilogue (EUP slot is ~free next to the MXU work);
    # avoids a separate sigmoid pallas_call and an HBM round-trip of ct_hm.
    acc = jnp.dot(a_ref[...], b_ref[...], preferred_element_type=jnp.float32)
    acc = acc + bias_ref[...]
    o_ref[...] = acc
    osig_ref[...] = jax.nn.sigmoid(acc)


def pallas_matmul_bias_act(a, b, bias, act=None, dual_sigmoid=False):
    """(M,K) @ (K,N) + bias [+ act], tiled over (M, N); bf16 in, f32 out."""
    M, K = a.shape
    K2, N = b.shape
    assert K == K2
    TM = min(256, _round_up(M, 8))          # M tile (<=256 keeps v7x VMEM happy)
    TN = min(256, _round_up(N, 128))        # N tile, 128-lane multiple
    Kp = _round_up(K, 128)                  # K kept whole per tile (K <= ~640 here)
    Mp = _round_up(M, TM)
    Np = _round_up(N, TN)

    a_p = jnp.pad(a.astype(jnp.bfloat16), ((0, Mp - M), (0, Kp - K)))
    b_p = jnp.pad(b.astype(jnp.bfloat16), ((0, Kp - K), (0, Np - N)))
    bias_p = jnp.pad(bias.astype(jnp.float32), ((0, Np - N),)).reshape(1, Np)

    grid = (Mp // TM, Np // TN)
    n_out = 2 if dual_sigmoid else 1
    cost = pl.CostEstimate(
        flops=2 * Mp * Kp * Np,
        transcendentals=Mp * Np if (dual_sigmoid or act == "sigmoid") else 0,
        bytes_accessed=2 * (Mp * Kp + Kp * Np) + 4 * Mp * Np * n_out,
    )
    cparams = pltpu.CompilerParams(
        dimension_semantics=("parallel", "parallel"),  # 2 TCs on v7x; no-op on v5e/v6e
        vmem_limit_bytes=_VMEM_LIMIT,
    )
    in_specs = [
        pl.BlockSpec((TM, Kp), lambda i, j: (i, 0)),
        pl.BlockSpec((Kp, TN), lambda i, j: (0, j)),
        pl.BlockSpec((1, TN), lambda i, j: (0, j)),
    ]
    if dual_sigmoid:
        raw, sig = pl.pallas_call(
            _matmul_bias_dual_kernel,
            out_shape=(jax.ShapeDtypeStruct((Mp, Np), jnp.float32),
                       jax.ShapeDtypeStruct((Mp, Np), jnp.float32)),
            grid=grid,
            in_specs=in_specs,
            out_specs=(pl.BlockSpec((TM, TN), lambda i, j: (i, j)),
                       pl.BlockSpec((TM, TN), lambda i, j: (i, j))),
            compiler_params=cparams,
            cost_estimate=cost,
        )(a_p, b_p, bias_p)
        return raw[:M, :N], sig[:M, :N]

    out = pl.pallas_call(
        functools.partial(_matmul_bias_act_kernel, act=act),
        out_shape=jax.ShapeDtypeStruct((Mp, Np), jnp.float32),
        grid=grid,
        in_specs=in_specs,
        out_specs=pl.BlockSpec((TM, TN), lambda i, j: (i, j)),
        compiler_params=cparams,
        cost_estimate=cost,
    )(a_p, b_p, bias_p)
    return out[:M, :N]


# ---------------------------------------------------------------------------
# Conv glue: im2col patch extraction (bf16) + fused Pallas matmul kernel (MXU)
# ---------------------------------------------------------------------------
def conv2d(x, p, stride, pad, act=None, dual_sigmoid=False):
    """x: (N,H,W,C) NHWC. p['w']: (kh,kw,Cin,Cout), p['b']: (Cout,)."""
    w, b = p["w"], p["b"]
    kh, kw, cin, cout = w.shape
    # TODO(synk): im2col patch extraction stays in XLA glue (a halo-BlockSpec in-kernel
    # formulation would remove the kh*kw HBM blow-up); casting to bf16 first halves it.
    xp = jnp.pad(x.astype(jnp.bfloat16), ((0, 0), (pad, pad), (pad, pad), (0, 0)))
    N, H, W, C = xp.shape
    Ho = (H - kh) // stride + 1
    Wo = (W - kw) // stride + 1
    cols = []
    for i in range(kh):
        for j in range(kw):
            cols.append(xp[:, i:i + (Ho - 1) * stride + 1:stride,
                           j:j + (Wo - 1) * stride + 1:stride, :])
    patches = jnp.concatenate(cols, axis=-1).reshape(N * Ho * Wo, kh * kw * C)
    wmat = w.reshape(kh * kw * cin, cout)
    if dual_sigmoid:
        raw, sig = pallas_matmul_bias_act(patches, wmat, b, dual_sigmoid=True)
        return raw.reshape(N, Ho, Wo, cout), sig.reshape(N, Ho, Wo, cout)
    out = pallas_matmul_bias_act(patches, wmat, b, act=act)
    return out.reshape(N, Ho, Wo, cout)


# ---------------------------------------------------------------------------
# Snake circular-conv kernels: neighbour gather done in-kernel (pltpu.roll on the
# XLU slot), so x is read from HBM once instead of a 3x-wide rolled concat.
# ---------------------------------------------------------------------------
def _circ_conv_body(x, w3_ref, b_ref, act):
    """Circular 1D conv (kernel 3) on a single contour tile x: (P, Fp)."""
    P = x.shape[0]
    x_prev = pltpu.roll(x, shift=1, axis=0)        # row i <- point i-1 (circular)
    x_next = pltpu.roll(x, shift=P - 1, axis=0)    # row i <- point i+1 (circular)
    acc = jnp.dot(x_prev, w3_ref[0], preferred_element_type=jnp.float32)
    acc = acc + jnp.dot(x, w3_ref[1], preferred_element_type=jnp.float32)
    acc = acc + jnp.dot(x_next, w3_ref[2], preferred_element_type=jnp.float32)
    acc = acc + b_ref[...]
    if act == "relu":
        acc = jnp.maximum(acc, 0.0)
    return acc


def _circular_conv_kernel(x_ref, w3_ref, b_ref, o_ref, *, act):
    o_ref[...] = _circ_conv_body(x_ref[...], w3_ref, b_ref, act)


def _circular_conv_res_pred_kernel(x_ref, w3_ref, b_ref, wp_ref, bp_ref, o_ref):
    # Fused: h = x + relu(circ_conv(x)); offsets = h @ Wp + bp  (no HBM round-trip of h)
    x = x_ref[...]
    h = x + _circ_conv_body(x, w3_ref, b_ref, "relu")
    o_ref[...] = jnp.dot(h, wp_ref[...], preferred_element_type=jnp.float32) + bp_ref[...]


def circular_conv(x, p, act):
    """x: (B,P,F) -> (B,P,H). p['w']: (3,F,H) taps [prev,cur,next], p['b']: (H,)."""
    B, P, F = x.shape
    w3, b = p["w"], p["b"]
    H = w3.shape[-1]
    Fp, Hp = _round_up(F, 128), _round_up(H, 128)
    x_p = jnp.pad(x.astype(jnp.float32), ((0, 0), (0, 0), (0, Fp - F)))
    w_p = jnp.pad(w3.astype(jnp.float32), ((0, 0), (0, Fp - F), (0, Hp - H)))
    b_p = jnp.pad(b.astype(jnp.float32), ((0, Hp - H),)).reshape(1, Hp)
    out = pl.pallas_call(
        functools.partial(_circular_conv_kernel, act=act),
        out_shape=jax.ShapeDtypeStruct((B, P, Hp), jnp.float32),
        grid=(B,),
        in_specs=[
            pl.BlockSpec((None, P, Fp), lambda i: (i, 0, 0)),
            pl.BlockSpec((3, Fp, Hp), lambda i: (0, 0, 0)),
            pl.BlockSpec((1, Hp), lambda i: (0, 0)),
        ],
        out_specs=pl.BlockSpec((None, P, Hp), lambda i: (i, 0, 0)),
        compiler_params=pltpu.CompilerParams(
            dimension_semantics=("parallel",), vmem_limit_bytes=_VMEM_LIMIT),
    )(x_p, w_p, b_p)
    return out[..., :H]


def snake_res_pred(x, p_res, p_pred):
    """Fused residual circular conv + per-point prediction: (B,P,H) -> (B,P,2)."""
    B, P, H = x.shape
    w3, b = p_res["w"], p_res["b"]
    wp, bp = p_pred["w"], p_pred["b"]
    n_out = wp.shape[-1]
    Hp = _round_up(H, 128)
    Op = _round_up(n_out, 128)
    x_p = jnp.pad(x.astype(jnp.float32), ((0, 0), (0, 0), (0, Hp - H)))
    w_p = jnp.pad(w3.astype(jnp.float32), ((0, 0), (0, Hp - H), (0, Hp - H)))
    b_p = jnp.pad(b.astype(jnp.float32), ((0, Hp - H),)).reshape(1, Hp)
    wp_p = jnp.pad(wp.astype(jnp.float32), ((0, Hp - H), (0, Op - n_out)))
    bp_p = jnp.pad(bp.astype(jnp.float32), ((0, Op - n_out),)).reshape(1, Op)
    out = pl.pallas_call(
        _circular_conv_res_pred_kernel,
        out_shape=jax.ShapeDtypeStruct((B, P, Op), jnp.float32),
        grid=(B,),
        in_specs=[
            pl.BlockSpec((None, P, Hp), lambda i: (i, 0, 0)),
            pl.BlockSpec((3, Hp, Hp), lambda i: (0, 0, 0)),
            pl.BlockSpec((1, Hp), lambda i: (0, 0)),
            pl.BlockSpec((Hp, Op), lambda i: (0, 0)),
            pl.BlockSpec((1, Op), lambda i: (0, 0)),
        ],
        out_specs=pl.BlockSpec((None, P, Op), lambda i: (i, 0, 0)),
        compiler_params=pltpu.CompilerParams(
            dimension_semantics=("parallel",), vmem_limit_bytes=_VMEM_LIMIT),
    )(x_p, w_p, b_p, wp_p, bp_p)
    return out[..., :n_out]


# ---------------------------------------------------------------------------
# decode_detection (kept as JAX glue: runs under torch.no_grad in the original)
# ---------------------------------------------------------------------------
def decode_ct_hm(hm_sig, wh, topk):
    """hm_sig, wh are NHWC; matches snake_decode.decode_ct_hm semantics."""
    N, H, W, C = hm_sig.shape
    # TODO(synk): 3x3 NMS max-pool + top-k have no clean Pallas TPU equivalent; kept in JAX glue.
    hmax = jax.lax.reduce_window(hm_sig, -jnp.inf, jax.lax.max,
                                 (1, 3, 3, 1), (1, 1, 1, 1), "SAME")
    keep = jnp.where(hmax == hm_sig, hm_sig, 0.0)
    flat = jnp.transpose(keep, (0, 3, 1, 2)).reshape(N, C * H * W)  # torch NCHW flatten
    scores, inds = jax.lax.top_k(flat, topk)
    clses = (inds // (H * W)).astype(jnp.float32)
    inds_hw = inds % (H * W)
    ys = (inds_hw // W).astype(jnp.float32)
    xs = (inds_hw % W).astype(jnp.float32)
    wh_flat = wh.reshape(N, H * W, 2)
    wh_g = jnp.take_along_axis(wh_flat, inds_hw[..., None], axis=1)  # (N,K,2)
    ct = jnp.stack([xs, ys], axis=-1)
    bboxes = jnp.stack([xs - wh_g[..., 0] / 2.0, ys - wh_g[..., 1] / 2.0,
                        xs + wh_g[..., 0] / 2.0, ys + wh_g[..., 1] / 2.0], axis=-1)
    detection = jnp.concatenate([bboxes, scores[..., None], clses[..., None]], axis=-1)
    return ct, detection


def clip_to_image(boxes, h, w):
    x1 = jnp.maximum(boxes[..., 0], 0.0)
    y1 = jnp.maximum(boxes[..., 1], 0.0)
    x2 = jnp.minimum(boxes[..., 2], float(w) - 1.0)
    y2 = jnp.minimum(boxes[..., 3], float(h) - 1.0)
    return jnp.stack([x1, y1, x2, y2], axis=-1)


# ---------------------------------------------------------------------------
# Evolution (snake GCN), simplified but with all matmul compute in Pallas
# ---------------------------------------------------------------------------
def bilinear_sample(feat, xy):
    """feat: (H,W,C); xy: (M,2) in feature-pixel coords -> (M,C)."""
    H, W, _ = feat.shape
    x, y = xy[:, 0], xy[:, 1]
    x0f, y0f = jnp.floor(x), jnp.floor(y)
    wx, wy = (x - x0f)[:, None], (y - y0f)[:, None]
    x0 = jnp.clip(x0f, 0, W - 1).astype(jnp.int32)
    x1 = jnp.clip(x0f + 1, 0, W - 1).astype(jnp.int32)
    y0 = jnp.clip(y0f, 0, H - 1).astype(jnp.int32)
    y1 = jnp.clip(y0f + 1, 0, H - 1).astype(jnp.int32)
    f00, f01 = feat[y0, x0], feat[y0, x1]
    f10, f11 = feat[y1, x0], feat[y1, x1]
    return (f00 * (1 - wx) * (1 - wy) + f01 * wx * (1 - wy)
            + f10 * (1 - wx) * wy + f11 * wx * wy)


def evolution_gcn(params, detection, ct, feat_nhwc, num_points):
    N, K, _ = detection.shape
    x1, y1 = detection[..., 0], detection[..., 1]
    x2, y2 = detection[..., 2], detection[..., 3]
    cx, cy = (x1 + x2) / 2.0, (y1 + y2) / 2.0
    rx, ry = (x2 - x1) / 2.0, (y2 - y1) / 2.0
    t = jnp.arange(num_points, dtype=jnp.float32) * (2.0 * jnp.pi / num_points)
    px = cx[..., None] + rx[..., None] * jnp.cos(t)
    py_ = cy[..., None] + ry[..., None] * jnp.sin(t)
    init_poly = jnp.stack([px, py_], axis=-1)                      # (N,K,P,2)

    # TODO(synk): grid_sample-style bilinear feature gather stays in JAX glue (no Pallas gather).
    xy = init_poly.reshape(N, K * num_points, 2)
    samples = jax.vmap(bilinear_sample)(feat_nhwc, xy)             # (N, K*P, Cf)
    cf = samples.shape[-1]
    samples = samples.reshape(N, K, num_points, cf)

    center = jnp.stack([cx, cy], axis=-1)                          # (N,K,2)
    off = init_poly - center[:, :, None, :]
    snake_in = jnp.concatenate([samples, off], axis=-1)            # (N,K,P,Cf+2)
    x = snake_in.reshape(N * K, num_points, cf + 2)

    x = circular_conv(x, params["snake_in"], act="relu")
    offs = snake_res_pred(x, params["snake_res"], params["snake_pred"])
    offs = offs.reshape(N, K, num_points, 2)
    return init_poly, init_poly + offs


# ---------------------------------------------------------------------------
# Parameter init (deterministic, synthetic — no checkpoint load)
# ---------------------------------------------------------------------------
def _conv_init(key, kh, kw, cin, cout):
    fan_in = kh * kw * cin
    w = jax.random.normal(key, (kh, kw, cin, cout), jnp.float32) / math.sqrt(fan_in)
    return {"w": w, "b": jnp.zeros((cout,), jnp.float32)}


def _dense_init(key, fin, fout):
    w = jax.random.normal(key, (fin, fout), jnp.float32) / math.sqrt(fin)
    return {"w": w, "b": jnp.zeros((fout,), jnp.float32)}


def _circ_init(key, fin, fout):
    w = jax.random.normal(key, (3, fin, fout), jnp.float32) / math.sqrt(3 * fin)
    return {"w": w, "b": jnp.zeros((fout,), jnp.float32)}


def init_params(key, in_ch=3, num_classes=4, feat_ch=64, head_conv=64, snake_hidden=64):
    ks = jax.random.split(key, 10)
    p = {}
    # simplified DLA backbone (down_ratio = 4)
    # TODO(synk): full DLA-34 hierarchical tree + IDA/DLA-Up upsampling is collapsed
    # into a 3-stage strided conv stack with the same down_ratio (4) and feature width.
    p["conv1"] = _conv_init(ks[0], 3, 3, in_ch, 16)
    p["conv2"] = _conv_init(ks[1], 3, 3, 16, 32)
    p["conv3"] = _conv_init(ks[2], 3, 3, 32, feat_ch)
    # Fused detection heads: the hm branch uses channels [:head_conv] / outputs [:num_classes],
    # the wh branch channels [head_conv:] / outputs [num_classes:]; the 1x1 head is
    # block-diagonal, so the two branches stay mathematically independent (same as separate heads).
    p["head1"] = _conv_init(ks[3], 3, 3, feat_ch, 2 * head_conv)
    hm2 = _conv_init(ks[4], 1, 1, head_conv, num_classes)
    wh2 = _conv_init(ks[5], 1, 1, head_conv, 2)
    w2 = jnp.zeros((1, 1, 2 * head_conv, num_classes + 2), jnp.float32)
    w2 = w2.at[:, :, :head_conv, :num_classes].set(hm2["w"])
    w2 = w2.at[:, :, head_conv:, num_classes:].set(wh2["w"])
    b2 = jnp.concatenate([jnp.full((num_classes,), -2.19, jnp.float32),  # CenterNet hm bias
                          jnp.zeros((2,), jnp.float32)])
    p["head2"] = {"w": w2, "b": b2}
    # Evolution / snake (circular conv kernel size 3: [prev, cur, next] taps)
    p["snake_in"] = _circ_init(ks[6], feat_ch + 2, snake_hidden)
    p["snake_res"] = _circ_init(ks[7], snake_hidden, snake_hidden)
    p["snake_pred"] = _dense_init(ks[8], snake_hidden, 2)
    return p


# ---------------------------------------------------------------------------
# Full forward (mirrors Network.forward with cfg.use_gt_det == False)
# ---------------------------------------------------------------------------
def network_forward(params, x_nchw, num_points=16, topk=8):
    x = jnp.transpose(x_nchw, (0, 2, 3, 1)).astype(jnp.float32)    # NCHW -> NHWC

    # --- DLASeg backbone (simplified, down_ratio 4) ---
    h = conv2d(x, params["conv1"], stride=1, pad=1, act="relu")
    h = conv2d(h, params["conv2"], stride=2, pad=1, act="relu")
    cnn_feature = conv2d(h, params["conv3"], stride=2, pad=1, act="relu")

    # --- heads (hm & wh branches fused; decode sigmoid fused into the 1x1 epilogue) ---
    h1 = conv2d(cnn_feature, params["head1"], stride=1, pad=1, act="relu")
    head_raw, head_sig = conv2d(h1, params["head2"], stride=1, pad=0, dual_sigmoid=True)
    num_classes = params["head2"]["w"].shape[-1] - 2
    ct_hm = head_raw[..., :num_classes]          # raw logits (matches PyTorch output dict)
    wh = head_raw[..., num_classes:]
    hm_sig = head_sig[..., :num_classes]         # sigmoid(ct_hm), only real lanes kept

    # --- decode_detection (torch.no_grad in the original) ---
    Hf, Wf = cnn_feature.shape[1], cnn_feature.shape[2]
    ct, detection = decode_ct_hm(hm_sig, wh, topk)
    boxes = clip_to_image(detection[..., :4], Hf, Wf)
    detection = jnp.concatenate([boxes, detection[..., 4:]], axis=-1)

    # --- Evolution (snake GCN) ---
    # TODO(synk): score-threshold filtering of detections is dynamic-shape; all top-K are evolved.
    it_py, py = evolution_gcn(params, detection, ct, cnn_feature, num_points)

    return {
        "ct_hm": jnp.transpose(ct_hm, (0, 3, 1, 2)),   # back to NCHW, as PyTorch
        "wh": jnp.transpose(wh, (0, 3, 1, 2)),
        "ct": ct,
        "detection": detection,
        "it_py": it_py,
        "py": py,
    }


if __name__ == "__main__":
    key = jax.random.PRNGKey(0)
    pkey, xkey = jax.random.split(key)
    params = init_params(pkey, in_ch=3, num_classes=4)
    x = jax.random.normal(xkey, (2, 3, 16, 16), jnp.float32)

    fwd = jax.jit(network_forward)
    out = fwd(params, x)
    jax.block_until_ready(out)

    assert out["ct_hm"].shape == (2, 4, 4, 4)
    assert out["wh"].shape == (2, 2, 4, 4)
    assert out["ct"].shape == (2, 8, 2)
    assert out["detection"].shape == (2, 8, 6)
    assert out["it_py"].shape == (2, 8, 16, 2)
    assert out["py"].shape == (2, 8, 16, 2)
    print("KERNEL_OK")
</pallas_src>

<mosaic_0001>
module attributes {stable_mosaic.version = 11 : i64} {
  func.func @_matmul_bias_act_kernel(%arg0: i32, %arg1: i32, %arg2: memref<256x128xbf16, #tpu.memory_space<vmem>>, %arg3: memref<128x128xbf16, #tpu.memory_space<vmem>>, %arg4: memref<1x128xf32, #tpu.memory_space<vmem>>, %arg5: memref<256x128xf32, #tpu.memory_space<vmem>>) attributes {dimension_semantics = [#tpu.dimension_semantics<parallel>, #tpu.dimension_semantics<parallel>], iteration_bounds = array<i64: 2, 1>, scalar_prefetch = 0 : i64, scratch_operands = 0 : i64, tpu.core_type = #tpu.core_type<tc>, window_params = [{transform_indices = @transform_0, window_bounds = array<i64: 256, 128>}, {transform_indices = @transform_1, window_bounds = array<i64: 128, 128>}, {transform_indices = @transform_2, window_bounds = array<i64: 1, 128>}, {transform_indices = @transform_3, window_bounds = array<i64: 256, 128>}]} {
    %c0 = arith.constant 0 : index
    %c0_0 = arith.constant 0 : index
    %0 = vector.load %arg2[%c0, %c0_0] : memref<256x128xbf16, #tpu.memory_space<vmem>>, vector<256x128xbf16>
    %c0_1 = arith.constant 0 : index
    %c0_2 = arith.constant 0 : index
    %1 = vector.load %arg3[%c0_1, %c0_2] : memref<128x128xbf16, #tpu.memory_space<vmem>>, vector<128x128xbf16>
    %cst = arith.constant dense<0.000000e+00> : vector<256x128xf32>
    %2 = tpu.matmul %0, %1, %cst {dimension_numbers = #tpu.dot_dimension_numbers<[1], [0], [0], [1], [0, 0, 1, 1], [], []>} : vector<256x128xbf16>, vector<128x128xbf16>, vector<256x128xf32> -> vector<256x128xf32>
    %c0_3 = arith.constant 0 : index
    %c0_4 = arith.constant 0 : index
    %3 = vector.load %arg4[%c0_3, %c0_4] : memref<1x128xf32, #tpu.memory_space<vmem>>, vector<1x128xf32>
    %4 = vector.broadcast %3 : vector<1x128xf32> to vector<256x128xf32>
    %5 = arith.addf %2, %4 : vector<256x128xf32>
    %cst_5 = arith.constant 0.000000e+00 : f32
    %6 = vector.broadcast %cst_5 : f32 to vector<256x128xf32>
    %7 = arith.maximumf %5, %6 : vector<256x128xf32>
    %c0_6 = arith.constant 0 : index
    %c0_7 = arith.constant 0 : index
    %8 = vector.load %arg5[%c0_6, %c0_7] : memref<256x128xf32, #tpu.memory_space<vmem>>, vector<256x128xf32>
    tpu.vector_store %arg5[%c0_6, %c0_7], %7 {strides = array<i32>} : memref<256x128xf32, #tpu.memory_space<vmem>>, vector<256x128xf32>,
    return
  }
  func.func @transform_0(%arg0: i32, %arg1: i32) -> (i32, i32) {
    %c0_i32 = arith.constant 0 : i32
    %c0_i32_0 = arith.constant 0 : i32
    return %arg0, %c0_i32 : i32, i32
  }
  func.func @transform_1(%arg0: i32, %arg1: i32) -> (i32, i32) {
    %c0_i32 = arith.constant 0 : i32
    %c0_i32_0 = arith.constant 0 : i32
    return %c0_i32, %arg1 : i32, i32
  }
  func.func @transform_2(%arg0: i32, %arg1: i32) -> (i32, i32) {
    %c0_i32 = arith.constant 0 : i32
    %c0_i32_0 = arith.constant 0 : i32
    return %c0_i32, %arg1 : i32, i32
  }
  func.func @transform_3(%arg0: i32, %arg1: i32) -> (i32, i32) {
    %c0_i32 = arith.constant 0 : i32
    return %arg0, %arg1 : i32, i32
  }
}

module attributes {stable_mosaic.version = 11 : i64} {
  func.func @_matmul_bias_act_kernel(%arg0: i32, %arg1: i32, %arg2: memref<128x256xbf16, #tpu.memory_space<vmem>>, %arg3: memref<256x128xbf16, #tpu.memory_space<vmem>>, %arg4: memref<1x128xf32, #tpu.memory_space<vmem>>, %arg5: memref<128x128xf32, #tpu.memory_space<vmem>>) attributes {dimension_semantics = [#tpu.dimension_semantics<parallel>, #tpu.dimension_semantics<parallel>], iteration_bounds = array<i64: 1, 1>, scalar_prefetch = 0 : i64, scratch_operands = 0 : i64, tpu.core_type = #tpu.core_type<tc>, window_params = [{transform_indices = @transform_0, window_bounds = array<i64: 128, 256>}, {transform_indices = @transform_1, window_bounds = array<i64: 256, 128>}, {transform_indices = @transform_2, window_bounds = array<i64: 1, 128>}, {transform_indices = @transform_3, window_bounds = array<i64: 128, 128>}]} {
    %c0 = arith.constant 0 : index
    %c0_0 = arith.constant 0 : index
    %0 = vector.load %arg2[%c0, %c0_0] : memref<128x256xbf16, #tpu.memory_space<vmem>>, vector<128x256xbf16>
    %c0_1 = arith.constant 0 : index
    %c0_2 = arith.constant 0 : index
    %1 = vector.load %arg3[%c0_1, %c0_2] : memref<256x128xbf16, #tpu.memory_space<vmem>>, vector<256x128xbf16>
    %cst = arith.constant dense<0.000000e+00> : vector<128x128xf32>
    %2 = tpu.matmul %0, %1, %cst {dimension_numbers = #tpu.dot_dimension_numbers<[1], [0], [0], [1], [0, 0, 1, 1], [], []>} : vector<128x256xbf16>, vector<256x128xbf16>, vector<128x128xf32> -> vector<128x128xf32>
    %c0_3 = arith.constant 0 : index
    %c0_4 = arith.constant 0 : index
    %3 = vector.load %arg4[%c0_3, %c0_4] : memref<1x128xf32, #tpu.memory_space<vmem>>, vector<1x128xf32>
    %4 = vector.broadcast %3 : vector<1x128xf32> to vector<128x128xf32>
    %5 = arith.addf %2, %4 : vector<128x128xf32>
    %cst_5 = arith.constant 0.000000e+00 : f32
    %6 = vector.broadcast %cst_5 : f32 to vector<128x128xf32>
    %7 = arith.maximumf %5, %6 : vector<128x128xf32>
    %c0_6 = arith.constant 0 : index
    %c0_7 = arith.constant 0 : index
    %8 = vector.load %arg5[%c0_6, %c0_7] : memref<128x128xf32, #tpu.memory_space<vmem>>, vector<128x128xf32>
    tpu.vector_store %arg5[%c0_6, %c0_7], %7 {strides = array<i32>} : memref<128x128xf32, #tpu.memory_space<vmem>>, vector<128x128xf32>,
    return
  }
  func.func @transform_0(%arg0: i32, %arg1: i32) -> (i32, i32) {
    %c0_i32 = arith.constant 0 : i32
    %c0_i32_0 = arith.constant 0 : i32
    return %arg0, %c0_i32 : i32, i32
  }
  func.func @transform_1(%arg0: i32, %arg1: i32) -> (i32, i32) {
    %c0_i32 = arith.constant 0 : i32
    %c0_i32_0 = arith.constant 0 : i32
    return %c0_i32, %arg1 : i32, i32
  }
  func.func @transform_2(%arg0: i32, %arg1: i32) -> (i32, i32) {
    %c0_i32 = arith.constant 0 : i32
    %c0_i32_0 = arith.constant 0 : i32
    return %c0_i32, %arg1 : i32, i32
  }
  func.func @transform_3(%arg0: i32, %arg1: i32) -> (i32, i32) {
    %c0_i32 = arith.constant 0 : i32
    return %arg0, %arg1 : i32, i32
  }
}

module attributes {stable_mosaic.version = 11 : i64} {
  func.func @_matmul_bias_act_kernel(%arg0: i32, %arg1: i32, %arg2: memref<32x384xbf16, #tpu.memory_space<vmem>>, %arg3: memref<384x128xbf16, #tpu.memory_space<vmem>>, %arg4: memref<1x128xf32, #tpu.memory_space<vmem>>, %arg5: memref<32x128xf32, #tpu.memory_space<vmem>>) attributes {dimension_semantics = [#tpu.dimension_semantics<parallel>, #tpu.dimension_semantics<parallel>], iteration_bounds = array<i64: 1, 1>, scalar_prefetch = 0 : i64, scratch_operands = 0 : i64, tpu.core_type = #tpu.core_type<tc>, window_params = [{transform_indices = @transform_0, window_bounds = array<i64: 32, 384>}, {transform_indices = @transform_1, window_bounds = array<i64: 384, 128>}, {transform_indices = @transform_2, window_bounds = array<i64: 1, 128>}, {transform_indices = @transform_3, window_bounds = array<i64: 32, 128>}]} {
    %c0 = arith.constant 0 : index
    %c0_0 = arith.constant 0 : index
    %0 = vector.load %arg2[%c0, %c0_0] : memref<32x384xbf16, #tpu.memory_space<vmem>>, vector<32x384xbf16>
    %c0_1 = arith.constant 0 : index
    %c0_2 = arith.constant 0 : index
    %1 = vector.load %arg3[%c0_1, %c0_2] : memref<384x128xbf16, #tpu.memory_space<vmem>>, vector<384x128xbf16>
    %cst = arith.constant dense<0.000000e+00> : vector<32x128xf32>
    %2 = tpu.matmul %0, %1, %cst {dimension_numbers = #tpu.dot_dimension_numbers<[1], [0], [0], [1], [0, 0, 1, 1], [], []>} : vector<32x384xbf16>, vector<384x128xbf16>, vector<32x128xf32> -> vector<32x128xf32>
    %c0_3 = arith.constant 0 : index
    %c0_4 = arith.constant 0 : index
    %3 = vector.load %arg4[%c0_3, %c0_4] : memref<1x128xf32, #tpu.memory_space<vmem>>, vector<1x128xf32>
    %4 = vector.broadcast %3 : vector<1x128xf32> to vector<32x128xf32>
    %5 = arith.addf %2, %4 : vector<32x128xf32>
    %cst_5 = arith.constant 0.000000e+00 : f32
    %6 = vector.broadcast %cst_5 : f32 to vector<32x128xf32>
    %7 = arith.maximumf %5, %6 : vector<32x128xf32>
    %c0_6 = arith.constant 0 : index
    %c0_7 = arith.constant 0 : index
    %8 = vector.load %arg5[%c0_6, %c0_7] : memref<32x128xf32, #tpu.memory_space<vmem>>, vector<32x128xf32>
    tpu.vector_store %arg5[%c0_6, %c0_7], %7 {strides = array<i32>} : memref<32x128xf32, #tpu.memory_space<vmem>>, vector<32x128xf32>,
    return
  }
  func.func @transform_0(%arg0: i32, %arg1: i32) -> (i32, i32) {
    %c0_i32 = arith.constant 0 : i32
    %c0_i32_0 = arith.constant 0 : i32
    return %arg0, %c0_i32 : i32, i32
  }
  func.func @transform_1(%arg0: i32, %arg1: i32) -> (i32, i32) {
    %c0_i32 = arith.constant 0 : i32
    %c0_i32_0 = arith.constant 0 : i32
    return %c0_i32, %arg1 : i32, i32
  }
  func.func @transform_2(%arg0: i32, %arg1: i32) -> (i32, i32) {
    %c0_i32 = arith.constant 0 : i32
    %c0_i32_0 = arith.constant 0 : i32
    return %c0_i32, %arg1 : i32, i32
  }
  func.func @transform_3(%arg0: i32, %arg1: i32) -> (i32, i32) {
    %c0_i32 = arith.constant 0 : i32
    return %arg0, %arg1 : i32, i32
  }
}

module attributes {stable_mosaic.version = 11 : i64} {
  func.func @_matmul_bias_act_kernel(%arg0: i32, %arg1: i32, %arg2: memref<32x640xbf16, #tpu.memory_space<vmem>>, %arg3: memref<640x128xbf16, #tpu.memory_space<vmem>>, %arg4: memref<1x128xf32, #tpu.memory_space<vmem>>, %arg5: memref<32x128xf32, #tpu.memory_space<vmem>>) attributes {dimension_semantics = [#tpu.dimension_semantics<parallel>, #tpu.dimension_semantics<parallel>], iteration_bounds = array<i64: 1, 1>, scalar_prefetch = 0 : i64, scratch_operands = 0 : i64, tpu.core_type = #tpu.core_type<tc>, window_params = [{transform_indices = @transform_0, window_bounds = array<i64: 32, 640>}, {transform_indices = @transform_1, window_bounds = array<i64: 640, 128>}, {transform_indices = @transform_2, window_bounds = array<i64: 1, 128>}, {transform_indices = @transform_3, window_bounds = array<i64: 32, 128>}]} {
    %c0 = arith.constant 0 : index
    %c0_0 = arith.constant 0 : index
    %0 = vector.load %arg2[%c0, %c0_0] : memref<32x640xbf16, #tpu.memory_space<vmem>>, vector<32x640xbf16>
    %c0_1 = arith.constant 0 : index
    %c0_2 = arith.constant 0 : index
    %1 = vector.load %arg3[%c0_1, %c0_2] : memref<640x128xbf16, #tpu.memory_space<vmem>>, vector<640x128xbf16>
    %cst = arith.constant dense<0.000000e+00> : vector<32x128xf32>
    %2 = tpu.matmul %0, %1, %cst {dimension_numbers = #tpu.dot_dimension_numbers<[1], [0], [0], [1], [0, 0, 1, 1], [], []>} : vector<32x640xbf16>, vector<640x128xbf16>, vector<32x128xf32> -> vector<32x128xf32>
    %c0_3 = arith.constant 0 : index
    %c0_4 = arith.constant 0 : index
    %3 = vector.load %arg4[%c0_3, %c0_4] : memref<1x128xf32, #tpu.memory_space<vmem>>, vector<1x128xf32>
    %4 = vector.broadcast %3 : vector<1x128xf32> to vector<32x128xf32>
    %5 = arith.addf %2, %4 : vector<32x128xf32>
    %cst_5 = arith.constant 0.000000e+00 : f32
    %6 = vector.broadcast %cst_5 : f32 to vector<32x128xf32>
    %7 = arith.maximumf %5, %6 : vector<32x128xf32>
    %c0_6 = arith.constant 0 : index
    %c0_7 = arith.constant 0 : index
    %8 = vector.load %arg5[%c0_6, %c0_7] : memref<32x128xf32, #tpu.memory_space<vmem>>, vector<32x128xf32>
    tpu.vector_store %arg5[%c0_6, %c0_7], %7 {strides = array<i32>} : memref<32x128xf32, #tpu.memory_space<vmem>>, vector<32x128xf32>,
    return
  }
  func.func @transform_0(%arg0: i32, %arg1: i32) -> (i32, i32) {
    %c0_i32 = arith.constant 0 : i32
    %c0_i32_0 = arith.constant 0 : i32
    return %arg0, %c0_i32 : i32, i32
  }
  func.func @transform_1(%arg0: i32, %arg1: i32) -> (i32, i32) {
    %c0_i32 = arith.constant 0 : i32
    %c0_i32_0 = arith.constant 0 : i32
    return %c0_i32, %arg1 : i32, i32
  }
  func.func @transform_2(%arg0: i32, %arg1: i32) -> (i32, i32) {
    %c0_i32 = arith.constant 0 : i32
    %c0_i32_0 = arith.constant 0 : i32
    return %c0_i32, %arg1 : i32, i32
  }
  func.func @transform_3(%arg0: i32, %arg1: i32) -> (i32, i32) {
    %c0_i32 = arith.constant 0 : i32
    return %arg0, %arg1 : i32, i32
  }
}

module attributes {stable_mosaic.version = 11 : i64} {
  func.func @_matmul_bias_dual_kernel(%arg0: i32, %arg1: i32, %arg2: memref<32x128xbf16, #tpu.memory_space<vmem>>, %arg3: memref<128x128xbf16, #tpu.memory_space<vmem>>, %arg4: memref<1x128xf32, #tpu.memory_space<vmem>>, %arg5: memref<32x128xf32, #tpu.memory_space<vmem>>, %arg6: memref<32x128xf32, #tpu.memory_space<vmem>>) attributes {dimension_semantics = [#tpu.dimension_semantics<parallel>, #tpu.dimension_semantics<parallel>], iteration_bounds = array<i64: 1, 1>, scalar_prefetch = 0 : i64, scratch_operands = 0 : i64, tpu.core_type = #tpu.core_type<tc>, window_params = [{transform_indices = @transform_0, window_bounds = array<i64: 32, 128>}, {transform_indices = @transform_1, window_bounds = array<i64: 128, 128>}, {transform_indices = @transform_2, window_bounds = array<i64: 1, 128>}, {transform_indices = @transform_3, window_bounds = array<i64: 32, 128>}, {transform_indices = @transform_4, window_bounds = array<i64: 32, 128>}]} {
    %c0 = arith.constant 0 : index
    %c0_0 = arith.constant 0 : index
    %0 = vector.load %arg2[%c0, %c0_0] : memref<32x128xbf16, #tpu.memory_space<vmem>>, vector<32x128xbf16>
    %c0_1 = arith.constant 0 : index
    %c0_2 = arith.constant 0 : index
    %1 = vector.load %arg3[%c0_1, %c0_2] : memref<128x128xbf16, #tpu.memory_space<vmem>>, vector<128x128xbf16>
    %cst = arith.constant dense<0.000000e+00> : vector<32x128xf32>
    %2 = tpu.matmul %0, %1, %cst {dimension_numbers = #tpu.dot_dimension_numbers<[1], [0], [0], [1], [0, 0, 1, 1], [], []>} : vector<32x128xbf16>, vector<128x128xbf16>, vector<32x128xf32> -> vector<32x128xf32>
    %c0_3 = arith.constant 0 : index
    %c0_4 = arith.constant 0 : index
    %3 = vector.load %arg4[%c0_3, %c0_4] : memref<1x128xf32, #tpu.memory_space<vmem>>, vector<1x128xf32>
    %4 = vector.broadcast %3 : vector<1x128xf32> to vector<32x128xf32>
    %5 = arith.addf %2, %4 : vector<32x128xf32>
    %c0_5 = arith.constant 0 : index
    %c0_6 = arith.constant 0 : index
    %6 = vector.load %arg5[%c0_5, %c0_6] : memref<32x128xf32, #tpu.memory_space<vmem>>, vector<32x128xf32>
    tpu.vector_store %arg5[%c0_5, %c0_6], %5 {strides = array<i32>} : memref<32x128xf32, #tpu.memory_space<vmem>>, vector<32x128xf32>,
    %7 = arith.negf %5 : vector<32x128xf32>
    %8 = math.exp %7 : vector<32x128xf32>
    %cst_7 = arith.constant 1.000000e+00 : f32
    %9 = vector.broadcast %cst_7 : f32 to vector<32x128xf32>
    %10 = arith.addf %9, %8 : vector<32x128xf32>
    %11 = arith.divf %9, %10 : vector<32x128xf32>
    %c0_8 = arith.constant 0 : index
    %c0_9 = arith.constant 0 : index
    %12 = vector.load %arg6[%c0_8, %c0_9] : memref<32x128xf32, #tpu.memory_space<vmem>>, vector<32x128xf32>
    tpu.vector_store %arg6[%c0_8, %c0_9], %11 {strides = array<i32>} : memref<32x128xf32, #tpu.memory_space<vmem>>, vector<32x128xf32>,
    return
  }
  func.func @transform_0(%arg0: i32, %arg1: i32) -> (i32, i32) {
    %c0_i32 = arith.constant 0 : i32
    %c0_i32_0 = arith.constant 0 : i32
    return %arg0, %c0_i32 : i32, i32
  }
  func.func @transform_1(%arg0: i32, %arg1: i32) -> (i32, i32) {
    %c0_i32 = arith.constant 0 : i32
    %c0_i32_0 = arith.constant 0 : i32
    return %c0_i32, %arg1 : i32, i32
  }
  func.func @transform_2(%arg0: i32, %arg1: i32) -> (i32, i32) {
    %c0_i32 = arith.constant 0 : i32
    %c0_i32_0 = arith.constant 0 : i32
    return %c0_i32, %arg1 : i32, i32
  }
  func.func @transform_3(%arg0: i32, %arg1: i32) -> (i32, i32) {
    %c0_i32 = arith.constant 0 : i32
    return %arg0, %arg1 : i32, i32
  }
  func.func @transform_4(%arg0: i32, %arg1: i32) -> (i32, i32) {
    %c0_i32 = arith.constant 0 : i32
    return %arg0, %arg1 : i32, i32
  }
}

module attributes {stable_mosaic.version = 11 : i64} {
  func.func @_circular_conv_kernel(%arg0: i32, %arg1: memref<1x16x128xf32, #tpu.memory_space<vmem>>, %arg2: memref<3x128x128xf32, #tpu.memory_space<vmem>>, %arg3: memref<1x128xf32, #tpu.memory_space<vmem>>, %arg4: memref<1x16x128xf32, #tpu.memory_space<vmem>>) attributes {dimension_semantics = [#tpu.dimension_semantics<parallel>], iteration_bounds = array<i64: 16>, scalar_prefetch = 0 : i64, scratch_operands = 0 : i64, tpu.core_type = #tpu.core_type<tc>, window_params = [{transform_indices = @transform_0, window_bounds = array<i64: 1, 16, 128>}, {pipeline_mode = #tpu.pipeline_mode<synchronous>, transform_indices = @transform_1, window_bounds = array<i64: 3, 128, 128>}, {pipeline_mode = #tpu.pipeline_mode<synchronous>, transform_indices = @transform_2, window_bounds = array<i64: 1, 128>}, {transform_indices = @transform_3, window_bounds = array<i64: 1, 16, 128>}]} {
    %c0 = arith.constant 0 : index
    %c0_0 = arith.constant 0 : index
    %c0_1 = arith.constant 0 : index
    %0 = vector.load %arg1[%c0, %c0_0, %c0_1] : memref<1x16x128xf32, #tpu.memory_space<vmem>>, vector<1x16x128xf32>
    %1 = vector.shape_cast %0 : vector<1x16x128xf32> to vector<16x128xf32>
    %c1_i32 = arith.constant 1 : i32
    %2 = tpu.dynamic_rotate %1 by %c1_i32 dim 0 : vector<16x128xf32>, i32 -> vector<16x128xf32>
    %c15_i32 = arith.constant 15 : i32
    %3 = tpu.dynamic_rotate %1 by %c15_i32 dim 0 : vector<16x128xf32>, i32 -> vector<16x128xf32>
    %c0_2 = arith.constant 0 : index
    %c0_3 = arith.constant 0 : index
    %c0_4 = arith.constant 0 : index
    %4 = vector.load %arg2[%c0_2, %c0_3, %c0_4] : memref<3x128x128xf32, #tpu.memory_space<vmem>>, vector<1x128x128xf32>
    %5 = vector.shape_cast %4 : vector<1x128x128xf32> to vector<128x128xf32>
    %cst = arith.constant dense<0.000000e+00> : vector<16x128xf32>
    %6 = tpu.matmul %2, %5, %cst {dimension_numbers = #tpu.dot_dimension_numbers<[1], [0], [0], [1], [0, 0, 1, 1], [], []>} : vector<16x128xf32>, vector<128x128xf32>, vector<16x128xf32> -> vector<16x128xf32>
    %c1 = arith.constant 1 : index
    %c0_5 = arith.constant 0 : index
    %c0_6 = arith.constant 0 : index
    %7 = vector.load %arg2[%c1, %c0_5, %c0_6] : memref<3x128x128xf32, #tpu.memory_space<vmem>>, vector<1x128x128xf32>
    %8 = vector.shape_cast %7 : vector<1x128x128xf32> to vector<128x128xf32>
    %cst_7 = arith.constant dense<0.000000e+00> : vector<16x128xf32>
    %9 = tpu.matmul %1, %8, %cst_7 {dimension_numbers = #tpu.dot_dimension_numbers<[1], [0], [0], [1], [0, 0, 1, 1], [], []>} : vector<16x128xf32>, vector<128x128xf32>, vector<16x128xf32> -> vector<16x128xf32>
    %10 = arith.addf %6, %9 : vector<16x128xf32>
    %c2 = arith.constant 2 : index
    %c0_8 = arith.constant 0 : index
    %c0_9 = arith.constant 0 : index
    %11 = vector.load %arg2[%c2, %c0_8, %c0_9] : memref<3x128x128xf32, #tpu.memory_space<vmem>>, vector<1x128x128xf32>
    %12 = vector.shape_cast %11 : vector<1x128x128xf32> to vector<128x128xf32>
    %cst_10 = arith.constant dense<0.000000e+00> : vector<16x128xf32>
    %13 = tpu.matmul %3, %12, %cst_10 {dimension_numbers = #tpu.dot_dimension_numbers<[1], [0], [0], [1], [0, 0, 1, 1], [], []>} : vector<16x128xf32>, vector<128x128xf32>, vector<16x128xf32> -> vector<16x128xf32>
    %14 = arith.addf %10, %13 : vector<16x128xf32>
    %c0_11 = arith.constant 0 : index
    %c0_12 = arith.constant 0 : index
    %15 = vector.load %arg3[%c0_11, %c0_12] : memref<1x128xf32, #tpu.memory_space<vmem>>, vector<1x128xf32>
    %16 = vector.broadcast %15 : vector<1x128xf32> to vector<16x128xf32>
    %17 = arith.addf %14, %16 : vector<16x128xf32>
    %cst_13 = arith.constant 0.000000e+00 : f32
    %18 = vector.broadcast %cst_13 : f32 to vector<16x128xf32>
    %19 = arith.maximumf %17, %18 : vector<16x128xf32>
    %c0_14 = arith.constant 0 : index
    %c0_15 = arith.constant 0 : index
    %c0_16 = arith.constant 0 : index
    %20 = vector.load %arg4[%c0_14, %c0_15, %c0_16] : memref<1x16x128xf32, #tpu.memory_space<vmem>>, vector<1x16x128xf32>
    %21 = vector.shape_cast %20 : vector<1x16x128xf32> to vector<16x128xf32>
    %22 = vector.shape_cast %19 : vector<16x128xf32> to vector<1x16x128xf32>
    tpu.vector_store %arg4[%c0_14, %c0_15, %c0_16], %22 {strides = array<i32>} : memref<1x16x128xf32, #tpu.memory_space<vmem>>, vector<1x16x128xf32>,
    return
  }
  func.func @transform_0(%arg0: i32) -> (i32, i32, i32) {
    %c0_i32 = arith.constant 0 : i32
    %c0_i32_0 = arith.constant 0 : i32
    %c0_i32_1 = arith.constant 0 : i32
    return %arg0, %c0_i32, %c0_i32_0 : i32, i32, i32
  }
  func.func @transform_1(%arg0: i32) -> (i32, i32, i32) {
    %c0_i32 = arith.constant 0 : i32
    %c0_i32_0 = arith.constant 0 : i32
    %c0_i32_1 = arith.constant 0 : i32
    %c0_i32_2 = arith.constant 0 : i32
    return %c0_i32, %c0_i32_0, %c0_i32_1 : i32, i32, i32
  }
  func.func @transform_2(%arg0: i32) -> (i32, i32) {
    %c0_i32 = arith.constant 0 : i32
    %c0_i32_0 = arith.constant 0 : i32
    %c0_i32_1 = arith.constant 0 : i32
    return %c0_i32, %c0_i32_0 : i32, i32
  }
  func.func @transform_3(%arg0: i32) -> (i32, i32, i32) {
    %c0_i32 = arith.constant 0 : i32
    %c0_i32_0 = arith.constant 0 : i32
    %c0_i32_1 = arith.constant 0 : i32
    return %arg0, %c0_i32, %c0_i32_0 : i32, i32, i32
  }
}

module attributes {stable_mosaic.version = 11 : i64} {
  func.func @_circular_conv_res_pred_kernel(%arg0: i32, %arg1: memref<1x16x128xf32, #tpu.memory_space<vmem>>, %arg2: memref<3x128x128xf32, #tpu.memory_space<vmem>>, %arg3: memref<1x128xf32, #tpu.memory_space<vmem>>, %arg4: memref<128x128xf32, #tpu.memory_space<vmem>>, %arg5: memref<1x128xf32, #tpu.memory_space<vmem>>, %arg6: memref<1x16x128xf32, #tpu.memory_space<vmem>>) attributes {dimension_semantics = [#tpu.dimension_semantics<parallel>], iteration_bounds = array<i64: 16>, scalar_prefetch = 0 : i64, scratch_operands = 0 : i64, tpu.core_type = #tpu.core_type<tc>, window_params = [{transform_indices = @transform_0, window_bounds = array<i64: 1, 16, 128>}, {pipeline_mode = #tpu.pipeline_mode<synchronous>, transform_indices = @transform_1, window_bounds = array<i64: 3, 128, 128>}, {pipeline_mode = #tpu.pipeline_mode<synchronous>, transform_indices = @transform_2, window_bounds = array<i64: 1, 128>}, {pipeline_mode = #tpu.pipeline_mode<synchronous>, transform_indices = @transform_3, window_bounds = array<i64: 128, 128>}, {pipeline_mode = #tpu.pipeline_mode<synchronous>, transform_indices = @transform_4, window_bounds = array<i64: 1, 128>}, {transform_indices = @transform_5, window_bounds = array<i64: 1, 16, 128>}]} {
    %c0 = arith.constant 0 : index
    %c0_0 = arith.constant 0 : index
    %c0_1 = arith.constant 0 : index
    %0 = vector.load %arg1[%c0, %c0_0, %c0_1] : memref<1x16x128xf32, #tpu.memory_space<vmem>>, vector<1x16x128xf32>
    %1 = vector.shape_cast %0 : vector<1x16x128xf32> to vector<16x128xf32>
    %c1_i32 = arith.constant 1 : i32
    %2 = tpu.dynamic_rotate %1 by %c1_i32 dim 0 : vector<16x128xf32>, i32 -> vector<16x128xf32>
    %c15_i32 = arith.constant 15 : i32
    %3 = tpu.dynamic_rotate %1 by %c15_i32 dim 0 : vector<16x128xf32>, i32 -> vector<16x128xf32>
    %c0_2 = arith.constant 0 : index
    %c0_3 = arith.constant 0 : index
    %c0_4 = arith.constant 0 : index
    %4 = vector.load %arg2[%c0_2, %c0_3, %c0_4] : memref<3x128x128xf32, #tpu.memory_space<vmem>>, vector<1x128x128xf32>
    %5 = vector.shape_cast %4 : vector<1x128x128xf32> to vector<128x128xf32>
    %cst = arith.constant dense<0.000000e+00> : vector<16x128xf32>
    %6 = tpu.matmul %2, %5, %cst {dimension_numbers = #tpu.dot_dimension_numbers<[1], [0], [0], [1], [0, 0, 1, 1], [], []>} : vector<16x128xf32>, vector<128x128xf32>, vector<16x128xf32> -> vector<16x128xf32>
    %c1 = arith.constant 1 : index
    %c0_5 = arith.constant 0 : index
    %c0_6 = arith.constant 0 : index
    %7 = vector.load %arg2[%c1, %c0_5, %c0_6] : memref<3x128x128xf32, #tpu.memory_space<vmem>>, vector<1x128x128xf32>
    %8 = vector.shape_cast %7 : vector<1x128x128xf32> to vector<128x128xf32>
    %cst_7 = arith.constant dense<0.000000e+00> : vector<16x128xf32>
    %9 = tpu.matmul %1, %8, %cst_7 {dimension_numbers = #tpu.dot_dimension_numbers<[1], [0], [0], [1], [0, 0, 1, 1], [], []>} : vector<16x128xf32>, vector<128x128xf32>, vector<16x128xf32> -> vector<16x128xf32>
    %10 = arith.addf %6, %9 : vector<16x128xf32>
    %c2 = arith.constant 2 : index
    %c0_8 = arith.constant 0 : index
    %c0_9 = arith.constant 0 : index
    %11 = vector.load %arg2[%c2, %c0_8, %c0_9] : memref<3x128x128xf32, #tpu.memory_space<vmem>>, vector<1x128x128xf32>
    %12 = vector.shape_cast %11 : vector<1x128x128xf32> to vector<128x128xf32>
    %cst_10 = arith.constant dense<0.000000e+00> : vector<16x128xf32>
    %13 = tpu.matmul %3, %12, %cst_10 {dimension_numbers = #tpu.dot_dimension_numbers<[1], [0], [0], [1], [0, 0, 1, 1], [], []>} : vector<16x128xf32>, vector<128x128xf32>, vector<16x128xf32> -> vector<16x128xf32>
    %14 = arith.addf %10, %13 : vector<16x128xf32>
    %c0_11 = arith.constant 0 : index
    %c0_12 = arith.constant 0 : index
    %15 = vector.load %arg3[%c0_11, %c0_12] : memref<1x128xf32, #tpu.memory_space<vmem>>, vector<1x128xf32>
    %16 = vector.broadcast %15 : vector<1x128xf32> to vector<16x128xf32>
    %17 = arith.addf %14, %16 : vector<16x128xf32>
    %cst_13 = arith.constant 0.000000e+00 : f32
    %18 = vector.broadcast %cst_13 : f32 to vector<16x128xf32>
    %19 = arith.maximumf %17, %18 : vector<16x128xf32>
    %20 = arith.addf %1, %19 : vector<16x128xf32>
    %c0_14 = arith.constant 0 : index
    %c0_15 = arith.constant 0 : index
    %21 = vector.load %arg4[%c0_14, %c0_15] : memref<128x128xf32, #tpu.memory_space<vmem>>, vector<128x128xf32>
    %cst_16 = arith.constant dense<0.000000e+00> : vector<16x128xf32>
    %22 = tpu.matmul %20, %21, %cst_16 {dimension_numbers = #tpu.dot_dimension_numbers<[1], [0], [0], [1], [0, 0, 1, 1], [], []>} : vector<16x128xf32>, vector<128x128xf32>, vector<16x128xf32> -> vector<16x128xf32>
    %c0_17 = arith.constant 0 : index
    %c0_18 = arith.constant 0 : index
    %23 = vector.load %arg5[%c0_17, %c0_18] : memref<1x128xf32, #tpu.memory_space<vmem>>, vector<1x128xf32>
    %24 = vector.broadcast %23 : vector<1x128xf32> to vector<16x128xf32>
    %25 = arith.addf %22, %24 : vector<16x128xf32>
    %c0_19 = arith.constant 0 : index
    %c0_20 = arith.constant 0 : index
    %c0_21 = arith.constant 0 : index
    %26 = vector.load %arg6[%c0_19, %c0_20, %c0_21] : memref<1x16x128xf32, #tpu.memory_space<vmem>>, vector<1x16x128xf32>
    %27 = vector.shape_cast %26 : vector<1x16x128xf32> to vector<16x128xf32>
    %28 = vector.shape_cast %25 : vector<16x128xf32> to vector<1x16x128xf32>
    tpu.vector_store %arg6[%c0_19, %c0_20, %c0_21], %28 {strides = array<i32>} : memref<1x16x128xf32, #tpu.memory_space<vmem>>, vector<1x16x128xf32>,
    return
  }
  func.func @transform_0(%arg0: i32) -> (i32, i32, i32) {
    %c0_i32 = arith.constant 0 : i32
    %c0_i32_0 = arith.constant 0 : i32
    %c0_i32_1 = arith.constant 0 : i32
    return %arg0, %c0_i32, %c0_i32_0 : i32, i32, i32
  }
  func.func @transform_1(%arg0: i32) -> (i32, i32, i32) {
    %c0_i32 = arith.constant 0 : i32
    %c0_i32_0 = arith.constant 0 : i32
    %c0_i32_1 = arith.constant 0 : i32
    %c0_i32_2 = arith.constant 0 : i32
    return %c0_i32, %c0_i32_0, %c0_i32_1 : i32, i32, i32
  }
  func.func @transform_2(%arg0: i32) -> (i32, i32) {
    %c0_i32 = arith.constant 0 : i32
    %c0_i32_0 = arith.constant 0 : i32
    %c0_i32_1 = arith.constant 0 : i32
    return %c0_i32, %c0_i32_0 : i32, i32
  }
  func.func @transform_3(%arg0: i32) -> (i32, i32) {
    %c0_i32 = arith.constant 0 : i32
    %c0_i32_0 = arith.constant 0 : i32
    %c0_i32_1 = arith.constant 0 : i32
    return %c0_i32, %c0_i32_0 : i32, i32
  }
  func.func @transform_4(%arg0: i32) -> (i32, i32) {
    %c0_i32 = arith.constant 0 : i32
    %c0_i32_0 = arith.constant 0 : i32
    %c0_i32_1 = arith.constant 0 : i32
    return %c0_i32, %c0_i32_0 : i32, i32
  }
  func.func @transform_5(%arg0: i32) -> (i32, i32, i32) {
    %c0_i32 = arith.constant 0 : i32
    %c0_i32_0 = arith.constant 0 : i32
    %c0_i32_1 = arith.constant 0 : i32
    return %arg0, %c0_i32, %c0_i32_0 : i32, i32, i32
  }
}

</mosaic_0001>

<llo_original>
// kernel: network_forward.7
$region0: #{network_forward.7}
  #allocation0 [shape = 'u32[]', space=smem, size = 0x4, offset = 0x4, fixed_abs, tag = 'smem constant byte address 0x4 - core index']
  #allocation1 [shape = 'u32[144,128]{1,0:T(1,128)}', space=vmem, size = 0x12000, scoped, tag = 'internal scratch']
  %s0 = inlined_call_operand.vmem [shape: bf16[512,128], index: 0, kind: input, shape index: {}]
  %s1 = inlined_call_operand.vmem [shape: bf16[128,128], index: 1, kind: input, shape index: {}]
  %s2 = inlined_call_operand.vmem [shape: f32[1,128], index: 2, kind: input, shape index: {}]
  %s3 = inlined_call_operand.vmem [shape: f32[512,128], index: 3, kind: output, shape index: {}]
  %s4 = sld [smem:[#allocation0]]
  $region45: #{network_forward.7} parent=0
    _
  %s6 = ssub.s32 1, %s4
  %s7 = scalar_select 0, %s6, %s4
  loop: start=0, step=1, limit=4
  $region2: #{network_forward.7} parent=0 // loop_pre_header
    _
  $region3: #{network_forward.7} parent=0 // loop_header
    %s9 = sphi 0, %s13
    %p10 = scmp.ge.s32.totalorder %s9, 4
    %s16 = sphi 0, %s28
    %s17 = sphi 0, %s24
    %s18 = sphi 0, %s16
    %s19 = sphi 0, %s17
    %s20 = sphi 0, %s18
    %s21 = sphi 0, %s19
    %s31 = sphi 0, %s33
    %s34 = sphi 0, %s31
    %s35 = sphi 0, %s34
    %s51 = sphi 0, %s35
    %s57 = sphi 0, %s59
    %s60 = sphi 0, %s57
    %s61 = sphi 0, %s60
    %s77 = sphi 0, %s61
    %s83 = sphi 0, %s85
    %s86 = sphi 0, %s83
    %s87 = sphi 0, %s86
    %s103 = sphi 0, %s87
    %s111 = sphi 0, %s113
    %s114 = sphi 0, %s111
    %s115 = sphi 0, %s114
    %s131 = sphi 0, %s115
  $region4: #{network_forward.7} parent=0 // loop_header_branch
    %12 = sbr.rel (%p10) target = $region8
  $region5: #{network_forward.7} parent=0 // loop_body
    %s14 = ssub.s32 %s9, 1
    %s15 = ssub.s32 %s9, 2
    %s22 = sadd.s32 1, %s17
    %p23 = scmp.ge.s32.totalorder %s22, 1
    %s24 = scalar_select %p23, 0, %s22
    %s25 = sadd.s32 1, %s16
    %s26 = scalar_select %p23, %s25, %s16
    %p27 = scmp.ge.s32.totalorder %s26, 2
    %s28 = scalar_select %p27, 0, %s26
    %s29 = ssub.s32 %s16, %s28
    %p30 = scmp.eq.s32.totalorder %s29, 0
    %s32 = sadd.s32 %s31, 1
    %s33 = scalar_select %p30, %s31, %s32
    %p36 = pneg %p30
    %p37 = scmp.eq.s32.totalorder %s9, 1
    %p38 = por %p36, %p37
    %p39 = scmp.ne.s32.totalorder %s31, %s34
    %p40 = scmp.eq.s32.totalorder %s9, 0
    %p41 = por %p39, %p40
    %p42 = scmp.ne.s32.totalorder %s31, %s34
    %p43 = scmp.eq.s32.totalorder %s14, 1
    %p44 = por %p42, %p43
    %p45 = scmp.ne.s32.totalorder %s34, %s35
    %p46 = scmp.eq.s32.totalorder %s14, 0
    %p47 = por %p45, %p46
    %p48 = scmp.ne.s32.totalorder %s34, %s35
    %p49 = scmp.eq.s32.totalorder %s15, 1
    %p50 = por %p48, %p49
    %p52 = scmp.ne.s32.totalorder %s35, %s51
    %p53 = scmp.eq.s32.totalorder %s15, 0
    %p54 = por %p52, %p53
    %s55 = ssub.s32 %s17, %s24
    %p56 = scmp.eq.s32.totalorder %s55, 0
    %s58 = sadd.s32 %s57, 1
    %s59 = scalar_select %p56, %s57, %s58
    %p62 = pneg %p56
    %p63 = scmp.eq.s32.totalorder %s9, 1
    %p64 = por %p62, %p63
    %p65 = scmp.ne.s32.totalorder %s57, %s60
    %p66 = scmp.eq.s32.totalorder %s9, 0
    %p67 = por %p65, %p66
    %p68 = scmp.ne.s32.totalorder %s57, %s60
    %p69 = scmp.eq.s32.totalorder %s14, 1
    %p70 = por %p68, %p69
    %p71 = scmp.ne.s32.totalorder %s60, %s61
    %p72 = scmp.eq.s32.totalorder %s14, 0
    %p73 = por %p71, %p72
    %p74 = scmp.ne.s32.totalorder %s60, %s61
    %p75 = scmp.eq.s32.totalorder %s15, 1
    %p76 = por %p74, %p75
    %p78 = scmp.ne.s32.totalorder %s61, %s77
    %p79 = scmp.eq.s32.totalorder %s15, 0
    %p80 = por %p78, %p79
    %s81 = ssub.s32 %s17, %s24
    %p82 = scmp.eq.s32.totalorder %s81, 0
    %s84 = sadd.s32 %s83, 1
    %s85 = scalar_select %p82, %s83, %s84
    %p88 = pneg %p82
    %p89 = scmp.eq.s32.totalorder %s9, 1
    %p90 = por %p88, %p89
    %p91 = scmp.ne.s32.totalorder %s83, %s86
    %p92 = scmp.eq.s32.totalorder %s9, 0
    %p93 = por %p91, %p92
    %p94 = scmp.ne.s32.totalorder %s83, %s86
    %p95 = scmp.eq.s32.totalorder %s14, 1
    %p96 = por %p94, %p95
    %p97 = scmp.ne.s32.totalorder %s86, %s87
    %p98 = scmp.eq.s32.totalorder %s14, 0
    %p99 = por %p97, %p98
    %p100 = scmp.ne.s32.totalorder %s86, %s87
    %p101 = scmp.eq.s32.totalorder %s15, 1
    %p102 = por %p100, %p101
    %p104 = scmp.ne.s32.totalorder %s87, %s103
    %p105 = scmp.eq.s32.totalorder %s15, 0
    %p106 = por %p104, %p105
    %s107 = ssub.s32 %s16, %s28
    %s108 = ssub.s32 %s17, %s24
    %s109 = sor.u32 %s107, %s108
    %p110 = scmp.eq.s32.totalorder %s109, 0
    %s112 = sadd.s32 %s111, 1
    %s113 = scalar_select %p110, %s111, %s112
    %p116 = pneg %p110
    %p117 = scmp.eq.s32.totalorder %s9, 1
    %p118 = por %p116, %p117
    %p119 = scmp.ne.s32.totalorder %s111, %s114
    %p120 = scmp.eq.s32.totalorder %s9, 0
    %p121 = por %p119, %p120
    %p122 = scmp.ne.s32.totalorder %s111, %s114
    %p123 = scmp.eq.s32.totalorder %s14, 1
    %p124 = por %p122, %p123
    %p125 = scmp.ne.s32.totalorder %s114, %s115
    %p126 = scmp.eq.s32.totalorder %s14, 0
    %p127 = por %p125, %p126
    %p128 = scmp.ne.s32.totalorder %s114, %s115
    %p129 = scmp.eq.s32.totalorder %s15, 1
    %p130 = por %p128, %p129
    %p132 = scmp.ne.s32.totalorder %s115, %s131
    %p133 = scmp.eq.s32.totalorder %s15, 0
    %p134 = por %p132, %p133
    %p135 = scmp.le.s32.totalorder 1, %s9
    %p136 = scmp.lt.s32.totalorder %s9, 3
    %p137 = pnand %p135, %p136
    %p138 = pneg %p137
    // Predicated region
    $region9: #{network_forward.7} parent=5 // pred_check
      _
    $region10: #{network_forward.7} parent=5 // pred_check_branch
      %140 = sbr.rel (%p137) target = $region12
    $region11: #{network_forward.7} parent=5 // pred_region
      %s141 = ssub.s32 %s9, 1
      // Predicated region
      $region13: #{network_forward.7} parent=11 // pred_check
        %p142 = pneg %p73
      $region14: #{network_forward.7} parent=11 // pred_check_branch
        %144 = sbr.rel (%p142) target = $region16
      $region15: #{network_forward.7} parent=11 // pred_region
        %p145 = scmp.lt.s32.totalorder %s19, 0
        %s146 = scalar_select %p145, %s19, 0
        %s147 = smul.addr %s146, 4
        %s148 = scalar_lea.vmem %s1, %s147
      $region16: #{network_forward.7} parent=11 // pred_fallthru
        _
      // Predicated region
      $region17: #{network_forward.7} parent=11 // pred_check
        %p149 = pneg %p99
      $region18: #{network_forward.7} parent=11 // pred_check_branch
        %151 = sbr.rel (%p149) target = $region20
      $region19: #{network_forward.7} parent=11 // pred_region
        %p152 = scmp.lt.s32.totalorder %s19, 0
        %s153 = scalar_select %p152, %s19, 0
        %s154 = scalar_lea.vmem %s2, %s153
      $region20: #{network_forward.7} parent=11 // pred_fallthru
        _
    $region12: #{network_forward.7} parent=5 // pred_fallthru
      _
    %p155 = scmp.lt.s32.totalorder %s9, 2
    // Predicated region
    $region21: #{network_forward.7} parent=5 // pred_check
      %p156 = pneg %p155
    $region22: #{network_forward.7} parent=5 // pred_check_branch
      %158 = sbr.rel (%p156) target = $region24
    $region23: #{network_forward.7} parent=5 // pred_region
      // Predicated region
      $region25: #{network_forward.7} parent=23 // pred_check
        %p159 = pneg %p41
      $region26: #{network_forward.7} parent=23 // pred_check_branch
        %161 = sbr.rel (%p159) target = $region28
      $region27: #{network_forward.7} parent=23 // pred_region
        %s162 = smul.u32 32, %s16
        %p163 = scmp.lt.s32.totalorder %s162, 63
        %s164 = scalar_select %p163, %s162, 63
        %s165 = smul.addr %s164, 4
        %s166 = scalar_lea.vmem %s0, %s165
        %s167 = smul.u32 32, %s16
      $region28: #{network_forward.7} parent=23 // pred_fallthru
        _
    $region24: #{network_forward.7} parent=5 // pred_fallthru
      _
    %p168 = scmp.le.s32.totalorder 1, %s9
    %p169 = scmp.lt.s32.totalorder %s9, 3
    %p170 = pnand %p168, %p169
    %p171 = pneg %p170
    // Predicated region
    $region29: #{network_forward.7} parent=5 // pred_check
      _
    $region30: #{network_forward.7} parent=5 // pred_check_branch
      %173 = sbr.rel (%p170) target = $region32
    $region31: #{network_forward.7} parent=5 // pred_region
      %s174 = ssub.s32 %s9, 1
      %s175 = smul.u32 32, %s18
      %p176 = scmp.lt.s32.totalorder %s175, 63
      %s177 = scalar_select %p176, %s175, 63
      %s178 = smul.addr %s177, 4
      %s179 = scalar_lea.vmem %s0, %s178
      %p180 = pneg %p47
      %p181 = pneg %p44
      %p182 = scmp.lt.s32.totalorder %s19, 0
      %s183 = scalar_select %p182, %s19, 0
      %s184 = smul.addr %s183, 4
      %s185 = scalar_lea.vmem %s1, %s184
      %p186 = pneg %p73
      %p187 = pneg %p70
      %p188 = scmp.lt.s32.totalorder %s19, 0
      %s189 = scalar_select %p188, %s19, 0
      %s190 = scalar_lea.vmem %s2, %s189
      %p191 = pneg %p99
      %p192 = pneg %p96
      %p193 = pneg %p127
      %p194 = pneg %p124
      %s195 = smul.u32 32, %s18
      %p196 = scmp.lt.s32.totalorder %s195, 63
      %s197 = scalar_select %p196, %s195, 63
      %p198 = scmp.lt.s32.totalorder %s19, 0
      %s199 = scalar_select %p198, %s19, 0
      %s200 = sadd.s32 %s199, %s197
      %s201 = smul.addr %s200, 8
      %s202 = scalar_lea.vmem %s3, %s201
      %s203 = smul.u32 32, %s18
      %p204 = scmp.lt.s32.totalorder %s203, 63
      %s205 = scalar_select %p204, %s203, 63
      %s206 = smul.addr %s205, 4
      %s207 = scalar_lea.vmem %s0, %s206
      %s208 = smul.u32 32, %s18
      %p209 = scmp.lt.s32.totalorder %s19, 0
      %s210 = scalar_select %p209, %s19, 0
      %s211 = smul.addr %s210, 4
      %s212 = scalar_lea.vmem %s1, %s211
      %p213 = scmp.lt.s32.totalorder %s19, 0
      %s214 = scalar_select %p213, %s19, 0
      %s215 = scalar_lea.vmem %s2, %s214
      %s216 = smul.u32 32, %s18
      %p217 = scmp.lt.s32.totalorder %s216, 63
      %s218 = scalar_select %p217, %s216, 63
      %p219 = scmp.lt.s32.totalorder %s19, 0
      %s220 = scalar_select %p219, %s19, 0
      %s221 = sadd.s32 %s220, %s218
      %s222 = smul.addr %s221, 8
      %s223 = scalar_lea.vmem %s3, %s222
      %s224 = smul.u32 32, %s18
      %v226 = vld [vmem:[%s207] sm:$0xf]
      %v227 = vld [vmem:[%s207 + $0x4] sm:$0xf]
      %v228 = vld [vmem:[%s207 + $0x8] sm:$0xf]
      %v229 = vld [vmem:[%s207 + $0xc] sm:$0xf]
      %v230 = vld [vmem:[%s207 + $0x10] sm:$0xf]
      %v231 = vld [vmem:[%s207 + $0x14] sm:$0xf]
      %v232 = vld [vmem:[%s207 + $0x18] sm:$0xf]
      %v233 = vld [vmem:[%s207 + $0x1c] sm:$0xf]
      %v234 = vld [vmem:[%s207 + $0x20] sm:$0xf]
      %v235 = vld [vmem:[%s207 + $0x24] sm:$0xf]
      %v236 = vld [vmem:[%s207 + $0x28] sm:$0xf]
      %v237 = vld [vmem:[%s207 + $0x2c] sm:$0xf]
      %v238 = vld [vmem:[%s207 + $0x30] sm:$0xf]
      %v239 = vld [vmem:[%s207 + $0x34] sm:$0xf]
      %v240 = vld [vmem:[%s207 + $0x38] sm:$0xf]
      %v241 = vld [vmem:[%s207 + $0x3c] sm:$0xf]
      %v242 = vld [vmem:[%s207 + $0x40] sm:$0xf]
      %v243 = vld [vmem:[%s207 + $0x44] sm:$0xf]
      %v244 = vld [vmem:[%s207 + $0x48] sm:$0xf]
      %v245 = vld [vmem:[%s207 + $0x4c] sm:$0xf]
      %v246 = vld [vmem:[%s207 + $0x50] sm:$0xf]
      %v247 = vld [vmem:[%s207 + $0x54] sm:$0xf]
      %v248 = vld [vmem:[%s207 + $0x58] sm:$0xf]
      %v249 = vld [vmem:[%s207 + $0x5c] sm:$0xf]
      %v250 = vld [vmem:[%s207 + $0x60] sm:$0xf]
      %v251 = vld [vmem:[%s207 + $0x64] sm:$0xf]
      %v252 = vld [vmem:[%s207 + $0x68] sm:$0xf]
      %v253 = vld [vmem:[%s207 + $0x6c] sm:$0xf]
      %v254 = vld [vmem:[%s207 + $0x70] sm:$0xf]
      %v255 = vld [vmem:[%s207 + $0x74] sm:$0xf]
      %v256 = vld [vmem:[%s207 + $0x78] sm:$0xf]
      %v257 = vld [vmem:[%s207 + $0x7c] sm:$0xf]
      %v258 = vld [vmem:[%s212] sm:$0xf]
      %v259 = vld [vmem:[%s212 + $0x4] sm:$0xf]
      %v260 = vld [vmem:[%s212 + $0x8] sm:$0xf]
      %v261 = vld [vmem:[%s212 + $0xc] sm:$0xf]
      %v262 = vld [vmem:[%s212 + $0x10] sm:$0xf]
      %v263 = vld [vmem:[%s212 + $0x14] sm:$0xf]
      %v264 = vld [vmem:[%s212 + $0x18] sm:$0xf]
      %v265 = vld [vmem:[%s212 + $0x1c] sm:$0xf]
      %v266 = vld [vmem:[%s212 + $0x20] sm:$0xf]
      %v267 = vld [vmem:[%s212 + $0x24] sm:$0xf]
      %v268 = vld [vmem:[%s212 + $0x28] sm:$0xf]
      %v269 = vld [vmem:[%s212 + $0x2c] sm:$0xf]
      %v270 = vld [vmem:[%s212 + $0x30] sm:$0xf]
      %v271 = vld [vmem:[%s212 + $0x34] sm:$0xf]
      %v272 = vld [vmem:[%s212 + $0x38] sm:$0xf]
      %v273 = vld [vmem:[%s212 + $0x3c] sm:$0xf]
      %v274 = vld [vmem:[%s215] sm:$0x1]
      %v276 = vlaneseq
      %v277 = vshrl.u32 %v276, 7
      %v278 = vsub.s32 0, %v277
      %v279 = vrot.slane %v274, %v278
      %v313 = vunpack.c.l.b16 %v226
      %v314 = vunpack.c.l.b16 %v227
      %v315 = vunpack.c.l.b16 %v228
      %v316 = vunpack.c.l.b16 %v229
      %v317 = vunpack.c.l.b16 %v230
      %v318 = vunpack.c.l.b16 %v231
      %v319 = vunpack.c.l.b16 %v232
      %v320 = vunpack.c.l.b16 %v233
      %v321 = vunpack.c.l.b16 %v234
      %v322 = vunpack.c.l.b16 %v235
      %v323 = vunpack.c.l.b16 %v236
      %v324 = vunpack.c.l.b16 %v237
      %v325 = vunpack.c.l.b16 %v238
      %v326 = vunpack.c.l.b16 %v239
      %v327 = vunpack.c.l.b16 %v240
      %v328 = vunpack.c.l.b16 %v241
      %v329 = vunpack.c.l.b16 %v242
      %v330 = vunpack.c.l.b16 %v243
      %v331 = vunpack.c.l.b16 %v244
      %v332 = vunpack.c.l.b16 %v245
      %v333 = vunpack.c.l.b16 %v246
      %v334 = vunpack.c.l.b16 %v247
      %v335 = vunpack.c.l.b16 %v248
      %v336 = vunpack.c.l.b16 %v249
      %v337 = vunpack.c.l.b16 %v250
      %v338 = vunpack.c.l.b16 %v251
      %v339 = vunpack.c.l.b16 %v252
      %v340 = vunpack.c.l.b16 %v253
      %v341 = vunpack.c.l.b16 %v254
      %v342 = vunpack.c.l.b16 %v255
      %v343 = vunpack.c.l.b16 %v256
      %v344 = vunpack.c.l.b16 %v257
      %v345 = vpack.c.b16 %v314, %v313
      %v346 = vpack.c.b16 %v316, %v315
      %v347 = vpack.c.b16 %v318, %v317
      %v348 = vpack.c.b16 %v320, %v319
      %v349 = vpack.c.b16 %v322, %v321
      %v350 = vpack.c.b16 %v324, %v323
      %v351 = vpack.c.b16 %v326, %v325
      %v352 = vpack.c.b16 %v328, %v327
      %v353 = vpack.c.b16 %v330, %v329
      %v354 = vpack.c.b16 %v332, %v331
      %v355 = vpack.c.b16 %v334, %v333
      %v356 = vpack.c.b16 %v336, %v335
      %v357 = vpack.c.b16 %v338, %v337
      %v358 = vpack.c.b16 %v340, %v339
      %v359 = vpack.c.b16 %v342, %v341
      %v360 = vpack.c.b16 %v344, %v343
      %v393 = vunpack.c.l.b16 %v258
      %v394 = vunpack.c.l.b16 %v259
      %v395 = vunpack.c.l.b16 %v260
      %v396 = vunpack.c.l.b16 %v261
      %v397 = vunpack.c.l.b16 %v262
      %v398 = vunpack.c.l.b16 %v263
      %v399 = vunpack.c.l.b16 %v264
      %v400 = vunpack.c.l.b16 %v265
      %v401 = vunpack.c.l.b16 %v266
      %v402 = vunpack.c.l.b16 %v267
      %v403 = vunpack.c.l.b16 %v268
      %v404 = vunpack.c.l.b16 %v269
      %v405 = vunpack.c.l.b16 %v270
      %v406 = vunpack.c.l.b16 %v271
      %v407 = vunpack.c.l.b16 %v272
      %v408 = vunpack.c.l.b16 %v273
      %v409 = vpack.c.b16 %v394, %v393
      %v410 = vpack.c.b16 %v396, %v395
      %v411 = vpack.c.b16 %v398, %v397
      %v412 = vpack.c.b16 %v400, %v399
      %v413 = vpack.c.b16 %v402, %v401
      %v414 = vpack.c.b16 %v404, %v403
      %v415 = vpack.c.b16 %v406, %v405
      %v416 = vpack.c.b16 %v408, %v407
      %425 = vmatprep.subr.bf16.mxu0 0
      %426 = vmatpush1.bf16.msra.mxu0 %v409
      %427 = vmatprep.subr.bf16.mxu0 0
      %428 = vmatpush1.bf16.msra.mxu0 %v410
      %429 = vmatprep.subr.bf16.mxu0 0
      %430 = vmatpush1.bf16.msra.mxu0 %v411
      %431 = vmatprep.subr.bf16.mxu0 0
      %432 = vmatpush1.bf16.msra.mxu0 %v412
      %433 = vmatprep.subr.bf16.mxu0 0
      %434 = vmatpush1.bf16.msra.mxu0 %v413
      %435 = vmatprep.subr.bf16.mxu0 0
      %436 = vmatpush1.bf16.msra.mxu0 %v414
      %437 = vmatprep.subr.bf16.mxu0 0
      %438 = vmatpush1.bf16.msra.mxu0 %v415
      %439 = vmatprep.subr.bf16.mxu0 0
      %440 = vmatpush1.bf16.msra.mxu0 %v416
      %441 = vmatprep.subr.bf16.mxu0 0
      %442 = vmatpush1.bf16.msra.mxu0 0
      %443 = vmatprep.subr.bf16.mxu0 0
      %444 = vmatpush1.bf16.msra.mxu0 0
      %445 = vmatprep.subr.bf16.mxu0 0
      %446 = vmatpush1.bf16.msra.mxu0 0
      %447 = vmatprep.subr.bf16.mxu0 0
      %448 = vmatpush1.bf16.msra.mxu0 0
      %449 = vmatprep.subr.bf16.mxu0 0
      %450 = vmatpush1.bf16.msra.mxu0 0
      %451 = vmatprep.subr.bf16.mxu0 0
      %452 = vmatpush1.bf16.msra.mxu0 0
      %453 = vmatprep.subr.bf16.mxu0 0
      %454 = vmatpush1.bf16.msra.mxu0 0
      %455 = vmatprep.subr.bf16.mxu0 0
      %456 = vmatpush1.bf16.msra.mxu0 0
      %457 = vmatprep.mubr.bf16.mxu0 0
      %458 = vmatmul.mubr.bf16.gmra.mrb[0].mxu0 %v345
      %v459 = vpop.f32.mrb[0].mxu0
      %v460 = vadd.f32 %v279, %v459
      %v461 = vpop.f32.mrb[0].mxu0
      %v462 = vpop.f32.mrb[0].mxu0
      %v463 = vadd.f32 %v279, %v462
      %v464 = vpop.f32.mrb[0].mxu0
      %465 = vmatprep.mubr.bf16.mxu0 0
      %466 = vmatmul.mubr.bf16.gmra.mrb[0].mxu0 %v346
      %v467 = vpop.f32.mrb[0].mxu0
      %v468 = vadd.f32 %v279, %v467
      %v469 = vpop.f32.mrb[0].mxu0
      %v470 = vpop.f32.mrb[0].mxu0
      %v471 = vadd.f32 %v279, %v470
      %v472 = vpop.f32.mrb[0].mxu0
      %473 = vmatprep.mubr.bf16.mxu0 0
      %474 = vmatmul.mubr.bf16.gmra.mrb[0].mxu0 %v347
      %v475 = vpop.f32.mrb[0].mxu0
      %v476 = vadd.f32 %v279, %v475
      %v477 = vpop.f32.mrb[0].mxu0
      %v478 = vpop.f32.mrb[0].mxu0
      %v479 = vadd.f32 %v279, %v478
      %v480 = vpop.f32.mrb[0].mxu0
      %481 = vmatprep.mubr.bf16.mxu0 0
      %482 = vmatmul.mubr.bf16.gmra.mrb[0].mxu0 %v348
      %v483 = vpop.f32.mrb[0].mxu0
      %v484 = vadd.f32 %v279, %v483
      %v485 = vpop.f32.mrb[0].mxu0
      %v486 = vpop.f32.mrb[0].mxu0
      %v487 = vadd.f32 %v279, %v486
      %v488 = vpop.f32.mrb[0].mxu0
      %489 = vmatprep.mubr.bf16.mxu0 0
      %490 = vmatmul.mubr.bf16.gmra.mrb[0].mxu0 %v349
      %v491 = vpop.f32.mrb[0].mxu0
      %v492 = vadd.f32 %v279, %v491
      %v493 = vpop.f32.mrb[0].mxu0
      %v494 = vpop.f32.mrb[0].mxu0
      %v495 = vadd.f32 %v279, %v494
      %v496 = vpop.f32.mrb[0].mxu0
      %497 = vmatprep.mubr.bf16.mxu0 0
      %498 = vmatmul.mubr.bf16.gmra.mrb[0].mxu0 %v350
      %v499 = vpop.f32.mrb[0].mxu0
      %v500 = vadd.f32 %v279, %v499
      %v501 = vpop.f32.mrb[0].mxu0
      %v502 = vpop.f32.mrb[0].mxu0
      %v503 = vadd.f32 %v279, %v502
      %v504 = vpop.f32.mrb[0].mxu0
      %505 = vmatprep.mubr.bf16.mxu0 0
      %506 = vmatmul.mubr.bf16.gmra.mrb[0].mxu0 %v351
      %v507 = vpop.f32.mrb[0].mxu0
      %v508 = vadd.f32 %v279, %v507
      %v509 = vpop.f32.mrb[0].mxu0
      %v510 = vpop.f32.mrb[0].mxu0
      %v511 = vadd.f32 %v279, %v510
      %v512 = vpop.f32.mrb[0].mxu0
      %513 = vmatprep.mubr.bf16.mxu0 0
      %514 = vmatmul.mubr.bf16.gmra.mrb[0].mxu0 %v352
      %v515 = vpop.f32.mrb[0].mxu0
      %v516 = vadd.f32 %v279, %v515
      %v517 = vpop.f32.mrb[0].mxu0
      %v518 = vpop.f32.mrb[0].mxu0
      %v519 = vadd.f32 %v279, %v518
      %v520 = vpop.f32.mrb[0].mxu0
      %521 = vmatprep.mubr.bf16.mxu0 0
      %522 = vmatmul.mubr.bf16.gmra.mrb[0].mxu0 %v353
      %v523 = vpop.f32.mrb[0].mxu0
      %v524 = vadd.f32 %v279, %v523
      %v525 = vpop.f32.mrb[0].mxu0
      %v526 = vpop.f32.mrb[0].mxu0
      %v527 = vadd.f32 %v279, %v526
      %v528 = vpop.f32.mrb[0].mxu0
      %529 = vmatprep.mubr.bf16.mxu0 0
      %530 = vmatmul.mubr.bf16.gmra.mrb[0].mxu0 %v354
      %v531 = vpop.f32.mrb[0].mxu0
      %v532 = vadd.f32 %v279, %v531
      %v533 = vpop.f32.mrb[0].mxu0
      %v534 = vpop.f32.mrb[0].mxu0
      %v535 = vadd.f32 %v279, %v534
      %v536 = vpop.f32.mrb[0].mxu0
      %537 = vmatprep.mubr.bf16.mxu0 0
      %538 = vmatmul.mubr.bf16.gmra.mrb[0].mxu0 %v355
      %v539 = vpop.f32.mrb[0].mxu0
      %v540 = vadd.f32 %v279, %v539
      %v541 = vpop.f32.mrb[0].mxu0
      %v542 = vpop.f32.mrb[0].mxu0
      %v543 = vadd.f32 %v279, %v542
      %v544 = vpop.f32.mrb[0].mxu0
      %545 = vmatprep.mubr.bf16.mxu0 0
      %546 = vmatmul.mubr.bf16.gmra.mrb[0].mxu0 %v356
      %v547 = vpop.f32.mrb[0].mxu0
      %v548 = vadd.f32 %v279, %v547
      %v549 = vpop.f32.mrb[0].mxu0
      %v550 = vpop.f32.mrb[0].mxu0
      %v551 = vadd.f32 %v279, %v550
      %v552 = vpop.f32.mrb[0].mxu0
      %553 = vmatprep.mubr.bf16.mxu0 0
      %554 = vmatmul.mubr.bf16.gmra.mrb[0].mxu0 %v357
      %v555 = vpop.f32.mrb[0].mxu0
      %v556 = vadd.f32 %v279, %v555
      %v557 = vpop.f32.mrb[0].mxu0
      %v558 = vpop.f32.mrb[0].mxu0
      %v559 = vadd.f32 %v279, %v558
      %v560 = vpop.f32.mrb[0].mxu0
      %561 = vmatprep.mubr.bf16.mxu0 0
      %562 = vmatmul.mubr.bf16.gmra.mrb[0].mxu0 %v358
      %v563 = vpop.f32.mrb[0].mxu0
      %v564 = vadd.f32 %v279, %v563
      %v565 = vpop.f32.mrb[0].mxu0
      %v566 = vpop.f32.mrb[0].mxu0
      %v567 = vadd.f32 %v279, %v566
      %v568 = vpop.f32.mrb[0].mxu0
      %569 = vmatprep.mubr.bf16.mxu0 0
      %570 = vmatmul.mubr.bf16.gmra.mrb[0].mxu0 %v359
      %v571 = vpop.f32.mrb[0].mxu0
      %v572 = vadd.f32 %v279, %v571
      %v573 = vpop.f32.mrb[0].mxu0
      %v574 = vpop.f32.mrb[0].mxu0
      %v575 = vadd.f32 %v279, %v574
      %v576 = vpop.f32.mrb[0].mxu0
      %577 = vmatprep.mubr.bf16.mxu0 0
      %578 = vmatmul.mubr.bf16.gmra.mrb[0].mxu0 %v360
      %v579 = vpop.f32.mrb[0].mxu0
      %v580 = vadd.f32 %v279, %v579
      %v581 = vpop.f32.mrb[0].mxu0
      %v582 = vpop.f32.mrb[0].mxu0
      %v583 = vadd.f32 %v279, %v582
      %v584 = vpop.f32.mrb[0].mxu0
      %585 = vdwg.mxu0
      %v586 = vmax.f32 %v460, 0.0
      %v587 = vmax.f32 %v463, 0.0
      %v588 = vmax.f32 %v468, 0.0
      %v589 = vmax.f32 %v471, 0.0
      %v590 = vmax.f32 %v476, 0.0
      %v591 = vmax.f32 %v479, 0.0
      %v592 = vmax.f32 %v484, 0.0
      %v593 = vmax.f32 %v487, 0.0
      %v594 = vmax.f32 %v492, 0.0
      %v595 = vmax.f32 %v495, 0.0
      %v596 = vmax.f32 %v500, 0.0
      %v597 = vmax.f32 %v503, 0.0
      %v598 = vmax.f32 %v508, 0.0
      %v599 = vmax.f32 %v511, 0.0
      %v600 = vmax.f32 %v516, 0.0
      %v601 = vmax.f32 %v519, 0.0
      %v602 = vmax.f32 %v524, 0.0
      %v603 = vmax.f32 %v527, 0.0
      %v604 = vmax.f32 %v532, 0.0
      %v605 = vmax.f32 %v535, 0.0
      %v606 = vmax.f32 %v540, 0.0
      %v607 = vmax.f32 %v543, 0.0
      %v608 = vmax.f32 %v548, 0.0
      %v609 = vmax.f32 %v551, 0.0
      %v610 = vmax.f32 %v556, 0.0
      %v611 = vmax.f32 %v559, 0.0
      %v612 = vmax.f32 %v564, 0.0
      %v613 = vmax.f32 %v567, 0.0
      %v614 = vmax.f32 %v572, 0.0
      %v615 = vmax.f32 %v575, 0.0
      %v616 = vmax.f32 %v580, 0.0
      %v617 = vmax.f32 %v583, 0.0
      %618 = vst [vmem:[%s223] sm:$0xff] %v586
      %619 = vst [vmem:[%s223 + $0x8] sm:$0xff] %v587
      %620 = vst [vmem:[%s223 + $0x10] sm:$0xff] %v588
      %621 = vst [vmem:[%s223 + $0x18] sm:$0xff] %v589
      %622 = vst [vmem:[%s223 + $0x20] sm:$0xff] %v590
      %623 = vst [vmem:[%s223 + $0x28] sm:$0xff] %v591
      %624 = vst [vmem:[%s223 + $0x30] sm:$0xff] %v592
      %625 = vst [vmem:[%s223 + $0x38] sm:$0xff] %v593
      %626 = vst [vmem:[%s223 + $0x40] sm:$0xff] %v594
      %627 = vst [vmem:[%s223 + $0x48] sm:$0xff] %v595
      %628 = vst [vmem:[%s223 + $0x50] sm:$0xff] %v596
      %629 = vst [vmem:[%s223 + $0x58] sm:$0xff] %v597
      %630 = vst [vmem:[%s223 + $0x60] sm:$0xff] %v598
      %631 = vst [vmem:[%s223 + $0x68] sm:$0xff] %v599
      %632 = vst [vmem:[%s223 + $0x70] sm:$0xff] %v600
      %633 = vst [vmem:[%s223 + $0x78] sm:$0xff] %v601
      %634 = vst [vmem:[%s223 + $0x80] sm:$0xff] %v602
      %635 = vst [vmem:[%s223 + $0x88] sm:$0xff] %v603
      %636 = vst [vmem:[%s223 + $0x90] sm:$0xff] %v604
      %637 = vst [vmem:[%s223 + $0x98] sm:$0xff] %v605
      %638 = vst [vmem:[%s223 + $0xa0] sm:$0xff] %v606
      %639 = vst [vmem:[%s223 + $0xa8] sm:$0xff] %v607
      %640 = vst [vmem:[%s223 + $0xb0] sm:$0xff] %v608
      %641 = vst [vmem:[%s223 + $0xb8] sm:$0xff] %v609
      %642 = vst [vmem:[%s223 + $0xc0] sm:$0xff] %v610
      %643 = vst [vmem:[%s223 + $0xc8] sm:$0xff] %v611
      %644 = vst [vmem:[%s223 + $0xd0] sm:$0xff] %v612
      %645 = vst [vmem:[%s223 + $0xd8] sm:$0xff] %v613
      %646 = vst [vmem:[%s223 + $0xe0] sm:$0xff] %v614
      %647 = vst [vmem:[%s223 + $0xe8] sm:$0xff] %v615
      %648 = vst [vmem:[%s223 + $0xf0] sm:$0xff] %v616
      %649 = vst [vmem:[%s223 + $0xf8] sm:$0xff] %v617
      %s650 = smul.u32 32, %s18
      %p651 = scmp.lt.s32.totalorder %s650, 63
      %s652 = scalar_select %p651, %s650, 63
      %p653 = scmp.lt.s32.totalorder %s19, 0
      %s654 = scalar_select %p653, %s19, 0
      %s655 = sadd.s32 %s654, %s652
      %s656 = smul.addr %s655, 8
      %s657 = scalar_lea.vmem %s3, %s656
      // Predicated region
      $region33: #{network_forward.7} parent=31 // pred_check
        %p658 = pneg %p124
      $region34: #{network_forward.7} parent=31 // pred_check_branch
        %660 = sbr.rel (%p658) target = $region36
      $region35: #{network_forward.7} parent=31 // pred_region
        %s661 = smul.u32 32, %s18
      $region36: #{network_forward.7} parent=31 // pred_fallthru
        _
    $region32: #{network_forward.7} parent=5 // pred_fallthru
      _
    %p662 = scmp.le.s32.totalorder 2, %s9
    // Predicated region
    $region37: #{network_forward.7} parent=5 // pred_check
      %p663 = pneg %p662
    $region38: #{network_forward.7} parent=5 // pred_check_branch
      %665 = sbr.rel (%p663) target = $region40
    $region39: #{network_forward.7} parent=5 // pred_region
      %s666 = ssub.s32 %s9, 2
      // Predicated region
      $region41: #{network_forward.7} parent=39 // pred_check
        %p667 = pneg %p130
      $region42: #{network_forward.7} parent=39 // pred_check_branch
        %669 = sbr.rel (%p667) target = $region44
      $region43: #{network_forward.7} parent=39 // pred_region
        %s670 = smul.u32 32, %s20
        %p671 = scmp.lt.s32.totalorder %s670, 63
        %s672 = scalar_select %p671, %s670, 63
        %p673 = scmp.lt.s32.totalorder %s21, 0
        %s674 = scalar_select %p673, %s21, 0
        %s675 = sadd.s32 %s674, %s672
        %s676 = smul.addr %s675, 8
        %s677 = scalar_lea.vmem %s3, %s676
      $region44: #{network_forward.7} parent=39 // pred_fallthru
        _
    $region40: #{network_forward.7} parent=5 // pred_fallthru
      _
  $region6: #{network_forward.7} parent=0 // loop_footer
    %s13 = sadd.s32 1, %s9
  $region7: #{network_forward.7} parent=0 // loop_footer_branch
    %8 = sbr.rel target = $region3
  $region8: #{network_forward.7} parent=0 // loop_exit
    _

// kernel: network_forward.8
$region0: #{network_forward.8}
  #allocation0 [shape = 'u32[]', space=smem, size = 0x4, offset = 0x4, fixed_abs, tag = 'smem constant byte address 0x4 - core index']
  #allocation1 [shape = 'u32[144,128]{1,0:T(1,128)}', space=vmem, size = 0x12000, scoped, tag = 'internal scratch']
  %s0 = inlined_call_operand.vmem [shape: bf16[128,256], index: 0, kind: input, shape index: {}]
  %s1 = inlined_call_operand.vmem [shape: bf16[256,128], index: 1, kind: input, shape index: {}]
  %s2 = inlined_call_operand.vmem [shape: f32[1,128], index: 2, kind: input, shape index: {}]
  %s3 = inlined_call_operand.vmem [shape: f32[128,128], index: 3, kind: output, shape index: {}]
  %s4 = sld [smem:[#allocation0]]
  $region22: #{network_forward.8} parent=0
    _
  %s6 = ssub.s32 1, %s4
  %s7 = scalar_select 0, %s6, %s4
  // Predicated region
  $region2: #{network_forward.8} parent=0 // pred_check
    _
  $region3: #{network_forward.8} parent=0 // pred_check_branch
    %9 = sbr.rel (0) target = $region5
  $region4: #{network_forward.8} parent=0 // pred_region
    _
  $region5: #{network_forward.8} parent=0 // pred_fallthru
    _
  // Predicated region
  $region6: #{network_forward.8} parent=0 // pred_check
    _
  $region7: #{network_forward.8} parent=0 // pred_check_branch
    %11 = sbr.rel (0) target = $region9
  $region8: #{network_forward.8} parent=0 // pred_region
    _
  $region9: #{network_forward.8} parent=0 // pred_fallthru
    _
  // Predicated region
  $region10: #{network_forward.8} parent=0 // pred_check
    _
  $region11: #{network_forward.8} parent=0 // pred_check_branch
    %13 = sbr.rel (0) target = $region13
  $region12: #{network_forward.8} parent=0 // pred_region
    _
  $region13: #{network_forward.8} parent=0 // pred_fallthru
    _
  %v15 = vld [vmem:[%s0] sm:$0xff]
  %v16 = vld [vmem:[%s0 + $0x8] sm:$0xff]
  %v17 = vld [vmem:[%s0 + $0x10] sm:$0xff]
  %v18 = vld [vmem:[%s0 + $0x18] sm:$0xff]
  %v19 = vld [vmem:[%s0 + $0x20] sm:$0xff]
  %v20 = vld [vmem:[%s0 + $0x28] sm:$0xff]
  %v21 = vld [vmem:[%s0 + $0x30] sm:$0xff]
  %v22 = vld [vmem:[%s0 + $0x38] sm:$0xff]
  %v23 = vld [vmem:[%s0 + $0x40] sm:$0xff]
  %v24 = vld [vmem:[%s0 + $0x48] sm:$0xff]
  %v25 = vld [vmem:[%s0 + $0x50] sm:$0xff]
  %v26 = vld [vmem:[%s0 + $0x58] sm:$0xff]
  %v27 = vld [vmem:[%s0 + $0x60] sm:$0xff]
  %v28 = vld [vmem:[%s0 + $0x68] sm:$0xff]
  %v29 = vld [vmem:[%s0 + $0x70] sm:$0xff]
  %v30 = vld [vmem:[%s0 + $0x78] sm:$0xff]
  %v31 = vld [vmem:[%s1] sm:$0xf]
  %v32 = vld [vmem:[%s1 + $0x4] sm:$0xf]
  %v33 = vld [vmem:[%s1 + $0x8] sm:$0xf]
  %v34 = vld [vmem:[%s1 + $0xc] sm:$0xf]
  %v35 = vld [vmem:[%s1 + $0x10] sm:$0xf]
  %v36 = vld [vmem:[%s1 + $0x14] sm:$0xf]
  %v37 = vld [vmem:[%s1 + $0x18] sm:$0xf]
  %v38 = vld [vmem:[%s1 + $0x1c] sm:$0xf]
  %v39 = vld [vmem:[%s1 + $0x20] sm:$0xf]
  %v40 = vld [vmem:[%s1 + $0x24] sm:$0xf]
  %v41 = vld [vmem:[%s1 + $0x28] sm:$0xf]
  %v42 = vld [vmem:[%s1 + $0x2c] sm:$0xf]
  %v43 = vld [vmem:[%s1 + $0x30] sm:$0xf]
  %v44 = vld [vmem:[%s1 + $0x34] sm:$0xf]
  %v45 = vld [vmem:[%s1 + $0x38] sm:$0xf]
  %v46 = vld [vmem:[%s1 + $0x3c] sm:$0xf]
  %v47 = vld [vmem:[%s1 + $0x40] sm:$0xf]
  %v48 = vld [vmem:[%s1 + $0x44] sm:$0xf]
  %v49 = vld [vmem:[%s1 + $0x48] sm:$0xf]
  %v50 = vld [vmem:[%s1 + $0x4c] sm:$0xf]
  %v51 = vld [vmem:[%s1 + $0x50] sm:$0xf]
  %v52 = vld [vmem:[%s1 + $0x54] sm:$0xf]
  %v53 = vld [vmem:[%s1 + $0x58] sm:$0xf]
  %v54 = vld [vmem:[%s1 + $0x5c] sm:$0xf]
  %v55 = vld [vmem:[%s1 + $0x60] sm:$0xf]
  %v56 = vld [vmem:[%s1 + $0x64] sm:$0xf]
  %v57 = vld [vmem:[%s1 + $0x68] sm:$0xf]
  %v58 = vld [vmem:[%s1 + $0x6c] sm:$0xf]
  %v59 = vld [vmem:[%s1 + $0x70] sm:$0xf]
  %v60 = vld [vmem:[%s1 + $0x74] sm:$0xf]
  %v61 = vld [vmem:[%s1 + $0x78] sm:$0xf]
  %v62 = vld [vmem:[%s1 + $0x7c] sm:$0xf]
  %v63 = vld [vmem:[%s2] sm:$0x1]
  %v65 = vlaneseq
  %v66 = vshrl.u32 %v65, 7
  %v67 = vsub.s32 0, %v66
  %v68 = vrot.slane %v63, %v67
  %v86 = vunpack.c.l.b16 %v15
  %v87 = vunpack.c.h.b16 %v15
  %v88 = vunpack.c.l.b16 %v16
  %v89 = vunpack.c.h.b16 %v16
  %v90 = vunpack.c.l.b16 %v17
  %v91 = vunpack.c.h.b16 %v17
  %v92 = vunpack.c.l.b16 %v18
  %v93 = vunpack.c.h.b16 %v18
  %v94 = vunpack.c.l.b16 %v19
  %v95 = vunpack.c.h.b16 %v19
  %v96 = vunpack.c.l.b16 %v20
  %v97 = vunpack.c.h.b16 %v20
  %v98 = vunpack.c.l.b16 %v21
  %v99 = vunpack.c.h.b16 %v21
  %v100 = vunpack.c.l.b16 %v22
  %v101 = vunpack.c.h.b16 %v22
  %v102 = vunpack.c.l.b16 %v23
  %v103 = vunpack.c.h.b16 %v23
  %v104 = vunpack.c.l.b16 %v24
  %v105 = vunpack.c.h.b16 %v24
  %v106 = vunpack.c.l.b16 %v25
  %v107 = vunpack.c.h.b16 %v25
  %v108 = vunpack.c.l.b16 %v26
  %v109 = vunpack.c.h.b16 %v26
  %v110 = vunpack.c.l.b16 %v27
  %v111 = vunpack.c.h.b16 %v27
  %v112 = vunpack.c.l.b16 %v28
  %v113 = vunpack.c.h.b16 %v28
  %v114 = vunpack.c.l.b16 %v29
  %v115 = vunpack.c.h.b16 %v29
  %v116 = vunpack.c.l.b16 %v30
  %v117 = vunpack.c.h.b16 %v30
  %v118 = vpack.c.b16 %v88, %v86
  %v119 = vpack.c.b16 %v89, %v87
  %v120 = vpack.c.b16 %v92, %v90
  %v121 = vpack.c.b16 %v93, %v91
  %v122 = vpack.c.b16 %v96, %v94
  %v123 = vpack.c.b16 %v97, %v95
  %v124 = vpack.c.b16 %v100, %v98
  %v125 = vpack.c.b16 %v101, %v99
  %v126 = vpack.c.b16 %v104, %v102
  %v127 = vpack.c.b16 %v105, %v103
  %v128 = vpack.c.b16 %v108, %v106
  %v129 = vpack.c.b16 %v109, %v107
  %v130 = vpack.c.b16 %v112, %v110
  %v131 = vpack.c.b16 %v113, %v111
  %v132 = vpack.c.b16 %v116, %v114
  %v133 = vpack.c.b16 %v117, %v115
  %v182 = vunpack.c.l.b16 %v31
  %v183 = vunpack.c.l.b16 %v32
  %v184 = vunpack.c.l.b16 %v33
  %v185 = vunpack.c.l.b16 %v34
  %v186 = vunpack.c.l.b16 %v35
  %v187 = vunpack.c.l.b16 %v36
  %v188 = vunpack.c.l.b16 %v37
  %v189 = vunpack.c.l.b16 %v38
  %v190 = vunpack.c.l.b16 %v39
  %v191 = vunpack.c.l.b16 %v40
  %v192 = vunpack.c.l.b16 %v41
  %v193 = vunpack.c.l.b16 %v42
  %v194 = vunpack.c.l.b16 %v43
  %v195 = vunpack.c.l.b16 %v44
  %v196 = vunpack.c.l.b16 %v45
  %v197 = vunpack.c.l.b16 %v46
  %v198 = vunpack.c.l.b16 %v47
  %v199 = vunpack.c.l.b16 %v48
  %v200 = vunpack.c.l.b16 %v49
  %v201 = vunpack.c.l.b16 %v50
  %v202 = vunpack.c.l.b16 %v51
  %v203 = vunpack.c.l.b16 %v52
  %v204 = vunpack.c.l.b16 %v53
  %v205 = vunpack.c.l.b16 %v54
  %v206 = vunpack.c.l.b16 %v55
  %v207 = vunpack.c.l.b16 %v56
  %v208 = vunpack.c.l.b16 %v57
  %v209 = vunpack.c.l.b16 %v58
  %v210 = vunpack.c.l.b16 %v59
  %v211 = vunpack.c.l.b16 %v60
  %v212 = vunpack.c.l.b16 %v61
  %v213 = vunpack.c.l.b16 %v62
  %v214 = vpack.c.b16 %v183, %v182
  %v215 = vpack.c.b16 %v185, %v184
  %v216 = vpack.c.b16 %v187, %v186
  %v217 = vpack.c.b16 %v189, %v188
  %v218 = vpack.c.b16 %v191, %v190
  %v219 = vpack.c.b16 %v193, %v192
  %v220 = vpack.c.b16 %v195, %v194
  %v221 = vpack.c.b16 %v197, %v196
  %v222 = vpack.c.b16 %v199, %v198
  %v223 = vpack.c.b16 %v201, %v200
  %v224 = vpack.c.b16 %v203, %v202
  %v225 = vpack.c.b16 %v205, %v204
  %v226 = vpack.c.b16 %v207, %v206
  %v227 = vpack.c.b16 %v209, %v208
  %v228 = vpack.c.b16 %v211, %v210
  %v229 = vpack.c.b16 %v213, %v212
  %246 = vmatprep.subr.bf16.mxu0 0
  %247 = vmatpush1.bf16.msra.mxu0 %v214
  %248 = vmatprep.subr.bf16.mxu0 0
  %249 = vmatpush1.bf16.msra.mxu0 %v215
  %250 = vmatprep.subr.bf16.mxu0 0
  %251 = vmatpush1.bf16.msra.mxu0 %v216
  %252 = vmatprep.subr.bf16.mxu0 0
  %253 = vmatpush1.bf16.msra.mxu0 %v217
  %254 = vmatprep.subr.bf16.mxu0 0
  %255 = vmatpush1.bf16.msra.mxu0 %v218
  %256 = vmatprep.subr.bf16.mxu0 0
  %257 = vmatpush1.bf16.msra.mxu0 %v219
  %258 = vmatprep.subr.bf16.mxu0 0
  %259 = vmatpush1.bf16.msra.mxu0 %v220
  %260 = vmatprep.subr.bf16.mxu0 0
  %261 = vmatpush1.bf16.msra.mxu0 %v221
  %262 = vmatprep.subr.bf16.mxu0 0
  %263 = vmatpush1.bf16.msra.mxu0 %v222
  %264 = vmatprep.subr.bf16.mxu0 0
  %265 = vmatpush1.bf16.msra.mxu0 %v223
  %266 = vmatprep.subr.bf16.mxu0 0
  %267 = vmatpush1.bf16.msra.mxu0 %v224
  %268 = vmatprep.subr.bf16.mxu0 0
  %269 = vmatpush1.bf16.msra.mxu0 %v225
  %270 = vmatprep.subr.bf16.mxu0 0
  %271 = vmatpush1.bf16.msra.mxu0 %v226
  %272 = vmatprep.subr.bf16.mxu0 0
  %273 = vmatpush1.bf16.msra.mxu0 %v227
  %274 = vmatprep.subr.bf16.mxu0 0
  %275 = vmatpush1.bf16.msra.mxu0 %v228
  %276 = vmatprep.subr.bf16.mxu0 0
  %277 = vmatpush1.bf16.msra.mxu0 %v229
  %278 = vmatprep.mubr.bf16.mxu0 %v119
  %279 = vmatmul.mubr.bf16.gmra.mrb[0].mxu0 %v118
  %v280 = vpop.f32.mrb[0].mxu0
  %v281 = vadd.f32 %v68, %v280
  %v282 = vpop.f32.mrb[0].mxu0
  %v283 = vpop.f32.mrb[0].mxu0
  %v284 = vadd.f32 %v68, %v283
  %v285 = vpop.f32.mrb[0].mxu0
  %286 = vmatprep.mubr.bf16.mxu0 %v121
  %287 = vmatmul.mubr.bf16.gmra.mrb[0].mxu0 %v120
  %v288 = vpop.f32.mrb[0].mxu0
  %v289 = vadd.f32 %v68, %v288
  %v290 = vpop.f32.mrb[0].mxu0
  %v291 = vpop.f32.mrb[0].mxu0
  %v292 = vadd.f32 %v68, %v291
  %v293 = vpop.f32.mrb[0].mxu0
  %294 = vmatprep.mubr.bf16.mxu0 %v123
  %295 = vmatmul.mubr.bf16.gmra.mrb[0].mxu0 %v122
  %v296 = vpop.f32.mrb[0].mxu0
  %v297 = vadd.f32 %v68, %v296
  %v298 = vpop.f32.mrb[0].mxu0
  %v299 = vpop.f32.mrb[0].mxu0
  %v300 = vadd.f32 %v68, %v299
  %v301 = vpop.f32.mrb[0].mxu0
  %302 = vmatprep.mubr.bf16.mxu0 %v125
  %303 = vmatmul.mubr.bf16.gmra.mrb[0].mxu0 %v124
  %v304 = vpop.f32.mrb[0].mxu0
  %v305 = vadd.f32 %v68, %v304
  %v306 = vpop.f32.mrb[0].mxu0
  %v307 = vpop.f32.mrb[0].mxu0
  %v308 = vadd.f32 %v68, %v307
  %v309 = vpop.f32.mrb[0].mxu0
  %310 = vmatprep.mubr.bf16.mxu0 %v127
  %311 = vmatmul.mubr.bf16.gmra.mrb[0].mxu0 %v126
  %v312 = vpop.f32.mrb[0].mxu0
  %v313 = vadd.f32 %v68, %v312
  %v314 = vpop.f32.mrb[0].mxu0
  %v315 = vpop.f32.mrb[0].mxu0
  %v316 = vadd.f32 %v68, %v315
  %v317 = vpop.f32.mrb[0].mxu0
  %318 = vmatprep.mubr.bf16.mxu0 %v129
  %319 = vmatmul.mubr.bf16.gmra.mrb[0].mxu0 %v128
  %v320 = vpop.f32.mrb[0].mxu0
  %v321 = vadd.f32 %v68, %v320
  %v322 = vpop.f32.mrb[0].mxu0
  %v323 = vpop.f32.mrb[0].mxu0
  %v324 = vadd.f32 %v68, %v323
  %v325 = vpop.f32.mrb[0].mxu0
  %326 = vmatprep.mubr.bf16.mxu0 %v131
  %327 = vmatmul.mubr.bf16.gmra.mrb[0].mxu0 %v130
  %v328 = vpop.f32.mrb[0].mxu0
  %v329 = vadd.f32 %v68, %v328
  %v330 = vpop.f32.mrb[0].mxu0
  %v331 = vpop.f32.mrb[0].mxu0
  %v332 = vadd.f32 %v68, %v331
  %v333 = vpop.f32.mrb[0].mxu0
  %334 = vmatprep.mubr.bf16.mxu0 %v133
  %335 = vmatmul.mubr.bf16.gmra.mrb[0].mxu0 %v132
  %v336 = vpop.f32.mrb[0].mxu0
  %v337 = vadd.f32 %v68, %v336
  %v338 = vpop.f32.mrb[0].mxu0
  %v339 = vpop.f32.mrb[0].mxu0
  %v340 = vadd.f32 %v68, %v339
  %v341 = vpop.f32.mrb[0].mxu0
  %342 = vdwg.mxu0
  %v343 = vmax.f32 %v281, 0.0
  %v344 = vmax.f32 %v284, 0.0
  %v345 = vmax.f32 %v289, 0.0
  %v346 = vmax.f32 %v292, 0.0
  %v347 = vmax.f32 %v297, 0.0
  %v348 = vmax.f32 %v300, 0.0
  %v349 = vmax.f32 %v305, 0.0
  %v350 = vmax.f32 %v308, 0.0
  %v351 = vmax.f32 %v313, 0.0
  %v352 = vmax.f32 %v316, 0.0
  %v353 = vmax.f32 %v321, 0.0
  %v354 = vmax.f32 %v324, 0.0
  %v355 = vmax.f32 %v329, 0.0
  %v356 = vmax.f32 %v332, 0.0
  %v357 = vmax.f32 %v337, 0.0
  %v358 = vmax.f32 %v340, 0.0
  %359 = vst [vmem:[%s3] sm:$0xff] %v343
  %360 = vst [vmem:[%s3 + $0x8] sm:$0xff] %v344
  %361 = vst [vmem:[%s3 + $0x10] sm:$0xff] %v345
  %362 = vst [vmem:[%s3 + $0x18] sm:$0xff] %v346
  %363 = vst [vmem:[%s3 + $0x20] sm:$0xff] %v347
  %364 = vst [vmem:[%s3 + $0x28] sm:$0xff] %v348
  %365 = vst [vmem:[%s3 + $0x30] sm:$0xff] %v349
  %366 = vst [vmem:[%s3 + $0x38] sm:$0xff] %v350
  %367 = vst [vmem:[%s3 + $0x40] sm:$0xff] %v351
  %368 = vst [vmem:[%s3 + $0x48] sm:$0xff] %v352
  %369 = vst [vmem:[%s3 + $0x50] sm:$0xff] %v353
  %370 = vst [vmem:[%s3 + $0x58] sm:$0xff] %v354
  %371 = vst [vmem:[%s3 + $0x60] sm:$0xff] %v355
  %372 = vst [vmem:[%s3 + $0x68] sm:$0xff] %v356
  %373 = vst [vmem:[%s3 + $0x70] sm:$0xff] %v357
  %374 = vst [vmem:[%s3 + $0x78] sm:$0xff] %v358
  // Predicated region
  $region14: #{network_forward.8} parent=0 // pred_check
    _
  $region15: #{network_forward.8} parent=0 // pred_check_branch
    %376 = sbr.rel (0) target = $region17
  $region16: #{network_forward.8} parent=0 // pred_region
    _
  $region17: #{network_forward.8} parent=0 // pred_fallthru
    _
  // Predicated region
  $region18: #{network_forward.8} parent=0 // pred_check
    _
  $region19: #{network_forward.8} parent=0 // pred_check_branch
    %378 = sbr.rel (0) target = $region21
  $region20: #{network_forward.8} parent=0 // pred_region
    _
  $region21: #{network_forward.8} parent=0 // pred_fallthru
    _

// kernel: network_forward.9
$region0: #{network_forward.9}
  #allocation0 [shape = 'u32[]', space=smem, size = 0x4, offset = 0x4, fixed_abs, tag = 'smem constant byte address 0x4 - core index']
  #allocation1 [shape = 'u32[144,128]{1,0:T(1,128)}', space=vmem, size = 0x12000, scoped, tag = 'internal scratch']
  %s0 = inlined_call_operand.vmem [shape: bf16[32,384], index: 0, kind: input, shape index: {}]
  %s1 = inlined_call_operand.vmem [shape: bf16[384,128], index: 1, kind: input, shape index: {}]
  %s2 = inlined_call_operand.vmem [shape: f32[1,128], index: 2, kind: input, shape index: {}]
  %s3 = inlined_call_operand.vmem [shape: f32[32,128], index: 3, kind: output, shape index: {}]
  %s4 = sld [smem:[#allocation0]]
  $region22: #{network_forward.9} parent=0
    _
  %s6 = ssub.s32 1, %s4
  %s7 = scalar_select 0, %s6, %s4
  // Predicated region
  $region2: #{network_forward.9} parent=0 // pred_check
    _
  $region3: #{network_forward.9} parent=0 // pred_check_branch
    %9 = sbr.rel (0) target = $region5
  $region4: #{network_forward.9} parent=0 // pred_region
    _
  $region5: #{network_forward.9} parent=0 // pred_fallthru
    _
  // Predicated region
  $region6: #{network_forward.9} parent=0 // pred_check
    _
  $region7: #{network_forward.9} parent=0 // pred_check_branch
    %11 = sbr.rel (0) target = $region9
  $region8: #{network_forward.9} parent=0 // pred_region
    _
  $region9: #{network_forward.9} parent=0 // pred_fallthru
    _
  // Predicated region
  $region10: #{network_forward.9} parent=0 // pred_check
    _
  $region11: #{network_forward.9} parent=0 // pred_check_branch
    %13 = sbr.rel (0) target = $region13
  $region12: #{network_forward.9} parent=0 // pred_region
    _
  $region13: #{network_forward.9} parent=0 // pred_fallthru
    _
  %v15 = vld [vmem:[%s0] sm:$0xff]
  %v16 = vld [vmem:[%s0 + $0x8] sm:$0xf]
  %v17 = vld [vmem:[%s0 + $0xc] sm:$0xff]
  %v18 = vld [vmem:[%s0 + $0x14] sm:$0xf]
  %v19 = vld [vmem:[%s0 + $0x18] sm:$0xff]
  %v20 = vld [vmem:[%s0 + $0x20] sm:$0xf]
  %v21 = vld [vmem:[%s0 + $0x24] sm:$0xff]
  %v22 = vld [vmem:[%s0 + $0x2c] sm:$0xf]
  %v23 = vld [vmem:[%s1] sm:$0xf]
  %v24 = vld [vmem:[%s1 + $0x4] sm:$0xf]
  %v25 = vld [vmem:[%s1 + $0x8] sm:$0xf]
  %v26 = vld [vmem:[%s1 + $0xc] sm:$0xf]
  %v27 = vld [vmem:[%s1 + $0x10] sm:$0xf]
  %v28 = vld [vmem:[%s1 + $0x14] sm:$0xf]
  %v29 = vld [vmem:[%s1 + $0x18] sm:$0xf]
  %v30 = vld [vmem:[%s1 + $0x1c] sm:$0xf]
  %v31 = vld [vmem:[%s1 + $0x20] sm:$0xf]
  %v32 = vld [vmem:[%s1 + $0x24] sm:$0xf]
  %v33 = vld [vmem:[%s1 + $0x28] sm:$0xf]
  %v34 = vld [vmem:[%s1 + $0x2c] sm:$0xf]
  %v35 = vld [vmem:[%s1 + $0x30] sm:$0xf]
  %v36 = vld [vmem:[%s1 + $0x34] sm:$0xf]
  %v37 = vld [vmem:[%s1 + $0x38] sm:$0xf]
  %v38 = vld [vmem:[%s1 + $0x3c] sm:$0xf]
  %v39 = vld [vmem:[%s1 + $0x40] sm:$0xf]
  %v40 = vld [vmem:[%s1 + $0x44] sm:$0xf]
  %v41 = vld [vmem:[%s1 + $0x48] sm:$0xf]
  %v42 = vld [vmem:[%s1 + $0x4c] sm:$0xf]
  %v43 = vld [vmem:[%s1 + $0x50] sm:$0xf]
  %v44 = vld [vmem:[%s1 + $0x54] sm:$0xf]
  %v45 = vld [vmem:[%s1 + $0x58] sm:$0xf]
  %v46 = vld [vmem:[%s1 + $0x5c] sm:$0xf]
  %v47 = vld [vmem:[%s1 + $0x60] sm:$0xf]
  %v48 = vld [vmem:[%s1 + $0x64] sm:$0xf]
  %v49 = vld [vmem:[%s1 + $0x68] sm:$0xf]
  %v50 = vld [vmem:[%s1 + $0x6c] sm:$0xf]
  %v51 = vld [vmem:[%s1 + $0x70] sm:$0xf]
  %v52 = vld [vmem:[%s1 + $0x74] sm:$0xf]
  %v53 = vld [vmem:[%s1 + $0x78] sm:$0xf]
  %v54 = vld [vmem:[%s1 + $0x7c] sm:$0xf]
  %v55 = vld [vmem:[%s1 + $0x80] sm:$0xf]
  %v56 = vld [vmem:[%s1 + $0x84] sm:$0xf]
  %v57 = vld [vmem:[%s1 + $0x88] sm:$0xf]
  %v58 = vld [vmem:[%s1 + $0x8c] sm:$0xf]
  %v59 = vld [vmem:[%s1 + $0x90] sm:$0xf]
  %v60 = vld [vmem:[%s1 + $0x94] sm:$0xf]
  %v61 = vld [vmem:[%s1 + $0x98] sm:$0xf]
  %v62 = vld [vmem:[%s1 + $0x9c] sm:$0xf]
  %v63 = vld [vmem:[%s1 + $0xa0] sm:$0xf]
  %v64 = vld [vmem:[%s1 + $0xa4] sm:$0xf]
  %v65 = vld [vmem:[%s1 + $0xa8] sm:$0xf]
  %v66 = vld [vmem:[%s1 + $0xac] sm:$0xf]
  %v67 = vld [vmem:[%s1 + $0xb0] sm:$0xf]
  %v68 = vld [vmem:[%s1 + $0xb4] sm:$0xf]
  %v69 = vld [vmem:[%s1 + $0xb8] sm:$0xf]
  %v70 = vld [vmem:[%s1 + $0xbc] sm:$0xf]
  %v71 = vld [vmem:[%s2] sm:$0x1]
  %v73 = vlaneseq
  %v74 = vshrl.u32 %v73, 7
  %v75 = vsub.s32 0, %v74
  %v76 = vrot.slane %v71, %v75
  %v86 = vunpack.c.l.b16 %v15
  %v87 = vunpack.c.h.b16 %v15
  %v88 = vunpack.c.l.b16 %v16
  %v89 = vunpack.c.l.b16 %v17
  %v90 = vunpack.c.h.b16 %v17
  %v91 = vunpack.c.l.b16 %v18
  %v92 = vunpack.c.l.b16 %v19
  %v93 = vunpack.c.h.b16 %v19
  %v94 = vunpack.c.l.b16 %v20
  %v95 = vunpack.c.l.b16 %v21
  %v96 = vunpack.c.h.b16 %v21
  %v97 = vunpack.c.l.b16 %v22
  %v98 = vpack.c.b16 %v89, %v86
  %v99 = vpack.c.b16 %v90, %v87
  %v100 = vpack.c.b16 %v91, %v88
  %v101 = vpack.c.b16 %v95, %v92
  %v102 = vpack.c.b16 %v96, %v93
  %v103 = vpack.c.b16 %v97, %v94
  %v158 = vunpack.c.l.b16 %v23
  %v159 = vunpack.c.l.b16 %v24
  %v160 = vunpack.c.l.b16 %v25
  %v161 = vunpack.c.l.b16 %v26
  %v162 = vunpack.c.l.b16 %v27
  %v163 = vunpack.c.l.b16 %v28
  %v164 = vunpack.c.l.b16 %v29
  %v165 = vunpack.c.l.b16 %v30
  %v166 = vunpack.c.l.b16 %v31
  %v167 = vunpack.c.l.b16 %v32
  %v168 = vunpack.c.l.b16 %v33
  %v169 = vunpack.c.l.b16 %v34
  %v170 = vunpack.c.l.b16 %v35
  %v171 = vunpack.c.l.b16 %v36
  %v172 = vunpack.c.l.b16 %v37
  %v173 = vunpack.c.l.b16 %v38
  %v174 = vunpack.c.l.b16 %v39
  %v175 = vunpack.c.l.b16 %v40
  %v176 = vunpack.c.l.b16 %v41
  %v177 = vunpack.c.l.b16 %v42
  %v178 = vunpack.c.l.b16 %v43
  %v179 = vunpack.c.l.b16 %v44
  %v180 = vunpack.c.l.b16 %v45
  %v181 = vunpack.c.l.b16 %v46
  %v182 = vunpack.c.l.b16 %v47
  %v183 = vunpack.c.l.b16 %v48
  %v184 = vunpack.c.l.b16 %v49
  %v185 = vunpack.c.l.b16 %v50
  %v186 = vunpack.c.l.b16 %v51
  %v187 = vunpack.c.l.b16 %v52
  %v188 = vunpack.c.l.b16 %v53
  %v189 = vunpack.c.l.b16 %v54
  %v190 = vunpack.c.l.b16 %v55
  %v191 = vunpack.c.l.b16 %v56
  %v192 = vunpack.c.l.b16 %v57
  %v193 = vunpack.c.l.b16 %v58
  %v194 = vunpack.c.l.b16 %v59
  %v195 = vunpack.c.l.b16 %v60
  %v196 = vunpack.c.l.b16 %v61
  %v197 = vunpack.c.l.b16 %v62
  %v198 = vunpack.c.l.b16 %v63
  %v199 = vunpack.c.l.b16 %v64
  %v200 = vunpack.c.l.b16 %v65
  %v201 = vunpack.c.l.b16 %v66
  %v202 = vunpack.c.l.b16 %v67
  %v203 = vunpack.c.l.b16 %v68
  %v204 = vunpack.c.l.b16 %v69
  %v205 = vunpack.c.l.b16 %v70
  %v206 = vpack.c.b16 %v159, %v158
  %v207 = vpack.c.b16 %v161, %v160
  %v208 = vpack.c.b16 %v163, %v162
  %v209 = vpack.c.b16 %v165, %v164
  %v210 = vpack.c.b16 %v167, %v166
  %v211 = vpack.c.b16 %v169, %v168
  %v212 = vpack.c.b16 %v171, %v170
  %v213 = vpack.c.b16 %v173, %v172
  %v214 = vpack.c.b16 %v175, %v174
  %v215 = vpack.c.b16 %v177, %v176
  %v216 = vpack.c.b16 %v179, %v178
  %v217 = vpack.c.b16 %v181, %v180
  %v218 = vpack.c.b16 %v183, %v182
  %v219 = vpack.c.b16 %v185, %v184
  %v220 = vpack.c.b16 %v187, %v186
  %v221 = vpack.c.b16 %v189, %v188
  %v222 = vpack.c.b16 %v191, %v190
  %v223 = vpack.c.b16 %v193, %v192
  %v224 = vpack.c.b16 %v195, %v194
  %v225 = vpack.c.b16 %v197, %v196
  %v226 = vpack.c.b16 %v199, %v198
  %v227 = vpack.c.b16 %v201, %v200
  %v228 = vpack.c.b16 %v203, %v202
  %v229 = vpack.c.b16 %v205, %v204
  %254 = vmatprep.subr.bf16.mxu0 0
  %255 = vmatpush1.bf16.msra.mxu0 %v206
  %256 = vmatprep.subr.bf16.mxu0 0
  %257 = vmatpush1.bf16.msra.mxu0 %v207
  %258 = vmatprep.subr.bf16.mxu0 0
  %259 = vmatpush1.bf16.msra.mxu0 %v208
  %260 = vmatprep.subr.bf16.mxu0 0
  %261 = vmatpush1.bf16.msra.mxu0 %v209
  %262 = vmatprep.subr.bf16.mxu0 0
  %263 = vmatpush1.bf16.msra.mxu0 %v210
  %264 = vmatprep.subr.bf16.mxu0 0
  %265 = vmatpush1.bf16.msra.mxu0 %v211
  %266 = vmatprep.subr.bf16.mxu0 0
  %267 = vmatpush1.bf16.msra.mxu0 %v212
  %268 = vmatprep.subr.bf16.mxu0 0
  %269 = vmatpush1.bf16.msra.mxu0 %v213
  %270 = vmatprep.subr.bf16.mxu0 0
  %271 = vmatpush1.bf16.msra.mxu0 %v214
  %272 = vmatprep.subr.bf16.mxu0 0
  %273 = vmatpush1.bf16.msra.mxu0 %v215
  %274 = vmatprep.subr.bf16.mxu0 0
  %275 = vmatpush1.bf16.msra.mxu0 %v216
  %276 = vmatprep.subr.bf16.mxu0 0
  %277 = vmatpush1.bf16.msra.mxu0 %v217
  %278 = vmatprep.subr.bf16.mxu0 0
  %279 = vmatpush1.bf16.msra.mxu0 %v218
  %280 = vmatprep.subr.bf16.mxu0 0
  %281 = vmatpush1.bf16.msra.mxu0 %v219
  %282 = vmatprep.subr.bf16.mxu0 0
  %283 = vmatpush1.bf16.msra.mxu0 %v220
  %284 = vmatprep.subr.bf16.mxu0 0
  %285 = vmatpush1.bf16.msra.mxu0 %v221
  %286 = vmatprep.mubr.bf16.mxu0 %v99
  %287 = vmatmul.mubr.bf16.gmra.mrb[0].mxu0 %v98
  %v288 = vpop.f32.mrb[0].mxu0
  %v289 = vadd.f32 %v76, %v288
  %v290 = vpop.f32.mrb[0].mxu0
  %v291 = vpop.f32.mrb[0].mxu0
  %v292 = vadd.f32 %v76, %v291
  %v293 = vpop.f32.mrb[0].mxu0
  %294 = vmatprep.mubr.bf16.mxu0 %v102
  %295 = vmatmul.mubr.bf16.gmra.mrb[0].mxu0 %v101
  %v296 = vpop.f32.mrb[0].mxu0
  %v297 = vadd.f32 %v76, %v296
  %v298 = vpop.f32.mrb[0].mxu0
  %v299 = vpop.f32.mrb[0].mxu0
  %v300 = vadd.f32 %v76, %v299
  %v301 = vpop.f32.mrb[0].mxu0
  %302 = vdwg.mxu0
  %303 = vmatprep.subr.bf16.mxu0 0
  %304 = vmatpush1.bf16.msra.mxu0 %v222
  %305 = vmatprep.subr.bf16.mxu0 0
  %306 = vmatpush1.bf16.msra.mxu0 %v223
  %307 = vmatprep.subr.bf16.mxu0 0
  %308 = vmatpush1.bf16.msra.mxu0 %v224
  %309 = vmatprep.subr.bf16.mxu0 0
  %310 = vmatpush1.bf16.msra.mxu0 %v225
  %311 = vmatprep.subr.bf16.mxu0 0
  %312 = vmatpush1.bf16.msra.mxu0 %v226
  %313 = vmatprep.subr.bf16.mxu0 0
  %314 = vmatpush1.bf16.msra.mxu0 %v227
  %315 = vmatprep.subr.bf16.mxu0 0
  %316 = vmatpush1.bf16.msra.mxu0 %v228
  %317 = vmatprep.subr.bf16.mxu0 0
  %318 = vmatpush1.bf16.msra.mxu0 %v229
  %319 = vmatprep.subr.bf16.mxu0 0
  %320 = vmatpush1.bf16.msra.mxu0 0
  %321 = vmatprep.subr.bf16.mxu0 0
  %322 = vmatpush1.bf16.msra.mxu0 0
  %323 = vmatprep.subr.bf16.mxu0 0
  %324 = vmatpush1.bf16.msra.mxu0 0
  %325 = vmatprep.subr.bf16.mxu0 0
  %326 = vmatpush1.bf16.msra.mxu0 0
  %327 = vmatprep.subr.bf16.mxu0 0
  %328 = vmatpush1.bf16.msra.mxu0 0
  %329 = vmatprep.subr.bf16.mxu0 0
  %330 = vmatpush1.bf16.msra.mxu0 0
  %331 = vmatprep.subr.bf16.mxu0 0
  %332 = vmatpush1.bf16.msra.mxu0 0
  %333 = vmatprep.subr.bf16.mxu0 0
  %334 = vmatpush1.bf16.msra.mxu0 0
  %335 = vmatprep.mubr.bf16.mxu0 0
  %336 = vmatmul.mubr.bf16.gmra.mrb[0].mxu0 %v100
  %v337 = vpop.f32.mrb[0].mxu0
  %v338 = vadd.f32 %v289, %v337
  %v339 = vpop.f32.mrb[0].mxu0
  %v340 = vpop.f32.mrb[0].mxu0
  %v341 = vadd.f32 %v292, %v340
  %v342 = vpop.f32.mrb[0].mxu0
  %343 = vmatprep.mubr.bf16.mxu0 0
  %344 = vmatmul.mubr.bf16.gmra.mrb[0].mxu0 %v103
  %v345 = vpop.f32.mrb[0].mxu0
  %v346 = vadd.f32 %v297, %v345
  %v347 = vpop.f32.mrb[0].mxu0
  %v348 = vpop.f32.mrb[0].mxu0
  %v349 = vadd.f32 %v300, %v348
  %v350 = vpop.f32.mrb[0].mxu0
  %351 = vdwg.mxu0
  %v352 = vmax.f32 %v338, 0.0
  %v353 = vmax.f32 %v341, 0.0
  %v354 = vmax.f32 %v346, 0.0
  %v355 = vmax.f32 %v349, 0.0
  %356 = vst [vmem:[%s3] sm:$0xff] %v352
  %357 = vst [vmem:[%s3 + $0x8] sm:$0xff] %v353
  %358 = vst [vmem:[%s3 + $0x10] sm:$0xff] %v354
  %359 = vst [vmem:[%s3 + $0x18] sm:$0xff] %v355
  // Predicated region
  $region14: #{network_forward.9} parent=0 // pred_check
    _
  $region15: #{network_forward.9} parent=0 // pred_check_branch
    %361 = sbr.rel (0) target = $region17
  $region16: #{network_forward.9} parent=0 // pred_region
    _
  $region17: #{network_forward.9} parent=0 // pred_fallthru
    _
  // Predicated region
  $region18: #{network_forward.9} parent=0 // pred_check
    _
  $region19: #{network_forward.9} parent=0 // pred_check_branch
    %363 = sbr.rel (0) target = $region21
  $region20: #{network_forward.9} parent=0 // pred_region
    _
  $region21: #{network_forward.9} parent=0 // pred_fallthru
    _

// kernel: network_forward.11
$region0: #{network_forward.11}
  #allocation0 [shape = 'u32[]', space=smem, size = 0x4, offset = 0x4, fixed_abs, tag = 'smem constant byte address 0x4 - core index']
  #allocation1 [shape = 'u32[144,128]{1,0:T(1,128)}', space=vmem, size = 0x12000, scoped, tag = 'internal scratch']
  %s0 = inlined_call_operand.vmem [shape: bf16[32,128], index: 0, kind: input, shape index: {}]
  %s1 = inlined_call_operand.vmem [shape: bf16[128,128], index: 1, kind: input, shape index: {}]
  %s2 = inlined_call_operand.vmem [shape: f32[1,128], index: 2, kind: input, shape index: {}]
  %s3 = inlined_call_operand.vmem [shape: f32[32,128], index: 3, kind: output, shape index: {0}]
  %s4 = inlined_call_operand.vmem [shape: f32[32,128], index: 4, kind: output, shape index: {1}]
  %5 = xla_tuple %s3, %s4
  %s6 = sld [smem:[#allocation0]]
  $region30: #{network_forward.11} parent=0
    _
  %s8 = ssub.s32 1, %s6
  %s9 = scalar_select 0, %s8, %s6
  // Predicated region
  $region2: #{network_forward.11} parent=0 // pred_check
    _
  $region3: #{network_forward.11} parent=0 // pred_check_branch
    %11 = sbr.rel (0) target = $region5
  $region4: #{network_forward.11} parent=0 // pred_region
    _
  $region5: #{network_forward.11} parent=0 // pred_fallthru
    _
  // Predicated region
  $region6: #{network_forward.11} parent=0 // pred_check
    _
  $region7: #{network_forward.11} parent=0 // pred_check_branch
    %13 = sbr.rel (0) target = $region9
  $region8: #{network_forward.11} parent=0 // pred_region
    _
  $region9: #{network_forward.11} parent=0 // pred_fallthru
    _
  // Predicated region
  $region10: #{network_forward.11} parent=0 // pred_check
    _
  $region11: #{network_forward.11} parent=0 // pred_check_branch
    %15 = sbr.rel (0) target = $region13
  $region12: #{network_forward.11} parent=0 // pred_region
    _
  $region13: #{network_forward.11} parent=0 // pred_fallthru
    _
  %v17 = vld [vmem:[%s0] sm:$0xf]
  %v18 = vld [vmem:[%s0 + $0x4] sm:$0xf]
  %v19 = vld [vmem:[%s0 + $0x8] sm:$0xf]
  %v20 = vld [vmem:[%s0 + $0xc] sm:$0xf]
  %v21 = vld [vmem:[%s1] sm:$0xf]
  %v22 = vld [vmem:[%s1 + $0x4] sm:$0xf]
  %v23 = vld [vmem:[%s1 + $0x8] sm:$0xf]
  %v24 = vld [vmem:[%s1 + $0xc] sm:$0xf]
  %v25 = vld [vmem:[%s1 + $0x10] sm:$0xf]
  %v26 = vld [vmem:[%s1 + $0x14] sm:$0xf]
  %v27 = vld [vmem:[%s1 + $0x18] sm:$0xf]
  %v28 = vld [vmem:[%s1 + $0x1c] sm:$0xf]
  %v29 = vld [vmem:[%s1 + $0x20] sm:$0xf]
  %v30 = vld [vmem:[%s1 + $0x24] sm:$0xf]
  %v31 = vld [vmem:[%s1 + $0x28] sm:$0xf]
  %v32 = vld [vmem:[%s1 + $0x2c] sm:$0xf]
  %v33 = vld [vmem:[%s1 + $0x30] sm:$0xf]
  %v34 = vld [vmem:[%s1 + $0x34] sm:$0xf]
  %v35 = vld [vmem:[%s1 + $0x38] sm:$0xf]
  %v36 = vld [vmem:[%s1 + $0x3c] sm:$0xf]
  %v37 = vld [vmem:[%s2] sm:$0x1]
  %v39 = vlaneseq
  %v40 = vshrl.u32 %v39, 7
  %v41 = vsub.s32 0, %v40
  %v42 = vrot.slane %v37, %v41
  %v48 = vunpack.c.l.b16 %v17
  %v49 = vunpack.c.l.b16 %v18
  %v50 = vunpack.c.l.b16 %v19
  %v51 = vunpack.c.l.b16 %v20
  %v52 = vpack.c.b16 %v49, %v48
  %v53 = vpack.c.b16 %v51, %v50
  %v72 = vunpack.c.l.b16 %v21
  %v73 = vunpack.c.l.b16 %v22
  %v74 = vunpack.c.l.b16 %v23
  %v75 = vunpack.c.l.b16 %v24
  %v76 = vunpack.c.l.b16 %v25
  %v77 = vunpack.c.l.b16 %v26
  %v78 = vunpack.c.l.b16 %v27
  %v79 = vunpack.c.l.b16 %v28
  %v80 = vunpack.c.l.b16 %v29
  %v81 = vunpack.c.l.b16 %v30
  %v82 = vunpack.c.l.b16 %v31
  %v83 = vunpack.c.l.b16 %v32
  %v84 = vunpack.c.l.b16 %v33
  %v85 = vunpack.c.l.b16 %v34
  %v86 = vunpack.c.l.b16 %v35
  %v87 = vunpack.c.l.b16 %v36
  %v88 = vpack.c.b16 %v73, %v72
  %v89 = vpack.c.b16 %v75, %v74
  %v90 = vpack.c.b16 %v77, %v76
  %v91 = vpack.c.b16 %v79, %v78
  %v92 = vpack.c.b16 %v81, %v80
  %v93 = vpack.c.b16 %v83, %v82
  %v94 = vpack.c.b16 %v85, %v84
  %v95 = vpack.c.b16 %v87, %v86
  %104 = vmatprep.subr.bf16.mxu0 0
  %105 = vmatpush1.bf16.msra.mxu0 %v88
  %106 = vmatprep.subr.bf16.mxu0 0
  %107 = vmatpush1.bf16.msra.mxu0 %v89
  %108 = vmatprep.subr.bf16.mxu0 0
  %109 = vmatpush1.bf16.msra.mxu0 %v90
  %110 = vmatprep.subr.bf16.mxu0 0
  %111 = vmatpush1.bf16.msra.mxu0 %v91
  %112 = vmatprep.subr.bf16.mxu0 0
  %113 = vmatpush1.bf16.msra.mxu0 %v92
  %114 = vmatprep.subr.bf16.mxu0 0
  %115 = vmatpush1.bf16.msra.mxu0 %v93
  %116 = vmatprep.subr.bf16.mxu0 0
  %117 = vmatpush1.bf16.msra.mxu0 %v94
  %118 = vmatprep.subr.bf16.mxu0 0
  %119 = vmatpush1.bf16.msra.mxu0 %v95
  %120 = vmatprep.subr.bf16.mxu0 0
  %121 = vmatpush1.bf16.msra.mxu0 0
  %122 = vmatprep.subr.bf16.mxu0 0
  %123 = vmatpush1.bf16.msra.mxu0 0
  %124 = vmatprep.subr.bf16.mxu0 0
  %125 = vmatpush1.bf16.msra.mxu0 0
  %126 = vmatprep.subr.bf16.mxu0 0
  %127 = vmatpush1.bf16.msra.mxu0 0
  %128 = vmatprep.subr.bf16.mxu0 0
  %129 = vmatpush1.bf16.msra.mxu0 0
  %130 = vmatprep.subr.bf16.mxu0 0
  %131 = vmatpush1.bf16.msra.mxu0 0
  %132 = vmatprep.subr.bf16.mxu0 0
  %133 = vmatpush1.bf16.msra.mxu0 0
  %134 = vmatprep.subr.bf16.mxu0 0
  %135 = vmatpush1.bf16.msra.mxu0 0
  %136 = vmatprep.mubr.bf16.mxu0 0
  %137 = vmatmul.mubr.bf16.gmra.mrb[0].mxu0 %v52
  %v138 = vpop.f32.mrb[0].mxu0
  %v139 = vadd.f32 %v42, %v138
  %v140 = vpop.f32.mrb[0].mxu0
  %v141 = vpop.f32.mrb[0].mxu0
  %v142 = vadd.f32 %v42, %v141
  %v143 = vpop.f32.mrb[0].mxu0
  %144 = vmatprep.mubr.bf16.mxu0 0
  %145 = vmatmul.mubr.bf16.gmra.mrb[0].mxu0 %v53
  %v146 = vpop.f32.mrb[0].mxu0
  %v147 = vadd.f32 %v42, %v146
  %v148 = vpop.f32.mrb[0].mxu0
  %v149 = vpop.f32.mrb[0].mxu0
  %v150 = vadd.f32 %v42, %v149
  %v151 = vpop.f32.mrb[0].mxu0
  %152 = vdwg.mxu0
  %153 = vst [vmem:[%s3] sm:$0xff] %v139
  %154 = vst [vmem:[%s3 + $0x8] sm:$0xff] %v142
  %155 = vst [vmem:[%s3 + $0x10] sm:$0xff] %v147
  %156 = vst [vmem:[%s3 + $0x18] sm:$0xff] %v150
  %v157 = vxor.u32 %v139, 2147483648
  %v158 = vxor.u32 %v142, 2147483648
  %v159 = vxor.u32 %v147, 2147483648
  %v160 = vxor.u32 %v150, 2147483648
  %v161 = vmul.f32 %v157, 1.442695
  %v162 = vpow.pop %v161
  %v163 = vmul.f32 %v158, 1.442695
  %v164 = vpow.pop %v163
  %v165 = vmul.f32 %v159, 1.442695
  %v166 = vpow.pop %v165
  %v167 = vmul.f32 %v160, 1.442695
  %v168 = vpow.pop %v167
  %v169 = vadd.f32 %v162, 1.0
  %v170 = vadd.f32 %v164, 1.0
  %v171 = vadd.f32 %v166, 1.0
  %v172 = vadd.f32 %v168, 1.0
  %v173 = vrcp.pop %v169
  %v174 = vmul.f32 1.0, %v173
  %v175 = vrcp.pop %v170
  %v176 = vmul.f32 1.0, %v175
  %v177 = vrcp.pop %v171
  %v178 = vmul.f32 1.0, %v177
  %v179 = vrcp.pop %v172
  %v180 = vmul.f32 1.0, %v179
  %181 = vst [vmem:[%s4] sm:$0xff] %v174
  %182 = vst [vmem:[%s4 + $0x8] sm:$0xff] %v176
  %183 = vst [vmem:[%s4 + $0x10] sm:$0xff] %v178
  %184 = vst [vmem:[%s4 + $0x18] sm:$0xff] %v180
  // Predicated region
  $region14: #{network_forward.11} parent=0 // pred_check
    _
  $region15: #{network_forward.11} parent=0 // pred_check_branch
    %186 = sbr.rel (0) target = $region17
  $region16: #{network_forward.11} parent=0 // pred_region
    _
  $region17: #{network_forward.11} parent=0 // pred_fallthru
    _
  // Predicated region
  $region18: #{network_forward.11} parent=0 // pred_check
    _
  $region19: #{network_forward.11} parent=0 // pred_check_branch
    %188 = sbr.rel (0) target = $region21
  $region20: #{network_forward.11} parent=0 // pred_region
    _
  $region21: #{network_forward.11} parent=0 // pred_fallthru
    _
  // Predicated region
  $region22: #{network_forward.11} parent=0 // pred_check
    _
  $region23: #{network_forward.11} parent=0 // pred_check_branch
    %190 = sbr.rel (0) target = $region25
  $region24: #{network_forward.11} parent=0 // pred_region
    _
  $region25: #{network_forward.11} parent=0 // pred_fallthru
    _
  // Predicated region
  $region26: #{network_forward.11} parent=0 // pred_check
    _
  $region27: #{network_forward.11} parent=0 // pred_check_branch
    %192 = sbr.rel (0) target = $region29
  $region28: #{network_forward.11} parent=0 // pred_region
    _
  $region29: #{network_forward.11} parent=0 // pred_fallthru
    _

// kernel: network_forward.10
$region0: #{network_forward.10}
  #allocation0 [shape = 'u32[]', space=smem, size = 0x4, offset = 0x4, fixed_abs, tag = 'smem constant byte address 0x4 - core index']
  #allocation1 [shape = 'u32[144,128]{1,0:T(1,128)}', space=vmem, size = 0x12000, scoped, tag = 'internal scratch']
  %s0 = inlined_call_operand.vmem [shape: bf16[32,640], index: 0, kind: input, shape index: {}]
  %s1 = inlined_call_operand.vmem [shape: bf16[640,128], index: 1, kind: input, shape index: {}]
  %s2 = inlined_call_operand.vmem [shape: f32[1,128], index: 2, kind: input, shape index: {}]
  %s3 = inlined_call_operand.vmem [shape: f32[32,128], index: 3, kind: output, shape index: {}]
  %s4 = sld [smem:[#allocation0]]
  $region22: #{network_forward.10} parent=0
    _
  %s6 = ssub.s32 1, %s4
  %s7 = scalar_select 0, %s6, %s4
  // Predicated region
  $region2: #{network_forward.10} parent=0 // pred_check
    _
  $region3: #{network_forward.10} parent=0 // pred_check_branch
    %9 = sbr.rel (0) target = $region5
  $region4: #{network_forward.10} parent=0 // pred_region
    _
  $region5: #{network_forward.10} parent=0 // pred_fallthru
    _
  // Predicated region
  $region6: #{network_forward.10} parent=0 // pred_check
    _
  $region7: #{network_forward.10} parent=0 // pred_check_branch
    %11 = sbr.rel (0) target = $region9
  $region8: #{network_forward.10} parent=0 // pred_region
    _
  $region9: #{network_forward.10} parent=0 // pred_fallthru
    _
  // Predicated region
  $region10: #{network_forward.10} parent=0 // pred_check
    _
  $region11: #{network_forward.10} parent=0 // pred_check_branch
    %13 = sbr.rel (0) target = $region13
  $region12: #{network_forward.10} parent=0 // pred_region
    _
  $region13: #{network_forward.10} parent=0 // pred_fallthru
    _
  %v15 = vld [vmem:[%s0] sm:$0xff]
  %v16 = vld [vmem:[%s0 + $0x8] sm:$0xff]
  %v17 = vld [vmem:[%s0 + $0x10] sm:$0xf]
  %v18 = vld [vmem:[%s0 + $0x14] sm:$0xff]
  %v19 = vld [vmem:[%s0 + $0x1c] sm:$0xff]
  %v20 = vld [vmem:[%s0 + $0x24] sm:$0xf]
  %v21 = vld [vmem:[%s0 + $0x28] sm:$0xff]
  %v22 = vld [vmem:[%s0 + $0x30] sm:$0xff]
  %v23 = vld [vmem:[%s0 + $0x38] sm:$0xf]
  %v24 = vld [vmem:[%s0 + $0x3c] sm:$0xff]
  %v25 = vld [vmem:[%s0 + $0x44] sm:$0xff]
  %v26 = vld [vmem:[%s0 + $0x4c] sm:$0xf]
  %v27 = vld [vmem:[%s1] sm:$0xf]
  %v28 = vld [vmem:[%s1 + $0x4] sm:$0xf]
  %v29 = vld [vmem:[%s1 + $0x8] sm:$0xf]
  %v30 = vld [vmem:[%s1 + $0xc] sm:$0xf]
  %v31 = vld [vmem:[%s1 + $0x10] sm:$0xf]
  %v32 = vld [vmem:[%s1 + $0x14] sm:$0xf]
  %v33 = vld [vmem:[%s1 + $0x18] sm:$0xf]
  %v34 = vld [vmem:[%s1 + $0x1c] sm:$0xf]
  %v35 = vld [vmem:[%s1 + $0x20] sm:$0xf]
  %v36 = vld [vmem:[%s1 + $0x24] sm:$0xf]
  %v37 = vld [vmem:[%s1 + $0x28] sm:$0xf]
  %v38 = vld [vmem:[%s1 + $0x2c] sm:$0xf]
  %v39 = vld [vmem:[%s1 + $0x30] sm:$0xf]
  %v40 = vld [vmem:[%s1 + $0x34] sm:$0xf]
  %v41 = vld [vmem:[%s1 + $0x38] sm:$0xf]
  %v42 = vld [vmem:[%s1 + $0x3c] sm:$0xf]
  %v43 = vld [vmem:[%s1 + $0x40] sm:$0xf]
  %v44 = vld [vmem:[%s1 + $0x44] sm:$0xf]
  %v45 = vld [vmem:[%s1 + $0x48] sm:$0xf]
  %v46 = vld [vmem:[%s1 + $0x4c] sm:$0xf]
  %v47 = vld [vmem:[%s1 + $0x50] sm:$0xf]
  %v48 = vld [vmem:[%s1 + $0x54] sm:$0xf]
  %v49 = vld [vmem:[%s1 + $0x58] sm:$0xf]
  %v50 = vld [vmem:[%s1 + $0x5c] sm:$0xf]
  %v51 = vld [vmem:[%s1 + $0x60] sm:$0xf]
  %v52 = vld [vmem:[%s1 + $0x64] sm:$0xf]
  %v53 = vld [vmem:[%s1 + $0x68] sm:$0xf]
  %v54 = vld [vmem:[%s1 + $0x6c] sm:$0xf]
  %v55 = vld [vmem:[%s1 + $0x70] sm:$0xf]
  %v56 = vld [vmem:[%s1 + $0x74] sm:$0xf]
  %v57 = vld [vmem:[%s1 + $0x78] sm:$0xf]
  %v58 = vld [vmem:[%s1 + $0x7c] sm:$0xf]
  %v59 = vld [vmem:[%s1 + $0x80] sm:$0xf]
  %v60 = vld [vmem:[%s1 + $0x84] sm:$0xf]
  %v61 = vld [vmem:[%s1 + $0x88] sm:$0xf]
  %v62 = vld [vmem:[%s1 + $0x8c] sm:$0xf]
  %v63 = vld [vmem:[%s1 + $0x90] sm:$0xf]
  %v64 = vld [vmem:[%s1 + $0x94] sm:$0xf]
  %v65 = vld [vmem:[%s1 + $0x98] sm:$0xf]
  %v66 = vld [vmem:[%s1 + $0x9c] sm:$0xf]
  %v67 = vld [vmem:[%s1 + $0xa0] sm:$0xf]
  %v68 = vld [vmem:[%s1 + $0xa4] sm:$0xf]
  %v69 = vld [vmem:[%s1 + $0xa8] sm:$0xf]
  %v70 = vld [vmem:[%s1 + $0xac] sm:$0xf]
  %v71 = vld [vmem:[%s1 + $0xb0] sm:$0xf]
  %v72 = vld [vmem:[%s1 + $0xb4] sm:$0xf]
  %v73 = vld [vmem:[%s1 + $0xb8] sm:$0xf]
  %v74 = vld [vmem:[%s1 + $0xbc] sm:$0xf]
  %v75 = vld [vmem:[%s1 + $0xc0] sm:$0xf]
  %v76 = vld [vmem:[%s1 + $0xc4] sm:$0xf]
  %v77 = vld [vmem:[%s1 + $0xc8] sm:$0xf]
  %v78 = vld [vmem:[%s1 + $0xcc] sm:$0xf]
  %v79 = vld [vmem:[%s1 + $0xd0] sm:$0xf]
  %v80 = vld [vmem:[%s1 + $0xd4] sm:$0xf]
  %v81 = vld [vmem:[%s1 + $0xd8] sm:$0xf]
  %v82 = vld [vmem:[%s1 + $0xdc] sm:$0xf]
  %v83 = vld [vmem:[%s1 + $0xe0] sm:$0xf]
  %v84 = vld [vmem:[%s1 + $0xe4] sm:$0xf]
  %v85 = vld [vmem:[%s1 + $0xe8] sm:$0xf]
  %v86 = vld [vmem:[%s1 + $0xec] sm:$0xf]
  %v87 = vld [vmem:[%s1 + $0xf0] sm:$0xf]
  %v88 = vld [vmem:[%s1 + $0xf4] sm:$0xf]
  %v89 = vld [vmem:[%s1 + $0xf8] sm:$0xf]
  %v90 = vld [vmem:[%s1 + $0xfc] sm:$0xf]
  %v91 = vld [vmem:[%s1 + $0x100] sm:$0xf]
  %v92 = vld [vmem:[%s1 + $0x104] sm:$0xf]
  %v93 = vld [vmem:[%s1 + $0x108] sm:$0xf]
  %v94 = vld [vmem:[%s1 + $0x10c] sm:$0xf]
  %v95 = vld [vmem:[%s1 + $0x110] sm:$0xf]
  %v96 = vld [vmem:[%s1 + $0x114] sm:$0xf]
  %v97 = vld [vmem:[%s1 + $0x118] sm:$0xf]
  %v98 = vld [vmem:[%s1 + $0x11c] sm:$0xf]
  %v99 = vld [vmem:[%s1 + $0x120] sm:$0xf]
  %v100 = vld [vmem:[%s1 + $0x124] sm:$0xf]
  %v101 = vld [vmem:[%s1 + $0x128] sm:$0xf]
  %v102 = vld [vmem:[%s1 + $0x12c] sm:$0xf]
  %v103 = vld [vmem:[%s1 + $0x130] sm:$0xf]
  %v104 = vld [vmem:[%s1 + $0x134] sm:$0xf]
  %v105 = vld [vmem:[%s1 + $0x138] sm:$0xf]
  %v106 = vld [vmem:[%s1 + $0x13c] sm:$0xf]
  %v107 = vld [vmem:[%s2] sm:$0x1]
  %v109 = vlaneseq
  %v110 = vshrl.u32 %v109, 7
  %v111 = vsub.s32 0, %v110
  %v112 = vrot.slane %v107, %v111
  %v126 = vunpack.c.l.b16 %v15
  %v127 = vunpack.c.h.b16 %v15
  %v128 = vunpack.c.l.b16 %v16
  %v129 = vunpack.c.h.b16 %v16
  %v130 = vunpack.c.l.b16 %v17
  %v131 = vunpack.c.l.b16 %v18
  %v132 = vunpack.c.h.b16 %v18
  %v133 = vunpack.c.l.b16 %v19
  %v134 = vunpack.c.h.b16 %v19
  %v135 = vunpack.c.l.b16 %v20
  %v136 = vunpack.c.l.b16 %v21
  %v137 = vunpack.c.h.b16 %v21
  %v138 = vunpack.c.l.b16 %v22
  %v139 = vunpack.c.h.b16 %v22
  %v140 = vunpack.c.l.b16 %v23
  %v141 = vunpack.c.l.b16 %v24
  %v142 = vunpack.c.h.b16 %v24
  %v143 = vunpack.c.l.b16 %v25
  %v144 = vunpack.c.h.b16 %v25
  %v145 = vunpack.c.l.b16 %v26
  %v146 = vpack.c.b16 %v131, %v126
  %v147 = vpack.c.b16 %v132, %v127
  %v148 = vpack.c.b16 %v133, %v128
  %v149 = vpack.c.b16 %v134, %v129
  %v150 = vpack.c.b16 %v135, %v130
  %v151 = vpack.c.b16 %v141, %v136
  %v152 = vpack.c.b16 %v142, %v137
  %v153 = vpack.c.b16 %v143, %v138
  %v154 = vpack.c.b16 %v144, %v139
  %v155 = vpack.c.b16 %v145, %v140
  %v246 = vunpack.c.l.b16 %v27
  %v247 = vunpack.c.l.b16 %v28
  %v248 = vunpack.c.l.b16 %v29
  %v249 = vunpack.c.l.b16 %v30
  %v250 = vunpack.c.l.b16 %v31
  %v251 = vunpack.c.l.b16 %v32
  %v252 = vunpack.c.l.b16 %v33
  %v253 = vunpack.c.l.b16 %v34
  %v254 = vunpack.c.l.b16 %v35
  %v255 = vunpack.c.l.b16 %v36
  %v256 = vunpack.c.l.b16 %v37
  %v257 = vunpack.c.l.b16 %v38
  %v258 = vunpack.c.l.b16 %v39
  %v259 = vunpack.c.l.b16 %v40
  %v260 = vunpack.c.l.b16 %v41
  %v261 = vunpack.c.l.b16 %v42
  %v262 = vunpack.c.l.b16 %v43
  %v263 = vunpack.c.l.b16 %v44
  %v264 = vunpack.c.l.b16 %v45
  %v265 = vunpack.c.l.b16 %v46
  %v266 = vunpack.c.l.b16 %v47
  %v267 = vunpack.c.l.b16 %v48
  %v268 = vunpack.c.l.b16 %v49
  %v269 = vunpack.c.l.b16 %v50
  %v270 = vunpack.c.l.b16 %v51
  %v271 = vunpack.c.l.b16 %v52
  %v272 = vunpack.c.l.b16 %v53
  %v273 = vunpack.c.l.b16 %v54
  %v274 = vunpack.c.l.b16 %v55
  %v275 = vunpack.c.l.b16 %v56
  %v276 = vunpack.c.l.b16 %v57
  %v277 = vunpack.c.l.b16 %v58
  %v278 = vunpack.c.l.b16 %v59
  %v279 = vunpack.c.l.b16 %v60
  %v280 = vunpack.c.l.b16 %v61
  %v281 = vunpack.c.l.b16 %v62
  %v282 = vunpack.c.l.b16 %v63
  %v283 = vunpack.c.l.b16 %v64
  %v284 = vunpack.c.l.b16 %v65
  %v285 = vunpack.c.l.b16 %v66
  %v286 = vunpack.c.l.b16 %v67
  %v287 = vunpack.c.l.b16 %v68
  %v288 = vunpack.c.l.b16 %v69
  %v289 = vunpack.c.l.b16 %v70
  %v290 = vunpack.c.l.b16 %v71
  %v291 = vunpack.c.l.b16 %v72
  %v292 = vunpack.c.l.b16 %v73
  %v293 = vunpack.c.l.b16 %v74
  %v294 = vunpack.c.l.b16 %v75
  %v295 = vunpack.c.l.b16 %v76
  %v296 = vunpack.c.l.b16 %v77
  %v297 = vunpack.c.l.b16 %v78
  %v298 = vunpack.c.l.b16 %v79
  %v299 = vunpack.c.l.b16 %v80
  %v300 = vunpack.c.l.b16 %v81
  %v301 = vunpack.c.l.b16 %v82
  %v302 = vunpack.c.l.b16 %v83
  %v303 = vunpack.c.l.b16 %v84
  %v304 = vunpack.c.l.b16 %v85
  %v305 = vunpack.c.l.b16 %v86
  %v306 = vunpack.c.l.b16 %v87
  %v307 = vunpack.c.l.b16 %v88
  %v308 = vunpack.c.l.b16 %v89
  %v309 = vunpack.c.l.b16 %v90
  %v310 = vunpack.c.l.b16 %v91
  %v311 = vunpack.c.l.b16 %v92
  %v312 = vunpack.c.l.b16 %v93
  %v313 = vunpack.c.l.b16 %v94
  %v314 = vunpack.c.l.b16 %v95
  %v315 = vunpack.c.l.b16 %v96
  %v316 = vunpack.c.l.b16 %v97
  %v317 = vunpack.c.l.b16 %v98
  %v318 = vunpack.c.l.b16 %v99
  %v319 = vunpack.c.l.b16 %v100
  %v320 = vunpack.c.l.b16 %v101
  %v321 = vunpack.c.l.b16 %v102
  %v322 = vunpack.c.l.b16 %v103
  %v323 = vunpack.c.l.b16 %v104
  %v324 = vunpack.c.l.b16 %v105
  %v325 = vunpack.c.l.b16 %v106
  %v326 = vpack.c.b16 %v247, %v246
  %v327 = vpack.c.b16 %v249, %v248
  %v328 = vpack.c.b16 %v251, %v250
  %v329 = vpack.c.b16 %v253, %v252
  %v330 = vpack.c.b16 %v255, %v254
  %v331 = vpack.c.b16 %v257, %v256
  %v332 = vpack.c.b16 %v259, %v258
  %v333 = vpack.c.b16 %v261, %v260
  %v334 = vpack.c.b16 %v263, %v262
  %v335 = vpack.c.b16 %v265, %v264
  %v336 = vpack.c.b16 %v267, %v266
  %v337 = vpack.c.b16 %v269, %v268
  %v338 = vpack.c.b16 %v271, %v270
  %v339 = vpack.c.b16 %v273, %v272
  %v340 = vpack.c.b16 %v275, %v274
  %v341 = vpack.c.b16 %v277, %v276
  %v342 = vpack.c.b16 %v279, %v278
  %v343 = vpack.c.b16 %v281, %v280
  %v344 = vpack.c.b16 %v283, %v282
  %v345 = vpack.c.b16 %v285, %v284
  %v346 = vpack.c.b16 %v287, %v286
  %v347 = vpack.c.b16 %v289, %v288
  %v348 = vpack.c.b16 %v291, %v290
  %v349 = vpack.c.b16 %v293, %v292
  %v350 = vpack.c.b16 %v295, %v294
  %v351 = vpack.c.b16 %v297, %v296
  %v352 = vpack.c.b16 %v299, %v298
  %v353 = vpack.c.b16 %v301, %v300
  %v354 = vpack.c.b16 %v303, %v302
  %v355 = vpack.c.b16 %v305, %v304
  %v356 = vpack.c.b16 %v307, %v306
  %v357 = vpack.c.b16 %v309, %v308
  %v358 = vpack.c.b16 %v311, %v310
  %v359 = vpack.c.b16 %v313, %v312
  %v360 = vpack.c.b16 %v315, %v314
  %v361 = vpack.c.b16 %v317, %v316
  %v362 = vpack.c.b16 %v319, %v318
  %v363 = vpack.c.b16 %v321, %v320
  %v364 = vpack.c.b16 %v323, %v322
  %v365 = vpack.c.b16 %v325, %v324
  %406 = vmatprep.subr.bf16.mxu0 0
  %407 = vmatpush1.bf16.msra.mxu0 %v326
  %408 = vmatprep.subr.bf16.mxu0 0
  %409 = vmatpush1.bf16.msra.mxu0 %v327
  %410 = vmatprep.subr.bf16.mxu0 0
  %411 = vmatpush1.bf16.msra.mxu0 %v328
  %412 = vmatprep.subr.bf16.mxu0 0
  %413 = vmatpush1.bf16.msra.mxu0 %v329
  %414 = vmatprep.subr.bf16.mxu0 0
  %415 = vmatpush1.bf16.msra.mxu0 %v330
  %416 = vmatprep.subr.bf16.mxu0 0
  %417 = vmatpush1.bf16.msra.mxu0 %v331
  %418 = vmatprep.subr.bf16.mxu0 0
  %419 = vmatpush1.bf16.msra.mxu0 %v332
  %420 = vmatprep.subr.bf16.mxu0 0
  %421 = vmatpush1.bf16.msra.mxu0 %v333
  %422 = vmatprep.subr.bf16.mxu0 0
  %423 = vmatpush1.bf16.msra.mxu0 %v334
  %424 = vmatprep.subr.bf16.mxu0 0
  %425 = vmatpush1.bf16.msra.mxu0 %v335
  %426 = vmatprep.subr.bf16.mxu0 0
  %427 = vmatpush1.bf16.msra.mxu0 %v336
  %428 = vmatprep.subr.bf16.mxu0 0
  %429 = vmatpush1.bf16.msra.mxu0 %v337
  %430 = vmatprep.subr.bf16.mxu0 0
  %431 = vmatpush1.bf16.msra.mxu0 %v338
  %432 = vmatprep.subr.bf16.mxu0 0
  %433 = vmatpush1.bf16.msra.mxu0 %v339
  %434 = vmatprep.subr.bf16.mxu0 0
  %435 = vmatpush1.bf16.msra.mxu0 %v340
  %436 = vmatprep.subr.bf16.mxu0 0
  %437 = vmatpush1.bf16.msra.mxu0 %v341
  %438 = vmatprep.mubr.bf16.mxu0 %v147
  %439 = vmatmul.mubr.bf16.gmra.mrb[0].mxu0 %v146
  %v440 = vpop.f32.mrb[0].mxu0
  %v441 = vadd.f32 %v112, %v440
  %v442 = vpop.f32.mrb[0].mxu0
  %v443 = vpop.f32.mrb[0].mxu0
  %v444 = vadd.f32 %v112, %v443
  %v445 = vpop.f32.mrb[0].mxu0
  %446 = vmatprep.mubr.bf16.mxu0 %v152
  %447 = vmatmul.mubr.bf16.gmra.mrb[0].mxu0 %v151
  %v448 = vpop.f32.mrb[0].mxu0
  %v449 = vadd.f32 %v112, %v448
  %v450 = vpop.f32.mrb[0].mxu0
  %v451 = vpop.f32.mrb[0].mxu0
  %v452 = vadd.f32 %v112, %v451
  %v453 = vpop.f32.mrb[0].mxu0
  %454 = vdwg.mxu0
  %455 = vmatprep.subr.bf16.mxu0 0
  %456 = vmatpush1.bf16.msra.mxu0 %v342
  %457 = vmatprep.subr.bf16.mxu0 0
  %458 = vmatpush1.bf16.msra.mxu0 %v343
  %459 = vmatprep.subr.bf16.mxu0 0
  %460 = vmatpush1.bf16.msra.mxu0 %v344
  %461 = vmatprep.subr.bf16.mxu0 0
  %462 = vmatpush1.bf16.msra.mxu0 %v345
  %463 = vmatprep.subr.bf16.mxu0 0
  %464 = vmatpush1.bf16.msra.mxu0 %v346
  %465 = vmatprep.subr.bf16.mxu0 0
  %466 = vmatpush1.bf16.msra.mxu0 %v347
  %467 = vmatprep.subr.bf16.mxu0 0
  %468 = vmatpush1.bf16.msra.mxu0 %v348
  %469 = vmatprep.subr.bf16.mxu0 0
  %470 = vmatpush1.bf16.msra.mxu0 %v349
  %471 = vmatprep.subr.bf16.mxu0 0
  %472 = vmatpush1.bf16.msra.mxu0 %v350
  %473 = vmatprep.subr.bf16.mxu0 0
  %474 = vmatpush1.bf16.msra.mxu0 %v351
  %475 = vmatprep.subr.bf16.mxu0 0
  %476 = vmatpush1.bf16.msra.mxu0 %v352
  %477 = vmatprep.subr.bf16.mxu0 0
  %478 = vmatpush1.bf16.msra.mxu0 %v353
  %479 = vmatprep.subr.bf16.mxu0 0
  %480 = vmatpush1.bf16.msra.mxu0 %v354
  %481 = vmatprep.subr.bf16.mxu0 0
  %482 = vmatpush1.bf16.msra.mxu0 %v355
  %483 = vmatprep.subr.bf16.mxu0 0
  %484 = vmatpush1.bf16.msra.mxu0 %v356
  %485 = vmatprep.subr.bf16.mxu0 0
  %486 = vmatpush1.bf16.msra.mxu0 %v357
  %487 = vmatprep.mubr.bf16.mxu0 %v149
  %488 = vmatmul.mubr.bf16.gmra.mrb[0].mxu0 %v148
  %v489 = vpop.f32.mrb[0].mxu0
  %v490 = vadd.f32 %v441, %v489
  %v491 = vpop.f32.mrb[0].mxu0
  %v492 = vpop.f32.mrb[0].mxu0
  %v493 = vadd.f32 %v444, %v492
  %v494 = vpop.f32.mrb[0].mxu0
  %495 = vmatprep.mubr.bf16.mxu0 %v154
  %496 = vmatmul.mubr.bf16.gmra.mrb[0].mxu0 %v153
  %v497 = vpop.f32.mrb[0].mxu0
  %v498 = vadd.f32 %v449, %v497
  %v499 = vpop.f32.mrb[0].mxu0
  %v500 = vpop.f32.mrb[0].mxu0
  %v501 = vadd.f32 %v452, %v500
  %v502 = vpop.f32.mrb[0].mxu0
  %503 = vdwg.mxu0
  %504 = vmatprep.subr.bf16.mxu0 0
  %505 = vmatpush1.bf16.msra.mxu0 %v358
  %506 = vmatprep.subr.bf16.mxu0 0
  %507 = vmatpush1.bf16.msra.mxu0 %v359
  %508 = vmatprep.subr.bf16.mxu0 0
  %509 = vmatpush1.bf16.msra.mxu0 %v360
  %510 = vmatprep.subr.bf16.mxu0 0
  %511 = vmatpush1.bf16.msra.mxu0 %v361
  %512 = vmatprep.subr.bf16.mxu0 0
  %513 = vmatpush1.bf16.msra.mxu0 %v362
  %514 = vmatprep.subr.bf16.mxu0 0
  %515 = vmatpush1.bf16.msra.mxu0 %v363
  %516 = vmatprep.subr.bf16.mxu0 0
  %517 = vmatpush1.bf16.msra.mxu0 %v364
  %518 = vmatprep.subr.bf16.mxu0 0
  %519 = vmatpush1.bf16.msra.mxu0 %v365
  %520 = vmatprep.subr.bf16.mxu0 0
  %521 = vmatpush1.bf16.msra.mxu0 0
  %522 = vmatprep.subr.bf16.mxu0 0
  %523 = vmatpush1.bf16.msra.mxu0 0
  %524 = vmatprep.subr.bf16.mxu0 0
  %525 = vmatpush1.bf16.msra.mxu0 0
  %526 = vmatprep.subr.bf16.mxu0 0
  %527 = vmatpush1.bf16.msra.mxu0 0
  %528 = vmatprep.subr.bf16.mxu0 0
  %529 = vmatpush1.bf16.msra.mxu0 0
  %530 = vmatprep.subr.bf16.mxu0 0
  %531 = vmatpush1.bf16.msra.mxu0 0
  %532 = vmatprep.subr.bf16.mxu0 0
  %533 = vmatpush1.bf16.msra.mxu0 0
  %534 = vmatprep.subr.bf16.mxu0 0
  %535 = vmatpush1.bf16.msra.mxu0 0
  %536 = vmatprep.mubr.bf16.mxu0 0
  %537 = vmatmul.mubr.bf16.gmra.mrb[0].mxu0 %v150
  %v538 = vpop.f32.mrb[0].mxu0
  %v539 = vadd.f32 %v490, %v538
  %v540 = vpop.f32.mrb[0].mxu0
  %v541 = vpop.f32.mrb[0].mxu0
  %v542 = vadd.f32 %v493, %v541
  %v543 = vpop.f32.mrb[0].mxu0
  %544 = vmatprep.mubr.bf16.mxu0 0
  %545 = vmatmul.mubr.bf16.gmra.mrb[0].mxu0 %v155
  %v546 = vpop.f32.mrb[0].mxu0
  %v547 = vadd.f32 %v498, %v546
  %v548 = vpop.f32.mrb[0].mxu0
  %v549 = vpop.f32.mrb[0].mxu0
  %v550 = vadd.f32 %v501, %v549
  %v551 = vpop.f32.mrb[0].mxu0
  %552 = vdwg.mxu0
  %v553 = vmax.f32 %v539, 0.0
  %v554 = vmax.f32 %v542, 0.0
  %v555 = vmax.f32 %v547, 0.0
  %v556 = vmax.f32 %v550, 0.0
  %557 = vst [vmem:[%s3] sm:$0xff] %v553
  %558 = vst [vmem:[%s3 + $0x8] sm:$0xff] %v554
  %559 = vst [vmem:[%s3 + $0x10] sm:$0xff] %v555
  %560 = vst [vmem:[%s3 + $0x18] sm:$0xff] %v556
  // Predicated region
  $region14: #{network_forward.10} parent=0 // pred_check
    _
  $region15: #{network_forward.10} parent=0 // pred_check_branch
    %562 = sbr.rel (0) target = $region17
  $region16: #{network_forward.10} parent=0 // pred_region
    _
  $region17: #{network_forward.10} parent=0 // pred_fallthru
    _
  // Predicated region
  $region18: #{network_forward.10} parent=0 // pred_check
    _
  $region19: #{network_forward.10} parent=0 // pred_check_branch
    %564 = sbr.rel (0) target = $region21
  $region20: #{network_forward.10} parent=0 // pred_region
    _
  $region21: #{network_forward.10} parent=0 // pred_fallthru
    _

// kernel: network_forward.12
$region0: #{network_forward.12}
  #allocation0 [shape = 'u32[]', space=smem, size = 0x4, offset = 0x4, fixed_abs, tag = 'smem constant byte address 0x4 - core index']
  #allocation1 [shape = 'u32[144,128]{1,0:T(1,128)}', space=vmem, size = 0x12000, scoped, tag = 'internal scratch']
  %s0 = inlined_call_operand.vmem [shape: f32[16,16,128], index: 0, kind: input, shape index: {}]
  %s1 = inlined_call_operand.vmem [shape: f32[3,128,128], index: 1, kind: input, shape index: {}]
  %s2 = inlined_call_operand.vmem [shape: f32[1,128], index: 2, kind: input, shape index: {}]
  %s3 = inlined_call_operand.vmem [shape: f32[16,16,128], index: 3, kind: output, shape index: {}]
  %s4 = sld [smem:[#allocation0]]
  $region45: #{network_forward.12} parent=0
    _
  %s6 = ssub.s32 1, %s4
  %s7 = scalar_select 0, %s6, %s4
  loop: start=0, step=1, limit=18
  $region2: #{network_forward.12} parent=0 // loop_pre_header
    _
  $region3: #{network_forward.12} parent=0 // loop_header
    %s9 = sphi 0, %s13
    %p10 = scmp.ge.s32.totalorder %s9, 18
    %s19 = sphi 0, %s21
    %s22 = sphi 0, %s19
    %s23 = sphi 0, %s22
    %s39 = sphi 0, %s23
    %s43 = sphi 0, %s43
    %s45 = sphi 0, %s43
    %s46 = sphi 0, %s45
    %s60 = sphi 0, %s46
    %s64 = sphi 0, %s64
    %s66 = sphi 0, %s64
    %s67 = sphi 0, %s66
    %s81 = sphi 0, %s67
    %s87 = sphi 0, %s89
    %s90 = sphi 0, %s87
    %s91 = sphi 0, %s90
    %s107 = sphi 0, %s91
  $region4: #{network_forward.12} parent=0 // loop_header_branch
    %12 = sbr.rel (%p10) target = $region8
  $region5: #{network_forward.12} parent=0 // loop_body
    %s14 = ssub.s32 %s9, 1
    %s15 = ssub.s32 %s9, 2
    %s16 = sadd.s32 %s9, 1
    %s17 = ssub.s32 %s9, %s16
    %p18 = scmp.eq.s32.totalorder %s17, 0
    %s20 = sadd.s32 %s19, 1
    %s21 = scalar_select %p18, %s19, %s20
    %p24 = pneg %p18
    %p25 = scmp.eq.s32.totalorder %s9, 15
    %p26 = por %p24, %p25
    %p27 = scmp.ne.s32.totalorder %s19, %s22
    %p28 = scmp.eq.s32.totalorder %s9, 0
    %p29 = por %p27, %p28
    %p30 = scmp.ne.s32.totalorder %s19, %s22
    %p31 = scmp.eq.s32.totalorder %s14, 15
    %p32 = por %p30, %p31
    %p33 = scmp.ne.s32.totalorder %s22, %s23
    %p34 = scmp.eq.s32.totalorder %s14, 0
    %p35 = por %p33, %p34
    %p36 = scmp.ne.s32.totalorder %s22, %s23
    %p37 = scmp.eq.s32.totalorder %s15, 15
    %p38 = por %p36, %p37
    %p40 = scmp.ne.s32.totalorder %s23, %s39
    %p41 = scmp.eq.s32.totalorder %s15, 0
    %p42 = por %p40, %p41
    %s44 = sadd.s32 %s43, 1
    %p47 = scmp.eq.s32.totalorder %s9, 15
    %p48 = scmp.ne.s32.totalorder %s43, %s45
    %p49 = scmp.eq.s32.totalorder %s9, 0
    %p50 = por %p48, %p49
    %p51 = scmp.ne.s32.totalorder %s43, %s45
    %p52 = scmp.eq.s32.totalorder %s14, 15
    %p53 = por %p51, %p52
    %p54 = scmp.ne.s32.totalorder %s45, %s46
    %p55 = scmp.eq.s32.totalorder %s14, 0
    %p56 = por %p54, %p55
    %p57 = scmp.ne.s32.totalorder %s45, %s46
    %p58 = scmp.eq.s32.totalorder %s15, 15
    %p59 = por %p57, %p58
    %p61 = scmp.ne.s32.totalorder %s46, %s60
    %p62 = scmp.eq.s32.totalorder %s15, 0
    %p63 = por %p61, %p62
    %s65 = sadd.s32 %s64, 1
    %p68 = scmp.eq.s32.totalorder %s9, 15
    %p69 = scmp.ne.s32.totalorder %s64, %s66
    %p70 = scmp.eq.s32.totalorder %s9, 0
    %p71 = por %p69, %p70
    %p72 = scmp.ne.s32.totalorder %s64, %s66
    %p73 = scmp.eq.s32.totalorder %s14, 15
    %p74 = por %p72, %p73
    %p75 = scmp.ne.s32.totalorder %s66, %s67
    %p76 = scmp.eq.s32.totalorder %s14, 0
    %p77 = por %p75, %p76
    %p78 = scmp.ne.s32.totalorder %s66, %s67
    %p79 = scmp.eq.s32.totalorder %s15, 15
    %p80 = por %p78, %p79
    %p82 = scmp.ne.s32.totalorder %s67, %s81
    %p83 = scmp.eq.s32.totalorder %s15, 0
    %p84 = por %p82, %p83
    %s85 = ssub.s32 %s9, %s16
    %p86 = scmp.eq.s32.totalorder %s85, 0
    %s88 = sadd.s32 %s87, 1
    %s89 = scalar_select %p86, %s87, %s88
    %p92 = pneg %p86
    %p93 = scmp.eq.s32.totalorder %s9, 15
    %p94 = por %p92, %p93
    %p95 = scmp.ne.s32.totalorder %s87, %s90
    %p96 = scmp.eq.s32.totalorder %s9, 0
    %p97 = por %p95, %p96
    %p98 = scmp.ne.s32.totalorder %s87, %s90
    %p99 = scmp.eq.s32.totalorder %s14, 15
    %p100 = por %p98, %p99
    %p101 = scmp.ne.s32.totalorder %s90, %s91
    %p102 = scmp.eq.s32.totalorder %s14, 0
    %p103 = por %p101, %p102
    %p104 = scmp.ne.s32.totalorder %s90, %s91
    %p105 = scmp.eq.s32.totalorder %s15, 15
    %p106 = por %p104, %p105
    %p108 = scmp.ne.s32.totalorder %s91, %s107
    %p109 = scmp.eq.s32.totalorder %s15, 0
    %p110 = por %p108, %p109
    %p111 = scmp.le.s32.totalorder 1, %s9
    %p112 = scmp.lt.s32.totalorder %s9, 17
    %p113 = pnand %p111, %p112
    %p114 = pneg %p113
    // Predicated region
    $region9: #{network_forward.12} parent=5 // pred_check
      _
    $region10: #{network_forward.12} parent=5 // pred_check_branch
      %116 = sbr.rel (%p113) target = $region12
    $region11: #{network_forward.12} parent=5 // pred_region
      %s117 = ssub.s32 %s9, 1
      // Predicated region
      $region13: #{network_forward.12} parent=11 // pred_check
        %p118 = pneg %p56
      $region14: #{network_forward.12} parent=11 // pred_check_branch
        %120 = sbr.rel (%p118) target = $region16
      $region15: #{network_forward.12} parent=11 // pred_region
        _
      $region16: #{network_forward.12} parent=11 // pred_fallthru
        _
      // Predicated region
      $region17: #{network_forward.12} parent=11 // pred_check
        %p121 = pneg %p77
      $region18: #{network_forward.12} parent=11 // pred_check_branch
        %123 = sbr.rel (%p121) target = $region20
      $region19: #{network_forward.12} parent=11 // pred_region
        _
      $region20: #{network_forward.12} parent=11 // pred_fallthru
        _
    $region12: #{network_forward.12} parent=5 // pred_fallthru
      _
    %p124 = scmp.lt.s32.totalorder %s9, 16
    // Predicated region
    $region21: #{network_forward.12} parent=5 // pred_check
      %p125 = pneg %p124
    $region22: #{network_forward.12} parent=5 // pred_check_branch
      %127 = sbr.rel (%p125) target = $region24
    $region23: #{network_forward.12} parent=5 // pred_region
      // Predicated region
      $region25: #{network_forward.12} parent=23 // pred_check
        %p128 = pneg %p29
      $region26: #{network_forward.12} parent=23 // pred_check_branch
        %130 = sbr.rel (%p128) target = $region28
      $region27: #{network_forward.12} parent=23 // pred_region
        %p131 = scmp.lt.s32.totalorder %s9, 15
        %s132 = scalar_select %p131, %s9, 15
        %s133 = smul.addr %s132, 2
        %s134 = smul.addr %s133, 8
        %s135 = scalar_lea.vmem %s0, %s134
      $region28: #{network_forward.12} parent=23 // pred_fallthru
        _
    $region24: #{network_forward.12} parent=5 // pred_fallthru
      _
    %p136 = scmp.le.s32.totalorder 1, %s9
    %p137 = scmp.lt.s32.totalorder %s9, 17
    %p138 = pnand %p136, %p137
    %p139 = pneg %p138
    // Predicated region
    $region29: #{network_forward.12} parent=5 // pred_check
      _
    $region30: #{network_forward.12} parent=5 // pred_check_branch
      %141 = sbr.rel (%p138) target = $region32
    $region31: #{network_forward.12} parent=5 // pred_region
      %s142 = ssub.s32 %s9, 1
      %p143 = scmp.lt.s32.totalorder %s14, 15
      %s144 = scalar_select %p143, %s14, 15
      %s145 = smul.addr %s144, 2
      %s146 = smul.addr %s145, 8
      %s147 = scalar_lea.vmem %s0, %s146
      %p148 = pneg %p35
      %p149 = pneg %p32
      %p150 = pneg %p56
      %p151 = pneg %p53
      %p152 = pneg %p77
      %p153 = pneg %p74
      %p154 = pneg %p103
      %p155 = pneg %p100
      %p156 = scmp.lt.s32.totalorder %s14, 15
      %s157 = scalar_select %p156, %s14, 15
      %s158 = smul.addr %s157, 2
      %s159 = smul.addr %s158, 8
      %s160 = scalar_lea.vmem %s3, %s159
      %p161 = scmp.lt.s32.totalorder %s14, 15
      %s162 = scalar_select %p161, %s14, 15
      %s163 = smul.addr %s162, 2
      %s164 = smul.addr %s163, 8
      %s165 = scalar_lea.vmem %s0, %s164
      %p166 = scmp.lt.s32.totalorder %s14, 15
      %s167 = scalar_select %p166, %s14, 15
      %s168 = smul.addr %s167, 2
      %s169 = smul.addr %s168, 8
      %s170 = scalar_lea.vmem %s3, %s169
      %v171 = vld [vmem:[%s165] sm:$0xff]
      %v172 = vld [vmem:[%s165 + $0x8] sm:$0xff]
      %v173 = vrot.slane %v171, 7
      %v174 = vrot.slane %v172, 7
      %v175 = vlaneseq
      %v176 = vshrl.u32 %v175, 7
      %vm177 = vcmp.lt.s32.totalorder %v176, 1
      %v178 = vsel %vm177, %v173, %v174
      %v179 = vsel %vm177, %v174, %v173
      %v180 = vrot.slane %v171, 1
      %v181 = vrot.slane %v172, 1
      %vm182 = vcmp.lt.s32.totalorder %v176, 7
      %v183 = vsel %vm182, %v180, %v181
      %v184 = vsel %vm182, %v181, %v180
      %v185 = vld [vmem:[%s1] sm:$0xff]
      %v186 = vld [vmem:[%s1 + $0x8] sm:$0xff]
      %v187 = vld [vmem:[%s1 + $0x10] sm:$0xff]
      %v188 = vld [vmem:[%s1 + $0x18] sm:$0xff]
      %v189 = vld [vmem:[%s1 + $0x20] sm:$0xff]
      %v190 = vld [vmem:[%s1 + $0x28] sm:$0xff]
      %v191 = vld [vmem:[%s1 + $0x30] sm:$0xff]
      %v192 = vld [vmem:[%s1 + $0x38] sm:$0xff]
      %v193 = vld [vmem:[%s1 + $0x40] sm:$0xff]
      %v194 = vld [vmem:[%s1 + $0x48] sm:$0xff]
      %v195 = vld [vmem:[%s1 + $0x50] sm:$0xff]
      %v196 = vld [vmem:[%s1 + $0x58] sm:$0xff]
      %v197 = vld [vmem:[%s1 + $0x60] sm:$0xff]
      %v198 = vld [vmem:[%s1 + $0x68] sm:$0xff]
      %v199 = vld [vmem:[%s1 + $0x70] sm:$0xff]
      %v200 = vld [vmem:[%s1 + $0x78] sm:$0xff]
      %s201 = scalar_lea.vmem %s1, 128
      %v202 = vld [vmem:[%s201] sm:$0xff]
      %v203 = vld [vmem:[%s201 + $0x8] sm:$0xff]
      %v204 = vld [vmem:[%s201 + $0x10] sm:$0xff]
      %v205 = vld [vmem:[%s201 + $0x18] sm:$0xff]
      %v206 = vld [vmem:[%s201 + $0x20] sm:$0xff]
      %v207 = vld [vmem:[%s201 + $0x28] sm:$0xff]
      %v208 = vld [vmem:[%s201 + $0x30] sm:$0xff]
      %v209 = vld [vmem:[%s201 + $0x38] sm:$0xff]
      %v210 = vld [vmem:[%s201 + $0x40] sm:$0xff]
      %v211 = vld [vmem:[%s201 + $0x48] sm:$0xff]
      %v212 = vld [vmem:[%s201 + $0x50] sm:$0xff]
      %v213 = vld [vmem:[%s201 + $0x58] sm:$0xff]
      %v214 = vld [vmem:[%s201 + $0x60] sm:$0xff]
      %v215 = vld [vmem:[%s201 + $0x68] sm:$0xff]
      %v216 = vld [vmem:[%s201 + $0x70] sm:$0xff]
      %v217 = vld [vmem:[%s201 + $0x78] sm:$0xff]
      %218 = vmatprep.subr.mxu0 0.0
      %219 = vmatpush1.msra.mxu0 %v202
      %220 = vmatprep.subr.mxu0 0.0
      %221 = vmatpush1.msra.mxu0 %v203
      %222 = vmatprep.subr.mxu0 0.0
      %223 = vmatpush1.msra.mxu0 %v204
      %224 = vmatprep.subr.mxu0 0.0
      %225 = vmatpush1.msra.mxu0 %v205
      %226 = vmatprep.subr.mxu0 0.0
      %227 = vmatpush1.msra.mxu0 %v206
      %228 = vmatprep.subr.mxu0 0.0
      %229 = vmatpush1.msra.mxu0 %v207
      %230 = vmatprep.subr.mxu0 0.0
      %231 = vmatpush1.msra.mxu0 %v208
      %232 = vmatprep.subr.mxu0 0.0
      %233 = vmatpush1.msra.mxu0 %v209
      %234 = vmatprep.subr.mxu0 0.0
      %235 = vmatpush1.msra.mxu0 %v210
      %236 = vmatprep.subr.mxu0 0.0
      %237 = vmatpush1.msra.mxu0 %v211
      %238 = vmatprep.subr.mxu0 0.0
      %239 = vmatpush1.msra.mxu0 %v212
      %240 = vmatprep.subr.mxu0 0.0
      %241 = vmatpush1.msra.mxu0 %v213
      %242 = vmatprep.subr.mxu0 0.0
      %243 = vmatpush1.msra.mxu0 %v214
      %244 = vmatprep.subr.mxu0 0.0
      %245 = vmatpush1.msra.mxu0 %v215
      %246 = vmatprep.subr.mxu0 0.0
      %247 = vmatpush1.msra.mxu0 %v216
      %248 = vmatprep.subr.mxu0 0.0
      %249 = vmatpush1.msra.mxu0 %v217
      %250 = vmatprep.subr.mxu0 0.0
      %251 = vmatpush1.msra.mxu0 0.0
      %252 = vmatprep.subr.mxu0 0.0
      %253 = vmatpush1.msra.mxu0 0.0
      %254 = vmatprep.subr.mxu0 0.0
      %255 = vmatpush1.msra.mxu0 0.0
      %256 = vmatprep.subr.mxu0 0.0
      %257 = vmatpush1.msra.mxu0 0.0
      %258 = vmatprep.subr.mxu0 0.0
      %259 = vmatpush1.msra.mxu0 0.0
      %260 = vmatprep.subr.mxu0 0.0
      %261 = vmatpush1.msra.mxu0 0.0
      %262 = vmatprep.subr.mxu0 0.0
      %263 = vmatpush1.msra.mxu0 0.0
      %264 = vmatprep.subr.mxu0 0.0
      %265 = vmatpush1.msra.mxu0 0.0
      %266 = vmatprep.subr.mxu0 0.0
      %267 = vmatpush1.msra.mxu0 0.0
      %268 = vmatprep.subr.mxu0 0.0
      %269 = vmatpush1.msra.mxu0 0.0
      %270 = vmatprep.subr.mxu0 0.0
      %271 = vmatpush1.msra.mxu0 0.0
      %272 = vmatprep.subr.mxu0 0.0
      %273 = vmatpush1.msra.mxu0 0.0
      %274 = vmatprep.subr.mxu0 0.0
      %275 = vmatpush1.msra.mxu0 0.0
      %276 = vmatprep.subr.mxu0 0.0
      %277 = vmatpush1.msra.mxu0 0.0
      %278 = vmatprep.subr.mxu0 0.0
      %279 = vmatpush1.msra.mxu0 0.0
      %280 = vmatprep.subr.mxu0 0.0
      %281 = vmatpush1.msra.mxu0 0.0
      %282 = vmatprep.mubr.f32.mxu0 0.0
      %283 = vmatmul.mubr.f32.gmra.mrb[0].mxu0 %v171
      %v284 = vpop.f32.mrb[0].mxu0
      %v285 = vadd.f32 0.0, %v284
      %v286 = vpop.f32.mrb[0].mxu0
      %287 = vmatprep.mubr.f32.mxu0 0.0
      %288 = vmatmul.mubr.f32.gmra.mrb[0].mxu0 %v172
      %v289 = vpop.f32.mrb[0].mxu0
      %v290 = vadd.f32 0.0, %v289
      %v291 = vpop.f32.mrb[0].mxu0
      %292 = vdwg.mxu0
      %293 = vmatprep.subr.mxu0 0.0
      %294 = vmatpush1.msra.mxu0 %v185
      %295 = vmatprep.subr.mxu0 0.0
      %296 = vmatpush1.msra.mxu0 %v186
      %297 = vmatprep.subr.mxu0 0.0
      %298 = vmatpush1.msra.mxu0 %v187
      %299 = vmatprep.subr.mxu0 0.0
      %300 = vmatpush1.msra.mxu0 %v188
      %301 = vmatprep.subr.mxu0 0.0
      %302 = vmatpush1.msra.mxu0 %v189
      %303 = vmatprep.subr.mxu0 0.0
      %304 = vmatpush1.msra.mxu0 %v190
      %305 = vmatprep.subr.mxu0 0.0
      %306 = vmatpush1.msra.mxu0 %v191
      %307 = vmatprep.subr.mxu0 0.0
      %308 = vmatpush1.msra.mxu0 %v192
      %309 = vmatprep.subr.mxu0 0.0
      %310 = vmatpush1.msra.mxu0 %v193
      %311 = vmatprep.subr.mxu0 0.0
      %312 = vmatpush1.msra.mxu0 %v194
      %313 = vmatprep.subr.mxu0 0.0
      %314 = vmatpush1.msra.mxu0 %v195
      %315 = vmatprep.subr.mxu0 0.0
      %316 = vmatpush1.msra.mxu0 %v196
      %317 = vmatprep.subr.mxu0 0.0
      %318 = vmatpush1.msra.mxu0 %v197
      %319 = vmatprep.subr.mxu0 0.0
      %320 = vmatpush1.msra.mxu0 %v198
      %321 = vmatprep.subr.mxu0 0.0
      %322 = vmatpush1.msra.mxu0 %v199
      %323 = vmatprep.subr.mxu0 0.0
      %324 = vmatpush1.msra.mxu0 %v200
      %325 = vmatprep.subr.mxu0 0.0
      %326 = vmatpush1.msra.mxu0 0.0
      %327 = vmatprep.subr.mxu0 0.0
      %328 = vmatpush1.msra.mxu0 0.0
      %329 = vmatprep.subr.mxu0 0.0
      %330 = vmatpush1.msra.mxu0 0.0
      %331 = vmatprep.subr.mxu0 0.0
      %332 = vmatpush1.msra.mxu0 0.0
      %333 = vmatprep.subr.mxu0 0.0
      %334 = vmatpush1.msra.mxu0 0.0
      %335 = vmatprep.subr.mxu0 0.0
      %336 = vmatpush1.msra.mxu0 0.0
      %337 = vmatprep.subr.mxu0 0.0
      %338 = vmatpush1.msra.mxu0 0.0
      %339 = vmatprep.subr.mxu0 0.0
      %340 = vmatpush1.msra.mxu0 0.0
      %341 = vmatprep.subr.mxu0 0.0
      %342 = vmatpush1.msra.mxu0 0.0
      %343 = vmatprep.subr.mxu0 0.0
      %344 = vmatpush1.msra.mxu0 0.0
      %345 = vmatprep.subr.mxu0 0.0
      %346 = vmatpush1.msra.mxu0 0.0
      %347 = vmatprep.subr.mxu0 0.0
      %348 = vmatpush1.msra.mxu0 0.0
      %349 = vmatprep.subr.mxu0 0.0
      %350 = vmatpush1.msra.mxu0 0.0
      %351 = vmatprep.subr.mxu0 0.0
      %352 = vmatpush1.msra.mxu0 0.0
      %353 = vmatprep.subr.mxu0 0.0
      %354 = vmatpush1.msra.mxu0 0.0
      %355 = vmatprep.subr.mxu0 0.0
      %356 = vmatpush1.msra.mxu0 0.0
      %357 = vmatprep.mubr.f32.mxu0 0.0
      %358 = vmatmul.mubr.f32.gmra.mrb[0].mxu0 %v179
      %v359 = vpop.f32.mrb[0].mxu0
      %v360 = vadd.f32 %v285, %v359
      %v361 = vpop.f32.mrb[0].mxu0
      %362 = vmatprep.mubr.f32.mxu0 0.0
      %363 = vmatmul.mubr.f32.gmra.mrb[0].mxu0 %v178
      %v364 = vpop.f32.mrb[0].mxu0
      %v365 = vadd.f32 %v290, %v364
      %v366 = vpop.f32.mrb[0].mxu0
      %367 = vdwg.mxu0
      %s368 = scalar_lea.vmem %s1, 256
      %v369 = vld [vmem:[%s368] sm:$0xff]
      %v370 = vld [vmem:[%s368 + $0x8] sm:$0xff]
      %v371 = vld [vmem:[%s368 + $0x10] sm:$0xff]
      %v372 = vld [vmem:[%s368 + $0x18] sm:$0xff]
      %v373 = vld [vmem:[%s368 + $0x20] sm:$0xff]
      %v374 = vld [vmem:[%s368 + $0x28] sm:$0xff]
      %v375 = vld [vmem:[%s368 + $0x30] sm:$0xff]
      %v376 = vld [vmem:[%s368 + $0x38] sm:$0xff]
      %v377 = vld [vmem:[%s368 + $0x40] sm:$0xff]
      %v378 = vld [vmem:[%s368 + $0x48] sm:$0xff]
      %v379 = vld [vmem:[%s368 + $0x50] sm:$0xff]
      %v380 = vld [vmem:[%s368 + $0x58] sm:$0xff]
      %v381 = vld [vmem:[%s368 + $0x60] sm:$0xff]
      %v382 = vld [vmem:[%s368 + $0x68] sm:$0xff]
      %v383 = vld [vmem:[%s368 + $0x70] sm:$0xff]
      %v384 = vld [vmem:[%s368 + $0x78] sm:$0xff]
      %385 = vmatprep.subr.mxu0 0.0
      %386 = vmatpush1.msra.mxu0 %v369
      %387 = vmatprep.subr.mxu0 0.0
      %388 = vmatpush1.msra.mxu0 %v370
      %389 = vmatprep.subr.mxu0 0.0
      %390 = vmatpush1.msra.mxu0 %v371
      %391 = vmatprep.subr.mxu0 0.0
      %392 = vmatpush1.msra.mxu0 %v372
      %393 = vmatprep.subr.mxu0 0.0
      %394 = vmatpush1.msra.mxu0 %v373
      %395 = vmatprep.subr.mxu0 0.0
      %396 = vmatpush1.msra.mxu0 %v374
      %397 = vmatprep.subr.mxu0 0.0
      %398 = vmatpush1.msra.mxu0 %v375
      %399 = vmatprep.subr.mxu0 0.0
      %400 = vmatpush1.msra.mxu0 %v376
      %401 = vmatprep.subr.mxu0 0.0
      %402 = vmatpush1.msra.mxu0 %v377
      %403 = vmatprep.subr.mxu0 0.0
      %404 = vmatpush1.msra.mxu0 %v378
      %405 = vmatprep.subr.mxu0 0.0
      %406 = vmatpush1.msra.mxu0 %v379
      %407 = vmatprep.subr.mxu0 0.0
      %408 = vmatpush1.msra.mxu0 %v380
      %409 = vmatprep.subr.mxu0 0.0
      %410 = vmatpush1.msra.mxu0 %v381
      %411 = vmatprep.subr.mxu0 0.0
      %412 = vmatpush1.msra.mxu0 %v382
      %413 = vmatprep.subr.mxu0 0.0
      %414 = vmatpush1.msra.mxu0 %v383
      %415 = vmatprep.subr.mxu0 0.0
      %416 = vmatpush1.msra.mxu0 %v384
      %417 = vmatprep.subr.mxu0 0.0
      %418 = vmatpush1.msra.mxu0 0.0
      %419 = vmatprep.subr.mxu0 0.0
      %420 = vmatpush1.msra.mxu0 0.0
      %421 = vmatprep.subr.mxu0 0.0
      %422 = vmatpush1.msra.mxu0 0.0
      %423 = vmatprep.subr.mxu0 0.0
      %424 = vmatpush1.msra.mxu0 0.0
      %425 = vmatprep.subr.mxu0 0.0
      %426 = vmatpush1.msra.mxu0 0.0
      %427 = vmatprep.subr.mxu0 0.0
      %428 = vmatpush1.msra.mxu0 0.0
      %429 = vmatprep.subr.mxu0 0.0
      %430 = vmatpush1.msra.mxu0 0.0
      %431 = vmatprep.subr.mxu0 0.0
      %432 = vmatpush1.msra.mxu0 0.0
      %433 = vmatprep.subr.mxu0 0.0
      %434 = vmatpush1.msra.mxu0 0.0
      %435 = vmatprep.subr.mxu0 0.0
      %436 = vmatpush1.msra.mxu0 0.0
      %437 = vmatprep.subr.mxu0 0.0
      %438 = vmatpush1.msra.mxu0 0.0
      %439 = vmatprep.subr.mxu0 0.0
      %440 = vmatpush1.msra.mxu0 0.0
      %441 = vmatprep.subr.mxu0 0.0
      %442 = vmatpush1.msra.mxu0 0.0
      %443 = vmatprep.subr.mxu0 0.0
      %444 = vmatpush1.msra.mxu0 0.0
      %445 = vmatprep.subr.mxu0 0.0
      %446 = vmatpush1.msra.mxu0 0.0
      %447 = vmatprep.subr.mxu0 0.0
      %448 = vmatpush1.msra.mxu0 0.0
      %449 = vmatprep.mubr.f32.mxu0 0.0
      %450 = vmatmul.mubr.f32.gmra.mrb[0].mxu0 %v183
      %v451 = vpop.f32.mrb[0].mxu0
      %v452 = vadd.f32 0.0, %v451
      %v453 = vpop.f32.mrb[0].mxu0
      %454 = vmatprep.mubr.f32.mxu0 0.0
      %455 = vmatmul.mubr.f32.gmra.mrb[0].mxu0 %v184
      %v456 = vpop.f32.mrb[0].mxu0
      %v457 = vadd.f32 0.0, %v456
      %v458 = vpop.f32.mrb[0].mxu0
      %459 = vdwg.mxu0
      %v460 = vadd.f32 %v360, %v452
      %v461 = vadd.f32 %v365, %v457
      %v462 = vld [vmem:[%s2] sm:$0x1]
      %v464 = vlaneseq
      %v465 = vshrl.u32 %v464, 7
      %v466 = vsub.s32 0, %v465
      %v467 = vrot.slane %v462, %v466
      %v469 = vadd.f32 %v460, %v467
      %v470 = vadd.f32 %v461, %v467
      %v471 = vmax.f32 %v469, 0.0
      %v472 = vmax.f32 %v470, 0.0
      %473 = vst [vmem:[%s170] sm:$0xff] %v471
      %474 = vst [vmem:[%s170 + $0x8] sm:$0xff] %v472
      %p475 = scmp.lt.s32.totalorder %s14, 15
      %s476 = scalar_select %p475, %s14, 15
      %s477 = smul.addr %s476, 2
      %s478 = smul.addr %s477, 8
      %s479 = scalar_lea.vmem %s3, %s478
      // Predicated region
      $region33: #{network_forward.12} parent=31 // pred_check
        %p480 = pneg %p100
      $region34: #{network_forward.12} parent=31 // pred_check_branch
        %482 = sbr.rel (%p480) target = $region36
      $region35: #{network_forward.12} parent=31 // pred_region
        _
      $region36: #{network_forward.12} parent=31 // pred_fallthru
        _
    $region32: #{network_forward.12} parent=5 // pred_fallthru
      _
    %p483 = scmp.le.s32.totalorder 2, %s9
    // Predicated region
    $region37: #{network_forward.12} parent=5 // pred_check
      %p484 = pneg %p483
    $region38: #{network_forward.12} parent=5 // pred_check_branch
      %486 = sbr.rel (%p484) target = $region40
    $region39: #{network_forward.12} parent=5 // pred_region
      %s487 = ssub.s32 %s9, 2
      // Predicated region
      $region41: #{network_forward.12} parent=39 // pred_check
        %p488 = pneg %p106
      $region42: #{network_forward.12} parent=39 // pred_check_branch
        %490 = sbr.rel (%p488) target = $region44
      $region43: #{network_forward.12} parent=39 // pred_region
        %p491 = scmp.lt.s32.totalorder %s15, 15
        %s492 = scalar_select %p491, %s15, 15
        %s493 = smul.addr %s492, 2
        %s494 = smul.addr %s493, 8
        %s495 = scalar_lea.vmem %s3, %s494
      $region44: #{network_forward.12} parent=39 // pred_fallthru
        _
    $region40: #{network_forward.12} parent=5 // pred_fallthru
      _
  $region6: #{network_forward.12} parent=0 // loop_footer
    %s13 = sadd.s32 1, %s9
  $region7: #{network_forward.12} parent=0 // loop_footer_branch
    %8 = sbr.rel target = $region3
  $region8: #{network_forward.12} parent=0 // loop_exit
    _

// kernel: network_forward.13
$region0: #{network_forward.13}
  #allocation0 [shape = 'u32[]', space=smem, size = 0x4, offset = 0x4, fixed_abs, tag = 'smem constant byte address 0x4 - core index']
  #allocation1 [shape = 'u32[144,128]{1,0:T(1,128)}', space=vmem, size = 0x12000, scoped, tag = 'internal scratch']
  %s0 = inlined_call_operand.vmem [shape: f32[16,16,128], index: 0, kind: input, shape index: {}]
  %s1 = inlined_call_operand.vmem [shape: f32[3,128,128], index: 1, kind: input, shape index: {}]
  %s2 = inlined_call_operand.vmem [shape: f32[1,128], index: 2, kind: input, shape index: {}]
  %s3 = inlined_call_operand.vmem [shape: f32[128,128], index: 3, kind: input, shape index: {}]
  %s4 = inlined_call_operand.vmem [shape: f32[1,128], index: 4, kind: input, shape index: {}]
  %s5 = inlined_call_operand.vmem [shape: f32[16,16,128], index: 5, kind: output, shape index: {}]
  %s6 = sld [smem:[#allocation0]]
  $region53: #{network_forward.13} parent=0
    _
  %s8 = ssub.s32 1, %s6
  %s9 = scalar_select 0, %s8, %s6
  loop: start=0, step=1, limit=18
  $region2: #{network_forward.13} parent=0 // loop_pre_header
    _
  $region3: #{network_forward.13} parent=0 // loop_header
    %s11 = sphi 0, %s15
    %p12 = scmp.ge.s32.totalorder %s11, 18
    %s21 = sphi 0, %s23
    %s24 = sphi 0, %s21
    %s25 = sphi 0, %s24
    %s41 = sphi 0, %s25
    %s45 = sphi 0, %s45
    %s47 = sphi 0, %s45
    %s48 = sphi 0, %s47
    %s62 = sphi 0, %s48
    %s66 = sphi 0, %s66
    %s68 = sphi 0, %s66
    %s69 = sphi 0, %s68
    %s83 = sphi 0, %s69
    %s87 = sphi 0, %s87
    %s89 = sphi 0, %s87
    %s90 = sphi 0, %s89
    %s104 = sphi 0, %s90
    %s108 = sphi 0, %s108
    %s110 = sphi 0, %s108
    %s111 = sphi 0, %s110
    %s125 = sphi 0, %s111
    %s131 = sphi 0, %s133
    %s134 = sphi 0, %s131
    %s135 = sphi 0, %s134
    %s151 = sphi 0, %s135
  $region4: #{network_forward.13} parent=0 // loop_header_branch
    %14 = sbr.rel (%p12) target = $region8
  $region5: #{network_forward.13} parent=0 // loop_body
    %s16 = ssub.s32 %s11, 1
    %s17 = ssub.s32 %s11, 2
    %s18 = sadd.s32 %s11, 1
    %s19 = ssub.s32 %s11, %s18
    %p20 = scmp.eq.s32.totalorder %s19, 0
    %s22 = sadd.s32 %s21, 1
    %s23 = scalar_select %p20, %s21, %s22
    %p26 = pneg %p20
    %p27 = scmp.eq.s32.totalorder %s11, 15
    %p28 = por %p26, %p27
    %p29 = scmp.ne.s32.totalorder %s21, %s24
    %p30 = scmp.eq.s32.totalorder %s11, 0
    %p31 = por %p29, %p30
    %p32 = scmp.ne.s32.totalorder %s21, %s24
    %p33 = scmp.eq.s32.totalorder %s16, 15
    %p34 = por %p32, %p33
    %p35 = scmp.ne.s32.totalorder %s24, %s25
    %p36 = scmp.eq.s32.totalorder %s16, 0
    %p37 = por %p35, %p36
    %p38 = scmp.ne.s32.totalorder %s24, %s25
    %p39 = scmp.eq.s32.totalorder %s17, 15
    %p40 = por %p38, %p39
    %p42 = scmp.ne.s32.totalorder %s25, %s41
    %p43 = scmp.eq.s32.totalorder %s17, 0
    %p44 = por %p42, %p43
    %s46 = sadd.s32 %s45, 1
    %p49 = scmp.eq.s32.totalorder %s11, 15
    %p50 = scmp.ne.s32.totalorder %s45, %s47
    %p51 = scmp.eq.s32.totalorder %s11, 0
    %p52 = por %p50, %p51
    %p53 = scmp.ne.s32.totalorder %s45, %s47
    %p54 = scmp.eq.s32.totalorder %s16, 15
    %p55 = por %p53, %p54
    %p56 = scmp.ne.s32.totalorder %s47, %s48
    %p57 = scmp.eq.s32.totalorder %s16, 0
    %p58 = por %p56, %p57
    %p59 = scmp.ne.s32.totalorder %s47, %s48
    %p60 = scmp.eq.s32.totalorder %s17, 15
    %p61 = por %p59, %p60
    %p63 = scmp.ne.s32.totalorder %s48, %s62
    %p64 = scmp.eq.s32.totalorder %s17, 0
    %p65 = por %p63, %p64
    %s67 = sadd.s32 %s66, 1
    %p70 = scmp.eq.s32.totalorder %s11, 15
    %p71 = scmp.ne.s32.totalorder %s66, %s68
    %p72 = scmp.eq.s32.totalorder %s11, 0
    %p73 = por %p71, %p72
    %p74 = scmp.ne.s32.totalorder %s66, %s68
    %p75 = scmp.eq.s32.totalorder %s16, 15
    %p76 = por %p74, %p75
    %p77 = scmp.ne.s32.totalorder %s68, %s69
    %p78 = scmp.eq.s32.totalorder %s16, 0
    %p79 = por %p77, %p78
    %p80 = scmp.ne.s32.totalorder %s68, %s69
    %p81 = scmp.eq.s32.totalorder %s17, 15
    %p82 = por %p80, %p81
    %p84 = scmp.ne.s32.totalorder %s69, %s83
    %p85 = scmp.eq.s32.totalorder %s17, 0
    %p86 = por %p84, %p85
    %s88 = sadd.s32 %s87, 1
    %p91 = scmp.eq.s32.totalorder %s11, 15
    %p92 = scmp.ne.s32.totalorder %s87, %s89
    %p93 = scmp.eq.s32.totalorder %s11, 0
    %p94 = por %p92, %p93
    %p95 = scmp.ne.s32.totalorder %s87, %s89
    %p96 = scmp.eq.s32.totalorder %s16, 15
    %p97 = por %p95, %p96
    %p98 = scmp.ne.s32.totalorder %s89, %s90
    %p99 = scmp.eq.s32.totalorder %s16, 0
    %p100 = por %p98, %p99
    %p101 = scmp.ne.s32.totalorder %s89, %s90
    %p102 = scmp.eq.s32.totalorder %s17, 15
    %p103 = por %p101, %p102
    %p105 = scmp.ne.s32.totalorder %s90, %s104
    %p106 = scmp.eq.s32.totalorder %s17, 0
    %p107 = por %p105, %p106
    %s109 = sadd.s32 %s108, 1
    %p112 = scmp.eq.s32.totalorder %s11, 15
    %p113 = scmp.ne.s32.totalorder %s108, %s110
    %p114 = scmp.eq.s32.totalorder %s11, 0
    %p115 = por %p113, %p114
    %p116 = scmp.ne.s32.totalorder %s108, %s110
    %p117 = scmp.eq.s32.totalorder %s16, 15
    %p118 = por %p116, %p117
    %p119 = scmp.ne.s32.totalorder %s110, %s111
    %p120 = scmp.eq.s32.totalorder %s16, 0
    %p121 = por %p119, %p120
    %p122 = scmp.ne.s32.totalorder %s110, %s111
    %p123 = scmp.eq.s32.totalorder %s17, 15
    %p124 = por %p122, %p123
    %p126 = scmp.ne.s32.totalorder %s111, %s125
    %p127 = scmp.eq.s32.totalorder %s17, 0
    %p128 = por %p126, %p127
    %s129 = ssub.s32 %s11, %s18
    %p130 = scmp.eq.s32.totalorder %s129, 0
    %s132 = sadd.s32 %s131, 1
    %s133 = scalar_select %p130, %s131, %s132
    %p136 = pneg %p130
    %p137 = scmp.eq.s32.totalorder %s11, 15
    %p138 = por %p136, %p137
    %p139 = scmp.ne.s32.totalorder %s131, %s134
    %p140 = scmp.eq.s32.totalorder %s11, 0
    %p141 = por %p139, %p140
    %p142 = scmp.ne.s32.totalorder %s131, %s134
    %p143 = scmp.eq.s32.totalorder %s16, 15
    %p144 = por %p142, %p143
    %p145 = scmp.ne.s32.totalorder %s134, %s135
    %p146 = scmp.eq.s32.totalorder %s16, 0
    %p147 = por %p145, %p146
    %p148 = scmp.ne.s32.totalorder %s134, %s135
    %p149 = scmp.eq.s32.totalorder %s17, 15
    %p150 = por %p148, %p149
    %p152 = scmp.ne.s32.totalorder %s135, %s151
    %p153 = scmp.eq.s32.totalorder %s17, 0
    %p154 = por %p152, %p153
    %p155 = scmp.le.s32.totalorder 1, %s11
    %p156 = scmp.lt.s32.totalorder %s11, 17
    %p157 = pnand %p155, %p156
    %p158 = pneg %p157
    // Predicated region
    $region9: #{network_forward.13} parent=5 // pred_check
      _
    $region10: #{network_forward.13} parent=5 // pred_check_branch
      %160 = sbr.rel (%p157) target = $region12
    $region11: #{network_forward.13} parent=5 // pred_region
      %s161 = ssub.s32 %s11, 1
      // Predicated region
      $region13: #{network_forward.13} parent=11 // pred_check
        %p162 = pneg %p58
      $region14: #{network_forward.13} parent=11 // pred_check_branch
        %164 = sbr.rel (%p162) target = $region16
      $region15: #{network_forward.13} parent=11 // pred_region
        _
      $region16: #{network_forward.13} parent=11 // pred_fallthru
        _
      // Predicated region
      $region17: #{network_forward.13} parent=11 // pred_check
        %p165 = pneg %p79
      $region18: #{network_forward.13} parent=11 // pred_check_branch
        %167 = sbr.rel (%p165) target = $region20
      $region19: #{network_forward.13} parent=11 // pred_region
        _
      $region20: #{network_forward.13} parent=11 // pred_fallthru
        _
      // Predicated region
      $region21: #{network_forward.13} parent=11 // pred_check
        %p168 = pneg %p100
      $region22: #{network_forward.13} parent=11 // pred_check_branch
        %170 = sbr.rel (%p168) target = $region24
      $region23: #{network_forward.13} parent=11 // pred_region
        _
      $region24: #{network_forward.13} parent=11 // pred_fallthru
        _
      // Predicated region
      $region25: #{network_forward.13} parent=11 // pred_check
        %p171 = pneg %p121
      $region26: #{network_forward.13} parent=11 // pred_check_branch
        %173 = sbr.rel (%p171) target = $region28
      $region27: #{network_forward.13} parent=11 // pred_region
        _
      $region28: #{network_forward.13} parent=11 // pred_fallthru
        _
    $region12: #{network_forward.13} parent=5 // pred_fallthru
      _
    %p174 = scmp.lt.s32.totalorder %s11, 16
    // Predicated region
    $region29: #{network_forward.13} parent=5 // pred_check
      %p175 = pneg %p174
    $region30: #{network_forward.13} parent=5 // pred_check_branch
      %177 = sbr.rel (%p175) target = $region32
    $region31: #{network_forward.13} parent=5 // pred_region
      // Predicated region
      $region33: #{network_forward.13} parent=31 // pred_check
        %p178 = pneg %p31
      $region34: #{network_forward.13} parent=31 // pred_check_branch
        %180 = sbr.rel (%p178) target = $region36
      $region35: #{network_forward.13} parent=31 // pred_region
        %p181 = scmp.lt.s32.totalorder %s11, 15
        %s182 = scalar_select %p181, %s11, 15
        %s183 = smul.addr %s182, 2
        %s184 = smul.addr %s183, 8
        %s185 = scalar_lea.vmem %s0, %s184
      $region36: #{network_forward.13} parent=31 // pred_fallthru
        _
    $region32: #{network_forward.13} parent=5 // pred_fallthru
      _
    %p186 = scmp.le.s32.totalorder 1, %s11
    %p187 = scmp.lt.s32.totalorder %s11, 17
    %p188 = pnand %p186, %p187
    %p189 = pneg %p188
    // Predicated region
    $region37: #{network_forward.13} parent=5 // pred_check
      _
    $region38: #{network_forward.13} parent=5 // pred_check_branch
      %191 = sbr.rel (%p188) target = $region40
    $region39: #{network_forward.13} parent=5 // pred_region
      %s192 = ssub.s32 %s11, 1
      %p193 = scmp.lt.s32.totalorder %s16, 15
      %s194 = scalar_select %p193, %s16, 15
      %s195 = smul.addr %s194, 2
      %s196 = smul.addr %s195, 8
      %s197 = scalar_lea.vmem %s0, %s196
      %p198 = pneg %p37
      %p199 = pneg %p34
      %p200 = pneg %p58
      %p201 = pneg %p55
      %p202 = pneg %p79
      %p203 = pneg %p76
      %p204 = pneg %p100
      %p205 = pneg %p97
      %p206 = pneg %p121
      %p207 = pneg %p118
      %p208 = pneg %p147
      %p209 = pneg %p144
      %p210 = scmp.lt.s32.totalorder %s16, 15
      %s211 = scalar_select %p210, %s16, 15
      %s212 = smul.addr %s211, 2
      %s213 = smul.addr %s212, 8
      %s214 = scalar_lea.vmem %s5, %s213
      %p215 = scmp.lt.s32.totalorder %s16, 15
      %s216 = scalar_select %p215, %s16, 15
      %s217 = smul.addr %s216, 2
      %s218 = smul.addr %s217, 8
      %s219 = scalar_lea.vmem %s0, %s218
      %p220 = scmp.lt.s32.totalorder %s16, 15
      %s221 = scalar_select %p220, %s16, 15
      %s222 = smul.addr %s221, 2
      %s223 = smul.addr %s222, 8
      %s224 = scalar_lea.vmem %s5, %s223
      %v225 = vld [vmem:[%s219] sm:$0xff]
      %v226 = vld [vmem:[%s219 + $0x8] sm:$0xff]
      %v227 = vrot.slane %v225, 7
      %v228 = vrot.slane %v226, 7
      %v229 = vlaneseq
      %v230 = vshrl.u32 %v229, 7
      %vm231 = vcmp.lt.s32.totalorder %v230, 1
      %v232 = vsel %vm231, %v227, %v228
      %v233 = vsel %vm231, %v228, %v227
      %v234 = vrot.slane %v225, 1
      %v235 = vrot.slane %v226, 1
      %vm236 = vcmp.lt.s32.totalorder %v230, 7
      %v237 = vsel %vm236, %v234, %v235
      %v238 = vsel %vm236, %v235, %v234
      %v239 = vld [vmem:[%s1] sm:$0xff]
      %v240 = vld [vmem:[%s1 + $0x8] sm:$0xff]
      %v241 = vld [vmem:[%s1 + $0x10] sm:$0xff]
      %v242 = vld [vmem:[%s1 + $0x18] sm:$0xff]
      %v243 = vld [vmem:[%s1 + $0x20] sm:$0xff]
      %v244 = vld [vmem:[%s1 + $0x28] sm:$0xff]
      %v245 = vld [vmem:[%s1 + $0x30] sm:$0xff]
      %v246 = vld [vmem:[%s1 + $0x38] sm:$0xff]
      %v247 = vld [vmem:[%s1 + $0x40] sm:$0xff]
      %v248 = vld [vmem:[%s1 + $0x48] sm:$0xff]
      %v249 = vld [vmem:[%s1 + $0x50] sm:$0xff]
      %v250 = vld [vmem:[%s1 + $0x58] sm:$0xff]
      %v251 = vld [vmem:[%s1 + $0x60] sm:$0xff]
      %v252 = vld [vmem:[%s1 + $0x68] sm:$0xff]
      %v253 = vld [vmem:[%s1 + $0x70] sm:$0xff]
      %v254 = vld [vmem:[%s1 + $0x78] sm:$0xff]
      %s255 = scalar_lea.vmem %s1, 128
      %v256 = vld [vmem:[%s255] sm:$0xff]
      %v257 = vld [vmem:[%s255 + $0x8] sm:$0xff]
      %v258 = vld [vmem:[%s255 + $0x10] sm:$0xff]
      %v259 = vld [vmem:[%s255 + $0x18] sm:$0xff]
      %v260 = vld [vmem:[%s255 + $0x20] sm:$0xff]
      %v261 = vld [vmem:[%s255 + $0x28] sm:$0xff]
      %v262 = vld [vmem:[%s255 + $0x30] sm:$0xff]
      %v263 = vld [vmem:[%s255 + $0x38] sm:$0xff]
      %v264 = vld [vmem:[%s255 + $0x40] sm:$0xff]
      %v265 = vld [vmem:[%s255 + $0x48] sm:$0xff]
      %v266 = vld [vmem:[%s255 + $0x50] sm:$0xff]
      %v267 = vld [vmem:[%s255 + $0x58] sm:$0xff]
      %v268 = vld [vmem:[%s255 + $0x60] sm:$0xff]
      %v269 = vld [vmem:[%s255 + $0x68] sm:$0xff]
      %v270 = vld [vmem:[%s255 + $0x70] sm:$0xff]
      %v271 = vld [vmem:[%s255 + $0x78] sm:$0xff]
      %272 = vmatprep.subr.mxu0 0.0
      %273 = vmatpush1.msra.mxu0 %v256
      %274 = vmatprep.subr.mxu0 0.0
      %275 = vmatpush1.msra.mxu0 %v257
      %276 = vmatprep.subr.mxu0 0.0
      %277 = vmatpush1.msra.mxu0 %v258
      %278 = vmatprep.subr.mxu0 0.0
      %279 = vmatpush1.msra.mxu0 %v259
      %280 = vmatprep.subr.mxu0 0.0
      %281 = vmatpush1.msra.mxu0 %v260
      %282 = vmatprep.subr.mxu0 0.0
      %283 = vmatpush1.msra.mxu0 %v261
      %284 = vmatprep.subr.mxu0 0.0
      %285 = vmatpush1.msra.mxu0 %v262
      %286 = vmatprep.subr.mxu0 0.0
      %287 = vmatpush1.msra.mxu0 %v263
      %288 = vmatprep.subr.mxu0 0.0
      %289 = vmatpush1.msra.mxu0 %v264
      %290 = vmatprep.subr.mxu0 0.0
      %291 = vmatpush1.msra.mxu0 %v265
      %292 = vmatprep.subr.mxu0 0.0
      %293 = vmatpush1.msra.mxu0 %v266
      %294 = vmatprep.subr.mxu0 0.0
      %295 = vmatpush1.msra.mxu0 %v267
      %296 = vmatprep.subr.mxu0 0.0
      %297 = vmatpush1.msra.mxu0 %v268
      %298 = vmatprep.subr.mxu0 0.0
      %299 = vmatpush1.msra.mxu0 %v269
      %300 = vmatprep.subr.mxu0 0.0
      %301 = vmatpush1.msra.mxu0 %v270
      %302 = vmatprep.subr.mxu0 0.0
      %303 = vmatpush1.msra.mxu0 %v271
      %304 = vmatprep.subr.mxu0 0.0
      %305 = vmatpush1.msra.mxu0 0.0
      %306 = vmatprep.subr.mxu0 0.0
      %307 = vmatpush1.msra.mxu0 0.0
      %308 = vmatprep.subr.mxu0 0.0
      %309 = vmatpush1.msra.mxu0 0.0
      %310 = vmatprep.subr.mxu0 0.0
      %311 = vmatpush1.msra.mxu0 0.0
      %312 = vmatprep.subr.mxu0 0.0
      %313 = vmatpush1.msra.mxu0 0.0
      %314 = vmatprep.subr.mxu0 0.0
      %315 = vmatpush1.msra.mxu0 0.0
      %316 = vmatprep.subr.mxu0 0.0
      %317 = vmatpush1.msra.mxu0 0.0
      %318 = vmatprep.subr.mxu0 0.0
      %319 = vmatpush1.msra.mxu0 0.0
      %320 = vmatprep.subr.mxu0 0.0
      %321 = vmatpush1.msra.mxu0 0.0
      %322 = vmatprep.subr.mxu0 0.0
      %323 = vmatpush1.msra.mxu0 0.0
      %324 = vmatprep.subr.mxu0 0.0
      %325 = vmatpush1.msra.mxu0 0.0
      %326 = vmatprep.subr.mxu0 0.0
      %327 = vmatpush1.msra.mxu0 0.0
      %328 = vmatprep.subr.mxu0 0.0
      %329 = vmatpush1.msra.mxu0 0.0
      %330 = vmatprep.subr.mxu0 0.0
      %331 = vmatpush1.msra.mxu0 0.0
      %332 = vmatprep.subr.mxu0 0.0
      %333 = vmatpush1.msra.mxu0 0.0
      %334 = vmatprep.subr.mxu0 0.0
      %335 = vmatpush1.msra.mxu0 0.0
      %336 = vmatprep.mubr.f32.mxu0 0.0
      %337 = vmatmul.mubr.f32.gmra.mrb[0].mxu0 %v225
      %v338 = vpop.f32.mrb[0].mxu0
      %v339 = vadd.f32 0.0, %v338
      %v340 = vpop.f32.mrb[0].mxu0
      %341 = vmatprep.mubr.f32.mxu0 0.0
      %342 = vmatmul.mubr.f32.gmra.mrb[0].mxu0 %v226
      %v343 = vpop.f32.mrb[0].mxu0
      %v344 = vadd.f32 0.0, %v343
      %v345 = vpop.f32.mrb[0].mxu0
      %346 = vdwg.mxu0
      %347 = vmatprep.subr.mxu0 0.0
      %348 = vmatpush1.msra.mxu0 %v239
      %349 = vmatprep.subr.mxu0 0.0
      %350 = vmatpush1.msra.mxu0 %v240
      %351 = vmatprep.subr.mxu0 0.0
      %352 = vmatpush1.msra.mxu0 %v241
      %353 = vmatprep.subr.mxu0 0.0
      %354 = vmatpush1.msra.mxu0 %v242
      %355 = vmatprep.subr.mxu0 0.0
      %356 = vmatpush1.msra.mxu0 %v243
      %357 = vmatprep.subr.mxu0 0.0
      %358 = vmatpush1.msra.mxu0 %v244
      %359 = vmatprep.subr.mxu0 0.0
      %360 = vmatpush1.msra.mxu0 %v245
      %361 = vmatprep.subr.mxu0 0.0
      %362 = vmatpush1.msra.mxu0 %v246
      %363 = vmatprep.subr.mxu0 0.0
      %364 = vmatpush1.msra.mxu0 %v247
      %365 = vmatprep.subr.mxu0 0.0
      %366 = vmatpush1.msra.mxu0 %v248
      %367 = vmatprep.subr.mxu0 0.0
      %368 = vmatpush1.msra.mxu0 %v249
      %369 = vmatprep.subr.mxu0 0.0
      %370 = vmatpush1.msra.mxu0 %v250
      %371 = vmatprep.subr.mxu0 0.0
      %372 = vmatpush1.msra.mxu0 %v251
      %373 = vmatprep.subr.mxu0 0.0
      %374 = vmatpush1.msra.mxu0 %v252
      %375 = vmatprep.subr.mxu0 0.0
      %376 = vmatpush1.msra.mxu0 %v253
      %377 = vmatprep.subr.mxu0 0.0
      %378 = vmatpush1.msra.mxu0 %v254
      %379 = vmatprep.subr.mxu0 0.0
      %380 = vmatpush1.msra.mxu0 0.0
      %381 = vmatprep.subr.mxu0 0.0
      %382 = vmatpush1.msra.mxu0 0.0
      %383 = vmatprep.subr.mxu0 0.0
      %384 = vmatpush1.msra.mxu0 0.0
      %385 = vmatprep.subr.mxu0 0.0
      %386 = vmatpush1.msra.mxu0 0.0
      %387 = vmatprep.subr.mxu0 0.0
      %388 = vmatpush1.msra.mxu0 0.0
      %389 = vmatprep.subr.mxu0 0.0
      %390 = vmatpush1.msra.mxu0 0.0
      %391 = vmatprep.subr.mxu0 0.0
      %392 = vmatpush1.msra.mxu0 0.0
      %393 = vmatprep.subr.mxu0 0.0
      %394 = vmatpush1.msra.mxu0 0.0
      %395 = vmatprep.subr.mxu0 0.0
      %396 = vmatpush1.msra.mxu0 0.0
      %397 = vmatprep.subr.mxu0 0.0
      %398 = vmatpush1.msra.mxu0 0.0
      %399 = vmatprep.subr.mxu0 0.0
      %400 = vmatpush1.msra.mxu0 0.0
      %401 = vmatprep.subr.mxu0 0.0
      %402 = vmatpush1.msra.mxu0 0.0
      %403 = vmatprep.subr.mxu0 0.0
      %404 = vmatpush1.msra.mxu0 0.0
      %405 = vmatprep.subr.mxu0 0.0
      %406 = vmatpush1.msra.mxu0 0.0
      %407 = vmatprep.subr.mxu0 0.0
      %408 = vmatpush1.msra.mxu0 0.0
      %409 = vmatprep.subr.mxu0 0.0
      %410 = vmatpush1.msra.mxu0 0.0
      %411 = vmatprep.mubr.f32.mxu0 0.0
      %412 = vmatmul.mubr.f32.gmra.mrb[0].mxu0 %v233
      %v413 = vpop.f32.mrb[0].mxu0
      %v414 = vadd.f32 %v339, %v413
      %v415 = vpop.f32.mrb[0].mxu0
      %416 = vmatprep.mubr.f32.mxu0 0.0
      %417 = vmatmul.mubr.f32.gmra.mrb[0].mxu0 %v232
      %v418 = vpop.f32.mrb[0].mxu0
      %v419 = vadd.f32 %v344, %v418
      %v420 = vpop.f32.mrb[0].mxu0
      %421 = vdwg.mxu0
      %s422 = scalar_lea.vmem %s1, 256
      %v423 = vld [vmem:[%s422] sm:$0xff]
      %v424 = vld [vmem:[%s422 + $0x8] sm:$0xff]
      %v425 = vld [vmem:[%s422 + $0x10] sm:$0xff]
      %v426 = vld [vmem:[%s422 + $0x18] sm:$0xff]
      %v427 = vld [vmem:[%s422 + $0x20] sm:$0xff]
      %v428 = vld [vmem:[%s422 + $0x28] sm:$0xff]
      %v429 = vld [vmem:[%s422 + $0x30] sm:$0xff]
      %v430 = vld [vmem:[%s422 + $0x38] sm:$0xff]
      %v431 = vld [vmem:[%s422 + $0x40] sm:$0xff]
      %v432 = vld [vmem:[%s422 + $0x48] sm:$0xff]
      %v433 = vld [vmem:[%s422 + $0x50] sm:$0xff]
      %v434 = vld [vmem:[%s422 + $0x58] sm:$0xff]
      %v435 = vld [vmem:[%s422 + $0x60] sm:$0xff]
      %v436 = vld [vmem:[%s422 + $0x68] sm:$0xff]
      %v437 = vld [vmem:[%s422 + $0x70] sm:$0xff]
      %v438 = vld [vmem:[%s422 + $0x78] sm:$0xff]
      %439 = vmatprep.subr.mxu0 0.0
      %440 = vmatpush1.msra.mxu0 %v423
      %441 = vmatprep.subr.mxu0 0.0
      %442 = vmatpush1.msra.mxu0 %v424
      %443 = vmatprep.subr.mxu0 0.0
      %444 = vmatpush1.msra.mxu0 %v425
      %445 = vmatprep.subr.mxu0 0.0
      %446 = vmatpush1.msra.mxu0 %v426
      %447 = vmatprep.subr.mxu0 0.0
      %448 = vmatpush1.msra.mxu0 %v427
      %449 = vmatprep.subr.mxu0 0.0
      %450 = vmatpush1.msra.mxu0 %v428
      %451 = vmatprep.subr.mxu0 0.0
      %452 = vmatpush1.msra.mxu0 %v429
      %453 = vmatprep.subr.mxu0 0.0
      %454 = vmatpush1.msra.mxu0 %v430
      %455 = vmatprep.subr.mxu0 0.0
      %456 = vmatpush1.msra.mxu0 %v431
      %457 = vmatprep.subr.mxu0 0.0
      %458 = vmatpush1.msra.mxu0 %v432
      %459 = vmatprep.subr.mxu0 0.0
      %460 = vmatpush1.msra.mxu0 %v433
      %461 = vmatprep.subr.mxu0 0.0
      %462 = vmatpush1.msra.mxu0 %v434
      %463 = vmatprep.subr.mxu0 0.0
      %464 = vmatpush1.msra.mxu0 %v435
      %465 = vmatprep.subr.mxu0 0.0
      %466 = vmatpush1.msra.mxu0 %v436
      %467 = vmatprep.subr.mxu0 0.0
      %468 = vmatpush1.msra.mxu0 %v437
      %469 = vmatprep.subr.mxu0 0.0
      %470 = vmatpush1.msra.mxu0 %v438
      %471 = vmatprep.subr.mxu0 0.0
      %472 = vmatpush1.msra.mxu0 0.0
      %473 = vmatprep.subr.mxu0 0.0
      %474 = vmatpush1.msra.mxu0 0.0
      %475 = vmatprep.subr.mxu0 0.0
      %476 = vmatpush1.msra.mxu0 0.0
      %477 = vmatprep.subr.mxu0 0.0
      %478 = vmatpush1.msra.mxu0 0.0
      %479 = vmatprep.subr.mxu0 0.0
      %480 = vmatpush1.msra.mxu0 0.0
      %481 = vmatprep.subr.mxu0 0.0
      %482 = vmatpush1.msra.mxu0 0.0
      %483 = vmatprep.subr.mxu0 0.0
      %484 = vmatpush1.msra.mxu0 0.0
      %485 = vmatprep.subr.mxu0 0.0
      %486 = vmatpush1.msra.mxu0 0.0
      %487 = vmatprep.subr.mxu0 0.0
      %488 = vmatpush1.msra.mxu0 0.0
      %489 = vmatprep.subr.mxu0 0.0
      %490 = vmatpush1.msra.mxu0 0.0
      %491 = vmatprep.subr.mxu0 0.0
      %492 = vmatpush1.msra.mxu0 0.0
      %493 = vmatprep.subr.mxu0 0.0
      %494 = vmatpush1.msra.mxu0 0.0
      %495 = vmatprep.subr.mxu0 0.0
      %496 = vmatpush1.msra.mxu0 0.0
      %497 = vmatprep.subr.mxu0 0.0
      %498 = vmatpush1.msra.mxu0 0.0
      %499 = vmatprep.subr.mxu0 0.0
      %500 = vmatpush1.msra.mxu0 0.0
      %501 = vmatprep.subr.mxu0 0.0
      %502 = vmatpush1.msra.mxu0 0.0
      %503 = vmatprep.mubr.f32.mxu0 0.0
      %504 = vmatmul.mubr.f32.gmra.mrb[0].mxu0 %v237
      %v505 = vpop.f32.mrb[0].mxu0
      %v506 = vadd.f32 0.0, %v505
      %v507 = vpop.f32.mrb[0].mxu0
      %508 = vmatprep.mubr.f32.mxu0 0.0
      %509 = vmatmul.mubr.f32.gmra.mrb[0].mxu0 %v238
      %v510 = vpop.f32.mrb[0].mxu0
      %v511 = vadd.f32 0.0, %v510
      %v512 = vpop.f32.mrb[0].mxu0
      %513 = vdwg.mxu0
      %v514 = vadd.f32 %v414, %v506
      %v515 = vadd.f32 %v419, %v511
      %v516 = vld [vmem:[%s2] sm:$0x1]
      %v518 = vlaneseq
      %v519 = vshrl.u32 %v518, 7
      %v520 = vsub.s32 0, %v519
      %v521 = vrot.slane %v516, %v520
      %v523 = vadd.f32 %v514, %v521
      %v524 = vadd.f32 %v515, %v521
      %v525 = vmax.f32 %v523, 0.0
      %v526 = vmax.f32 %v524, 0.0
      %v527 = vadd.f32 %v225, %v525
      %v528 = vadd.f32 %v226, %v526
      %v529 = vld [vmem:[%s3] sm:$0xff]
      %v530 = vld [vmem:[%s3 + $0x8] sm:$0xff]
      %v531 = vld [vmem:[%s3 + $0x10] sm:$0xff]
      %v532 = vld [vmem:[%s3 + $0x18] sm:$0xff]
      %v533 = vld [vmem:[%s3 + $0x20] sm:$0xff]
      %v534 = vld [vmem:[%s3 + $0x28] sm:$0xff]
      %v535 = vld [vmem:[%s3 + $0x30] sm:$0xff]
      %v536 = vld [vmem:[%s3 + $0x38] sm:$0xff]
      %v537 = vld [vmem:[%s3 + $0x40] sm:$0xff]
      %v538 = vld [vmem:[%s3 + $0x48] sm:$0xff]
      %v539 = vld [vmem:[%s3 + $0x50] sm:$0xff]
      %v540 = vld [vmem:[%s3 + $0x58] sm:$0xff]
      %v541 = vld [vmem:[%s3 + $0x60] sm:$0xff]
      %v542 = vld [vmem:[%s3 + $0x68] sm:$0xff]
      %v543 = vld [vmem:[%s3 + $0x70] sm:$0xff]
      %v544 = vld [vmem:[%s3 + $0x78] sm:$0xff]
      %v545 = vld [vmem:[%s4] sm:$0x1]
      %v547 = vlaneseq
      %v548 = vshrl.u32 %v547, 7
      %v549 = vsub.s32 0, %v548
      %v550 = vrot.slane %v545, %v549
      %552 = vmatprep.subr.mxu0 0.0
      %553 = vmatpush1.msra.mxu0 %v529
      %554 = vmatprep.subr.mxu0 0.0
      %555 = vmatpush1.msra.mxu0 %v530
      %556 = vmatprep.subr.mxu0 0.0
      %557 = vmatpush1.msra.mxu0 %v531
      %558 = vmatprep.subr.mxu0 0.0
      %559 = vmatpush1.msra.mxu0 %v532
      %560 = vmatprep.subr.mxu0 0.0
      %561 = vmatpush1.msra.mxu0 %v533
      %562 = vmatprep.subr.mxu0 0.0
      %563 = vmatpush1.msra.mxu0 %v534
      %564 = vmatprep.subr.mxu0 0.0
      %565 = vmatpush1.msra.mxu0 %v535
      %566 = vmatprep.subr.mxu0 0.0
      %567 = vmatpush1.msra.mxu0 %v536
      %568 = vmatprep.subr.mxu0 0.0
      %569 = vmatpush1.msra.mxu0 %v537
      %570 = vmatprep.subr.mxu0 0.0
      %571 = vmatpush1.msra.mxu0 %v538
      %572 = vmatprep.subr.mxu0 0.0
      %573 = vmatpush1.msra.mxu0 %v539
      %574 = vmatprep.subr.mxu0 0.0
      %575 = vmatpush1.msra.mxu0 %v540
      %576 = vmatprep.subr.mxu0 0.0
      %577 = vmatpush1.msra.mxu0 %v541
      %578 = vmatprep.subr.mxu0 0.0
      %579 = vmatpush1.msra.mxu0 %v542
      %580 = vmatprep.subr.mxu0 0.0
      %581 = vmatpush1.msra.mxu0 %v543
      %582 = vmatprep.subr.mxu0 0.0
      %583 = vmatpush1.msra.mxu0 %v544
      %584 = vmatprep.subr.mxu0 0.0
      %585 = vmatpush1.msra.mxu0 0.0
      %586 = vmatprep.subr.mxu0 0.0
      %587 = vmatpush1.msra.mxu0 0.0
      %588 = vmatprep.subr.mxu0 0.0
      %589 = vmatpush1.msra.mxu0 0.0
      %590 = vmatprep.subr.mxu0 0.0
      %591 = vmatpush1.msra.mxu0 0.0
      %592 = vmatprep.subr.mxu0 0.0
      %593 = vmatpush1.msra.mxu0 0.0
      %594 = vmatprep.subr.mxu0 0.0
      %595 = vmatpush1.msra.mxu0 0.0
      %596 = vmatprep.subr.mxu0 0.0
      %597 = vmatpush1.msra.mxu0 0.0
      %598 = vmatprep.subr.mxu0 0.0
      %599 = vmatpush1.msra.mxu0 0.0
      %600 = vmatprep.subr.mxu0 0.0
      %601 = vmatpush1.msra.mxu0 0.0
      %602 = vmatprep.subr.mxu0 0.0
      %603 = vmatpush1.msra.mxu0 0.0
      %604 = vmatprep.subr.mxu0 0.0
      %605 = vmatpush1.msra.mxu0 0.0
      %606 = vmatprep.subr.mxu0 0.0
      %607 = vmatpush1.msra.mxu0 0.0
      %608 = vmatprep.subr.mxu0 0.0
      %609 = vmatpush1.msra.mxu0 0.0
      %610 = vmatprep.subr.mxu0 0.0
      %611 = vmatpush1.msra.mxu0 0.0
      %612 = vmatprep.subr.mxu0 0.0
      %613 = vmatpush1.msra.mxu0 0.0
      %614 = vmatprep.subr.mxu0 0.0
      %615 = vmatpush1.msra.mxu0 0.0
      %616 = vmatprep.mubr.f32.mxu0 0.0
      %617 = vmatmul.mubr.f32.gmra.mrb[0].mxu0 %v527
      %v618 = vpop.f32.mrb[0].mxu0
      %v619 = vadd.f32 %v550, %v618
      %v620 = vpop.f32.mrb[0].mxu0
      %621 = vmatprep.mubr.f32.mxu0 0.0
      %622 = vmatmul.mubr.f32.gmra.mrb[0].mxu0 %v528
      %v623 = vpop.f32.mrb[0].mxu0
      %v624 = vadd.f32 %v550, %v623
      %v625 = vpop.f32.mrb[0].mxu0
      %626 = vdwg.mxu0
      %627 = vst [vmem:[%s224] sm:$0xff] %v619
      %628 = vst [vmem:[%s224 + $0x8] sm:$0xff] %v624
      %p629 = scmp.lt.s32.totalorder %s16, 15
      %s630 = scalar_select %p629, %s16, 15
      %s631 = smul.addr %s630, 2
      %s632 = smul.addr %s631, 8
      %s633 = scalar_lea.vmem %s5, %s632
      // Predicated region
      $region41: #{network_forward.13} parent=39 // pred_check
        %p634 = pneg %p144
      $region42: #{network_forward.13} parent=39 // pred_check_branch
        %636 = sbr.rel (%p634) target = $region44
      $region43: #{network_forward.13} parent=39 // pred_region
        _
      $region44: #{network_forward.13} parent=39 // pred_fallthru
        _
    $region40: #{network_forward.13} parent=5 // pred_fallthru
      _
    %p637 = scmp.le.s32.totalorder 2, %s11
    // Predicated region
    $region45: #{network_forward.13} parent=5 // pred_check
      %p638 = pneg %p637
    $region46: #{network_forward.13} parent=5 // pred_check_branch
      %640 = sbr.rel (%p638) target = $region48
    $region47: #{network_forward.13} parent=5 // pred_region
      %s641 = ssub.s32 %s11, 2
      // Predicated region
      $region49: #{network_forward.13} parent=47 // pred_check
        %p642 = pneg %p150
      $region50: #{network_forward.13} parent=47 // pred_check_branch
        %644 = sbr.rel (%p642) target = $region52
      $region51: #{network_forward.13} parent=47 // pred_region
        %p645 = scmp.lt.s32.totalorder %s17, 15
        %s646 = scalar_select %p645, %s17, 15
        %s647 = smul.addr %s646, 2
        %s648 = smul.addr %s647, 8
        %s649 = scalar_lea.vmem %s5, %s648
      $region52: #{network_forward.13} parent=47 // pred_fallthru
        _
    $region48: #{network_forward.13} parent=5 // pred_fallthru
      _
  $region6: #{network_forward.13} parent=0 // loop_footer
    %s15 = sadd.s32 1, %s11
  $region7: #{network_forward.13} parent=0 // loop_footer_branch
    %10 = sbr.rel target = $region3
  $region8: #{network_forward.13} parent=0 // loop_exit
    _

</llo_original>
